<compile_context>
chip_gen: v7x
topology: tpu7x:2x2x1
jax: 0.10.0
libtpu: 0.0.40
codegen_flags: <defaults>
</compile_context>

<pallas_src>
import functools
import numpy as np
import jax
import jax.numpy as jnp
from jax import lax
from jax.experimental import pallas as pl
from jax.experimental.pallas import tpu as pltpu

NEG_SLOPE = 0.01   # PyTorch nn.LeakyReLU default
LN_EPS = 1e-5      # PyTorch nn.LayerNorm default
EA_COLS = 8        # padded augmented edge-attr columns: [edge_attr(5), 1.0, 0, 0]


# ----------------------------- fused Pallas kernel ---------------------------

def _fused_layer_kernel(tbl_ref,                  # SMEM (num_tiles, KE) chunk table (prefetch)
                        xj_ref,                   # (TEK, C)   gathered source-node features
                        ea_ref,                   # (TEK, 8)   augmented edge attributes
                        dlr_ref,                  # (1, TEK)   local dst index, row form (-1 pad)
                        dlc_ref,                  # (TEK, 1)   local dst index, col form (-1 pad)
                        xt_ref,                   # (TN, C)    node-tile features (x_i source)
                        w_ref,                    # (4C+16, C) packed layer parameters
                        out_ref,                  # (TN, C)    node-tile output
                        acc_ref,                  # scratch (TN, C) f32 message accumulator
                        xiw_ref,                  # scratch (TN, C) f32 x_tile @ (w1a - w1b)
                        *, pad_chunk):
    i = pl.program_id(0)
    k = pl.program_id(1)
    tn, c = out_ref.shape
    tek = xj_ref.shape[0]

    @pl.when(k == 0)
    def _init():
        acc_ref[...] = jnp.zeros_like(acc_ref)
        # x_i term depends only on the destination tile: compute once per tile.
        xiw_ref[...] = jnp.dot(xt_ref[...], w_ref[0:c, :],
                               preferred_element_type=jnp.float32)

    # Skip all work for steps that point at the shared all-padding chunk.
    @pl.when(tbl_ref[i, k] != pad_chunk)
    def _chunk():
        dloc_r = dlr_ref[...]                                           # (1, TEK)
        dloc_c = dlc_ref[...]                                           # (TEK, 1)
        # scatter one-hot (TN, TEK) and distribute one-hot (TEK, TN); padding slots
        # (dloc = -1) never match the non-negative iota -> zero rows/cols.
        oh = (lax.broadcasted_iota(jnp.int32, (tn, tek), 0) == dloc_r
              ).astype(jnp.float32)
        oh_t = (lax.broadcasted_iota(jnp.int32, (tek, tn), 1) == dloc_c
                ).astype(jnp.float32)

        # h = x_i@(w1a-w1b) + x_j@w1b + ea_aug@Wf  (x_i distributed from the tile scratch)
        h = jnp.dot(oh_t, xiw_ref[...], preferred_element_type=jnp.float32)
        h = h + jnp.dot(xj_ref[...], w_ref[c:2 * c, :],
                        preferred_element_type=jnp.float32)
        h = h + jnp.dot(ea_ref[...], w_ref[2 * c:2 * c + 8, :],
                        preferred_element_type=jnp.float32)

        # LayerNorm (biased variance as E[h^2] - mu^2), then ReLU.
        mu = jnp.mean(h, axis=-1, keepdims=True)
        var = jnp.maximum(jnp.mean(h * h, axis=-1, keepdims=True) - mu * mu, 0.0)
        biases = w_ref[2 * c + 8:2 * c + 16, :]          # rows: gamma, beta, ba, bb, 0...
        hn = (h - mu) * lax.rsqrt(var + LN_EPS) * biases[0:1, :] + biases[1:2, :]
        m = jnp.maximum(hn, 0.0)                                        # (TEK, C)

        # scatter-add messages into the node-tile accumulator (one MXU matmul)
        acc_ref[...] += jnp.dot(oh, m, preferred_element_type=jnp.float32)

    # Node MLP once all chunks of this tile are aggregated.
    @pl.when(k == pl.num_programs(1) - 1)
    def _mlp():
        biases = w_ref[2 * c + 8:2 * c + 16, :]
        a = jnp.dot(acc_ref[...], w_ref[2 * c + 16:3 * c + 16, :],
                    preferred_element_type=jnp.float32) + biases[2:3, :]
        a = jnp.where(a >= 0.0, a, NEG_SLOPE * a)                       # LeakyReLU
        out_ref[...] = (jnp.dot(a, w_ref[3 * c + 16:4 * c + 16, :],
                                preferred_element_type=jnp.float32)
                        + biases[3:4, :]).astype(out_ref.dtype)


# ----------------------------- pallas_call wrapper ---------------------------

def fused_layer(chunk_tbl, xj, eaL, dloc_row, dloc_col, xf, slab, *, tn, tek, pad_chunk):
    n_pad, c = xf.shape
    num_tiles = n_pad // tn
    ke = chunk_tbl.shape[1]
    kernel = functools.partial(_fused_layer_kernel, pad_chunk=pad_chunk)

    return pl.pallas_call(
        kernel,
        out_shape=jax.ShapeDtypeStruct((n_pad, c), jnp.float32),
        grid_spec=pltpu.PrefetchScalarGridSpec(
            num_scalar_prefetch=1,
            grid=(num_tiles, ke),
            in_specs=[
                pl.BlockSpec((tek, c), lambda i, k, tbl: (tbl[i, k], 0)),        # x_j
                pl.BlockSpec((tek, EA_COLS), lambda i, k, tbl: (tbl[i, k], 0)),  # ea_aug
                pl.BlockSpec((1, tek), lambda i, k, tbl: (0, tbl[i, k])),        # dloc row
                pl.BlockSpec((tek, 1), lambda i, k, tbl: (tbl[i, k], 0)),        # dloc col
                pl.BlockSpec((tn, c), lambda i, k, tbl: (i, 0)),                 # x tile (x_i)
                pl.BlockSpec(slab.shape, lambda i, k, tbl: (0, 0)),              # packed params
            ],
            out_specs=pl.BlockSpec((tn, c), lambda i, k, tbl: (i, 0)),
            scratch_shapes=[pltpu.VMEM((tn, c), jnp.float32),     # message accumulator
                            pltpu.VMEM((tn, c), jnp.float32)],    # x_tile @ (w1a-w1b)
        ),
        compiler_params=pltpu.CompilerParams(
            dimension_semantics=("parallel", "arbitrary"),
            vmem_limit_bytes=32 * 1024 * 1024,
        ),
    )(chunk_tbl, xj, eaL, dloc_row, dloc_col, xf, slab)


# ----------------------------- CSR-chunk layout (setup, numpy) ---------------

def build_csr_layout(src_np, dst_np, n_nodes, tn, tek):
    """Sort edges by destination, group by destination node tile, pad each tile's edge list
    to a multiple of `tek`, and append one shared all-padding chunk that grid steps beyond a
    tile's chunk count point at.  Padding slots carry dst_local = -1."""
    n_pad = ((n_nodes + tn - 1) // tn) * tn
    num_tiles = n_pad // tn
    order = np.argsort(dst_np, kind="stable")
    tile_of = dst_np[order] // tn

    src_slots, eid_slots, dloc_slots = [], [], []
    starts, counts = [], []
    cursor = 0
    for t in range(num_tiles):
        eids = order[tile_of == t]
        cnt = int(eids.shape[0])
        nch = int(np.ceil(cnt / tek)) if cnt > 0 else 0
        starts.append(cursor)
        counts.append(nch)
        cursor += nch
        if nch == 0:
            continue
        pad = nch * tek - cnt
        src_slots.append(np.concatenate([src_np[eids].astype(np.int32),
                                         np.zeros(pad, np.int32)]))
        eid_slots.append(np.concatenate([eids.astype(np.int32),
                                         np.zeros(pad, np.int32)]))
        dloc_slots.append(np.concatenate([(dst_np[eids] - t * tn).astype(np.int32),
                                          np.full(pad, -1, np.int32)]))
    # trailing all-padding chunk (target for grid steps past a tile's chunk count)
    pad_chunk = cursor
    src_slots.append(np.zeros(tek, np.int32))
    eid_slots.append(np.zeros(tek, np.int32))
    dloc_slots.append(np.full(tek, -1, np.int32))

    srcL = np.concatenate(src_slots).astype(np.int32)   # (L,) gather idx for x_j
    eidL = np.concatenate(eid_slots).astype(np.int32)   # (L,) gather idx for edge_attr
    dlocL = np.concatenate(dloc_slots).astype(np.int32) # (L,) local dst (-1 = padding)

    ke = max(1, max(counts) if counts else 1)
    tbl = np.full((num_tiles, ke), pad_chunk, np.int32)
    for t in range(num_tiles):
        for k in range(counts[t]):
            tbl[t, k] = starts[t] + k
    return srcL, eidL, dlocL, tbl, pad_chunk, n_pad


# ----------------------------- model glue -----------------------------------

def pack_layer_params(lp, c, edge_dim):
    """Pack one layer's constants into a single (4C+16, C) VMEM slab:
       rows [0,C): w1a - w1b | [C,2C): w1b | [2C,2C+8): folded edge weight
       [2C+8,2C+16): gamma, beta, ba, bb, 0 | [2C+16,3C+16): wa | [3C+16,4C+16): wb"""
    we, be, w1a, w1b, w1c, b1, g, bta = lp["edge"]
    wa, ba, wb, bb = lp["mlp"]
    wf = jnp.concatenate([we @ w1c, be @ w1c + b1,
                          jnp.zeros((EA_COLS - edge_dim - 1, c), jnp.float32)], axis=0)
    biases = jnp.concatenate([g, bta, ba, bb, jnp.zeros((4, c), jnp.float32)], axis=0)
    return jnp.concatenate([w1a - w1b, w1b, wf, biases, wa, wb], axis=0)


def gnn_forward(x, params, graph, *, tn, tek):
    n_cells, n_levels, c = x.shape
    N, n_pad = graph["n_nodes"], graph["n_pad"]
    # x.transpose(0,1).flatten(0,1): node index = level * n_cells + cell
    xf = jnp.transpose(x, (1, 0, 2)).reshape(N, c)
    xf = jnp.pad(xf, ((0, n_pad - N), (0, 0)))
    for lp in params:
        slab = pack_layer_params(lp, c, graph["edge_dim"])
        xj = xf[graph["srcL"]]       # only x_j is gathered; x_i comes from the dst tile block
        xf = fused_layer(graph["chunk_tbl"], xj, graph["eaL"], graph["dloc_row"],
                         graph["dloc_col"], xf, slab,
                         tn=tn, tek=tek, pad_chunk=graph["pad_chunk"])
    return jnp.transpose(xf[:N].reshape(n_levels, n_cells, c), (1, 0, 2))


def gnn_reference(x, params, src, dst, edge_attr):
    n_cells, n_levels, c = x.shape
    N = n_cells * n_levels
    xf = jnp.transpose(x, (1, 0, 2)).reshape(N, c)
    for lp in params:
        we, be, w1a, w1b, w1c, b1, g, bta = lp["edge"]
        wa, ba, wb, bb = lp["mlp"]
        xi, xj = xf[dst], xf[src]
        e = edge_attr @ we + be
        h = xi @ w1a + (xj - xi) @ w1b + e @ w1c + b1
        mu = h.mean(-1, keepdims=True)
        var = ((h - mu) ** 2).mean(-1, keepdims=True)
        h = (h - mu) / jnp.sqrt(var + LN_EPS) * g + bta
        h = jnp.maximum(h, 0.0)
        agg = jax.ops.segment_sum(h, dst, num_segments=N)
        a = agg @ wa + ba
        a = jnp.where(a >= 0.0, a, NEG_SLOPE * a)
        xf = a @ wb + bb
    return jnp.transpose(xf.reshape(n_levels, n_cells, c), (1, 0, 2))


def build_graph(n_cells, n_levels):
    """Small stand-in for create_edge_index: vertical column edges + a ring among cells at
    each level + self loops (same edge semantics, smaller N)."""
    src, dst = [], []
    for cidx in range(n_cells):                 # vertical neighbours
        for h in range(1, n_levels):
            a = cidx + (h - 1) * n_cells
            b = cidx + h * n_cells
            src += [a, b]; dst += [b, a]
    for cidx in range(n_cells):                 # horizontal (ring) neighbours
        nb = (cidx + 1) % n_cells
        for h in range(n_levels):
            a = cidx + h * n_cells
            b = nb + h * n_cells
            src += [a, b]; dst += [b, a]
    for cidx in range(n_cells):                 # self loops
        for h in range(n_levels):
            a = cidx + h * n_cells
            src.append(a); dst.append(a)
    return np.asarray(src, np.int32), np.asarray(dst, np.int32)


def init_params(key, c, edge_dim, n_layers):
    params = []
    for layer in range(n_layers):
        ks = jax.random.split(jax.random.fold_in(key, layer), 8)

        def lin_w(k, fan_in, fan_out):
            bound = 1.0 / np.sqrt(fan_in)
            return jax.random.uniform(k, (fan_in, fan_out), jnp.float32, -bound, bound)

        def lin_b(k, fan_in, fan_out):
            bound = 1.0 / np.sqrt(fan_in)
            return jax.random.uniform(k, (1, fan_out), jnp.float32, -bound, bound)

        we = lin_w(ks[0], edge_dim, c)
        be = lin_b(ks[1], edge_dim, c)
        w1 = lin_w(ks[2], 3 * c, c)             # transposed Linear(3C -> C)
        b1 = lin_b(ks[3], 3 * c, c)
        w1a, w1b, w1c = w1[:c], w1[c:2 * c], w1[2 * c:]
        g = jnp.ones((1, c), jnp.float32)       # LayerNorm default affine
        bta = jnp.zeros((1, c), jnp.float32)
        wa = lin_w(ks[4], c, c)
        ba = lin_b(ks[5], c, c)
        wb = lin_w(ks[6], c, c)
        bb = lin_b(ks[7], c, c)
        params.append(dict(edge=(we, be, w1a, w1b, w1c, b1, g, bta),
                           mlp=(wa, ba, wb, bb)))
    return params


if __name__ == "__main__":
    # Small stand-in for the original (384 cells, 60 levels).  base_channels = 128 so every
    # streamed block and the output are lane-dense (>=128 lanes); num_tiles is even (v7x 2 TCs).
    n_cells, n_levels, base_channels, n_layers = 32, 8, 128, 4
    edge_dim = 5
    TN, TEK = 128, 512          # node tile / edge chunk (TEK multiple of 128)

    key = jax.random.PRNGKey(0)
    kx, ke_, kp = jax.random.split(key, 3)

    x = jax.random.normal(kx, (n_cells, n_levels, base_channels), jnp.float32)

    src_np, dst_np = build_graph(n_cells, n_levels)
    E = src_np.shape[0]
    N = n_cells * n_levels

    # TODO(synk): the real edge_attr is built from ClimSim grid lat/lon netCDF
    # (create_edge_attr); synthesize deterministic (E, 5) features instead.
    edge_attr = jax.random.normal(ke_, (E, edge_dim), jnp.float32)

    params = init_params(kp, base_channels, edge_dim, n_layers)

    srcL, eidL, dlocL, chunk_tbl, pad_chunk, n_pad = build_csr_layout(
        src_np, dst_np, N, TN, TEK)

    # Layer-invariant augmented edge attrs: [attr(5), 1.0, 0, 0] laid out in chunk order.
    ea_aug = jnp.concatenate(
        [edge_attr, jnp.ones((E, 1), jnp.float32),
         jnp.zeros((E, EA_COLS - edge_dim - 1), jnp.float32)], axis=1)

    graph = dict(
        srcL=jnp.asarray(srcL),                    # (L,) gather idx for x_j
        eaL=ea_aug[jnp.asarray(eidL)],             # (L, 8) layout-ordered aug edge attrs
        dloc_row=jnp.asarray(dlocL)[None, :],      # (1, L) local dst (-1 = padding)
        dloc_col=jnp.asarray(dlocL)[:, None],      # (L, 1) local dst (-1 = padding)
        chunk_tbl=jnp.asarray(chunk_tbl),          # (num_tiles, KE) scalar-prefetch table
        pad_chunk=pad_chunk, n_pad=n_pad, n_nodes=N, edge_dim=edge_dim,
    )

    out = gnn_forward(x, params, graph, tn=TN, tek=TEK)
    out = jax.block_until_ready(out)

    ref = gnn_reference(x, params, jnp.asarray(src_np), jnp.asarray(dst_np), edge_attr)
    np.testing.assert_allclose(np.asarray(out), np.asarray(ref), rtol=2e-3, atol=2e-3)
    print("KERNEL_OK")
</pallas_src>

<mosaic_0001>
module attributes {stable_mosaic.version = 11 : i64} {
  func.func @_fused_layer_kernel(%arg0: i32, %arg1: i32, %arg2: memref<2x2xi32, #tpu.memory_space<smem>>, %arg3: memref<512x128xf32, #tpu.memory_space<vmem>>, %arg4: memref<512x8xf32, #tpu.memory_space<vmem>>, %arg5: memref<1x512xi32, #tpu.memory_space<vmem>>, %arg6: memref<512x1xi32, #tpu.memory_space<vmem>>, %arg7: memref<128x128xf32, #tpu.memory_space<vmem>>, %arg8: memref<528x128xf32, #tpu.memory_space<vmem>>, %arg9: memref<128x128xf32, #tpu.memory_space<vmem>>, %arg10: memref<128x128xf32, #tpu.memory_space<vmem>>, %arg11: memref<128x128xf32, #tpu.memory_space<vmem>>) attributes {dimension_semantics = [#tpu.dimension_semantics<parallel>, #tpu.dimension_semantics<arbitrary>], iteration_bounds = array<i64: 2, 2>, scalar_prefetch = 1 : i64, scratch_operands = 2 : i64, tpu.core_type = #tpu.core_type<tc>, window_params = [{transform_indices = @transform_0, window_bounds = array<i64: 512, 128>}, {transform_indices = @transform_1, window_bounds = array<i64: 512, 8>}, {transform_indices = @transform_2, window_bounds = array<i64: 1, 512>}, {transform_indices = @transform_3, window_bounds = array<i64: 512, 1>}, {transform_indices = @transform_4, window_bounds = array<i64: 128, 128>}, {pipeline_mode = #tpu.pipeline_mode<synchronous>, transform_indices = @transform_5, window_bounds = array<i64: 528, 128>}, {transform_indices = @transform_6, window_bounds = array<i64: 128, 128>}]} {
    %c0_i32 = arith.constant 0 : i32
    %0 = arith.cmpi eq, %arg1, %c0_i32 : i32
    %1 = arith.extui %0 : i1 to i32
    %c0_i32_0 = arith.constant 0 : i32
    %2 = arith.cmpi ne, %1, %c0_i32_0 : i32
    scf.if %2 {
      %cst = arith.constant 0.000000e+00 : f32
      %12 = vector.broadcast %cst : f32 to vector<128x128xf32>
      %c0 = arith.constant 0 : index
      %c0_3 = arith.constant 0 : index
      %13 = vector.load %arg10[%c0, %c0_3] : memref<128x128xf32, #tpu.memory_space<vmem>>, vector<128x128xf32>
      tpu.vector_store %arg10[%c0, %c0_3], %12 {strides = array<i32>} : memref<128x128xf32, #tpu.memory_space<vmem>>, vector<128x128xf32>,
      %c0_4 = arith.constant 0 : index
      %c0_5 = arith.constant 0 : index
      %14 = vector.load %arg7[%c0_4, %c0_5] : memref<128x128xf32, #tpu.memory_space<vmem>>, vector<128x128xf32>
      %c0_6 = arith.constant 0 : index
      %c0_7 = arith.constant 0 : index
      %15 = vector.load %arg8[%c0_6, %c0_7] : memref<528x128xf32, #tpu.memory_space<vmem>>, vector<128x128xf32>
      %cst_8 = arith.constant dense<0.000000e+00> : vector<128x128xf32>
      %16 = tpu.matmul %14, %15, %cst_8 {dimension_numbers = #tpu.dot_dimension_numbers<[1], [0], [0], [1], [0, 0, 1, 1], [], []>} : vector<128x128xf32>, vector<128x128xf32>, vector<128x128xf32> -> vector<128x128xf32>
      %c0_9 = arith.constant 0 : index
      %c0_10 = arith.constant 0 : index
      %17 = vector.load %arg11[%c0_9, %c0_10] : memref<128x128xf32, #tpu.memory_space<vmem>>, vector<128x128xf32>
      tpu.vector_store %arg11[%c0_9, %c0_10], %16 {strides = array<i32>} : memref<128x128xf32, #tpu.memory_space<vmem>>, vector<128x128xf32>,
    } else {
    }
    %3 = arith.index_cast %arg0 : i32 to index
    %4 = arith.index_cast %arg1 : i32 to index
    %5 = memref.load %arg2[%3, %4] : memref<2x2xi32, #tpu.memory_space<smem>>
    %c4_i32 = arith.constant 4 : i32
    %6 = arith.cmpi ne, %5, %c4_i32 : i32
    %7 = arith.extui %6 : i1 to i32
    %c0_i32_1 = arith.constant 0 : i32
    %8 = arith.cmpi ne, %7, %c0_i32_1 : i32
    scf.if %8 {
      %c0 = arith.constant 0 : index
      %c0_3 = arith.constant 0 : index
      %12 = vector.load %arg5[%c0, %c0_3] : memref<1x512xi32, #tpu.memory_space<vmem>>, vector<1x512xi32>
      %c0_4 = arith.constant 0 : index
      %c0_5 = arith.constant 0 : index
      %13 = vector.load %arg6[%c0_4, %c0_5] : memref<512x1xi32, #tpu.memory_space<vmem>>, vector<512x1xi32>
      %14 = tpu.iota {dimensions = array<i32: 0>} : vector<128x512xi32>
      %15 = vector.broadcast %12 : vector<1x512xi32> to vector<128x512xi32>
      %16 = arith.cmpi eq, %14, %15 : vector<128x512xi32>
      %17 = arith.extui %16 : vector<128x512xi1> to vector<128x512xi32>
      %18 = arith.sitofp %17 : vector<128x512xi32> to vector<128x512xf32>
      %19 = tpu.iota {dimensions = array<i32: 1>} : vector<512x128xi32>
      %20 = vector.broadcast %13 : vector<512x1xi32> to vector<512x128xi32>
      %21 = arith.cmpi eq, %19, %20 : vector<512x128xi32>
      %22 = arith.extui %21 : vector<512x128xi1> to vector<512x128xi32>
      %23 = arith.sitofp %22 : vector<512x128xi32> to vector<512x128xf32>
      %c0_6 = arith.constant 0 : index
      %c0_7 = arith.constant 0 : index
      %24 = vector.load %arg11[%c0_6, %c0_7] : memref<128x128xf32, #tpu.memory_space<vmem>>, vector<128x128xf32>
      %cst = arith.constant dense<0.000000e+00> : vector<512x128xf32>
      %25 = tpu.matmul %23, %24, %cst {dimension_numbers = #tpu.dot_dimension_numbers<[1], [0], [0], [1], [0, 0, 1, 1], [], []>} : vector<512x128xf32>, vector<128x128xf32>, vector<512x128xf32> -> vector<512x128xf32>
      %c0_8 = arith.constant 0 : index
      %c0_9 = arith.constant 0 : index
      %26 = vector.load %arg3[%c0_8, %c0_9] : memref<512x128xf32, #tpu.memory_space<vmem>>, vector<512x128xf32>
      %c128 = arith.constant 128 : index
      %c0_10 = arith.constant 0 : index
      %27 = vector.load %arg8[%c128, %c0_10] : memref<528x128xf32, #tpu.memory_space<vmem>>, vector<128x128xf32>
      %cst_11 = arith.constant dense<0.000000e+00> : vector<512x128xf32>
      %28 = tpu.matmul %26, %27, %cst_11 {dimension_numbers = #tpu.dot_dimension_numbers<[1], [0], [0], [1], [0, 0, 1, 1], [], []>} : vector<512x128xf32>, vector<128x128xf32>, vector<512x128xf32> -> vector<512x128xf32>
      %29 = arith.addf %25, %28 : vector<512x128xf32>
      %c0_12 = arith.constant 0 : index
      %c0_13 = arith.constant 0 : index
      %30 = vector.load %arg4[%c0_12, %c0_13] : memref<512x8xf32, #tpu.memory_space<vmem>>, vector<512x8xf32>
      %c256 = arith.constant 256 : index
      %c0_14 = arith.constant 0 : index
      %31 = vector.load %arg8[%c256, %c0_14] : memref<528x128xf32, #tpu.memory_space<vmem>>, vector<8x128xf32>
      %cst_15 = arith.constant dense<0.000000e+00> : vector<512x128xf32>
      %32 = tpu.matmul %30, %31, %cst_15 {dimension_numbers = #tpu.dot_dimension_numbers<[1], [0], [0], [1], [0, 0, 1, 1], [], []>} : vector<512x8xf32>, vector<8x128xf32>, vector<512x128xf32> -> vector<512x128xf32>
      %33 = arith.addf %29, %32 : vector<512x128xf32>
      %cst_16 = arith.constant dense<0.000000e+00> : vector<512xf32>
      %34 = vector.multi_reduction <add>, %33, %cst_16 [1] : vector<512x128xf32> to vector<512xf32>
      %35 = vector.shape_cast %34 : vector<512xf32> to vector<512x1xf32>
      %cst_17 = arith.constant 1.280000e+02 : f32
      %36 = vector.broadcast %cst_17 : f32 to vector<512x1xf32>
      %37 = arith.divf %35, %36 : vector<512x1xf32>
      %38 = arith.mulf %33, %33 : vector<512x128xf32>
      %cst_18 = arith.constant dense<0.000000e+00> : vector<512xf32>
      %39 = vector.multi_reduction <add>, %38, %cst_18 [1] : vector<512x128xf32> to vector<512xf32>
      %40 = vector.shape_cast %39 : vector<512xf32> to vector<512x1xf32>
      %cst_19 = arith.constant 1.280000e+02 : f32
      %41 = vector.broadcast %cst_19 : f32 to vector<512x1xf32>
      %42 = arith.divf %40, %41 : vector<512x1xf32>
      %43 = arith.mulf %37, %37 : vector<512x1xf32>
      %44 = arith.subf %42, %43 : vector<512x1xf32>
      %cst_20 = arith.constant 0.000000e+00 : f32
      %45 = vector.broadcast %cst_20 : f32 to vector<512x1xf32>
      %46 = arith.maximumf %44, %45 : vector<512x1xf32>
      %c264 = arith.constant 264 : index
      %c0_21 = arith.constant 0 : index
      %47 = vector.load %arg8[%c264, %c0_21] : memref<528x128xf32, #tpu.memory_space<vmem>>, vector<8x128xf32>
      %48 = vector.broadcast %37 : vector<512x1xf32> to vector<512x128xf32>
      %49 = arith.subf %33, %48 : vector<512x128xf32>
      %cst_22 = arith.constant 9.99999974E-6 : f32
      %50 = vector.broadcast %cst_22 : f32 to vector<512x1xf32>
      %51 = arith.addf %46, %50 : vector<512x1xf32>
      %52 = math.rsqrt %51 : vector<512x1xf32>
      %53 = vector.broadcast %52 : vector<512x1xf32> to vector<512x128xf32>
      %54 = arith.mulf %49, %53 : vector<512x128xf32>
      %55 = vector.extract_strided_slice %47 {offsets = [0, 0], sizes = [1, 128], strides = [1, 1]} : vector<8x128xf32> to vector<1x128xf32>
      %56 = vector.broadcast %55 : vector<1x128xf32> to vector<512x128xf32>
      %57 = arith.mulf %54, %56 : vector<512x128xf32>
      %58 = vector.extract_strided_slice %47 {offsets = [1, 0], sizes = [1, 128], strides = [1, 1]} : vector<8x128xf32> to vector<1x128xf32>
      %59 = vector.broadcast %58 : vector<1x128xf32> to vector<512x128xf32>
      %60 = arith.addf %57, %59 : vector<512x128xf32>
      %cst_23 = arith.constant 0.000000e+00 : f32
      %61 = vector.broadcast %cst_23 : f32 to vector<512x128xf32>
      %62 = arith.maximumf %60, %61 : vector<512x128xf32>
      %c0_24 = arith.constant 0 : index
      %c0_25 = arith.constant 0 : index
      %63 = vector.load %arg10[%c0_24, %c0_25] : memref<128x128xf32, #tpu.memory_space<vmem>>, vector<128x128xf32>
      %cst_26 = arith.constant dense<0.000000e+00> : vector<128x128xf32>
      %64 = tpu.matmul %18, %62, %cst_26 {dimension_numbers = #tpu.dot_dimension_numbers<[1], [0], [0], [1], [0, 0, 1, 1], [], []>} : vector<128x512xf32>, vector<512x128xf32>, vector<128x128xf32> -> vector<128x128xf32>
      %65 = arith.addf %63, %64 : vector<128x128xf32>
      %c0_27 = arith.constant 0 : index
      %c0_28 = arith.constant 0 : index
      %66 = vector.load %arg10[%c0_27, %c0_28] : memref<128x128xf32, #tpu.memory_space<vmem>>, vector<128x128xf32>
      tpu.vector_store %arg10[%c0_27, %c0_28], %65 {strides = array<i32>} : memref<128x128xf32, #tpu.memory_space<vmem>>, vector<128x128xf32>,
    } else {
    }
    %c1_i32 = arith.constant 1 : i32
    %9 = arith.cmpi eq, %arg1, %c1_i32 : i32
    %10 = arith.extui %9 : i1 to i32
    %c0_i32_2 = arith.constant 0 : i32
    %11 = arith.cmpi ne, %10, %c0_i32_2 : i32
    scf.if %11 {
      %c264 = arith.constant 264 : index
      %c0 = arith.constant 0 : index
      %12 = vector.load %arg8[%c264, %c0] : memref<528x128xf32, #tpu.memory_space<vmem>>, vector<8x128xf32>
      %c0_3 = arith.constant 0 : index
      %c0_4 = arith.constant 0 : index
      %13 = vector.load %arg10[%c0_3, %c0_4] : memref<128x128xf32, #tpu.memory_space<vmem>>, vector<128x128xf32>
      %c272 = arith.constant 272 : index
      %c0_5 = arith.constant 0 : index
      %14 = vector.load %arg8[%c272, %c0_5] : memref<528x128xf32, #tpu.memory_space<vmem>>, vector<128x128xf32>
      %cst = arith.constant dense<0.000000e+00> : vector<128x128xf32>
      %15 = tpu.matmul %13, %14, %cst {dimension_numbers = #tpu.dot_dimension_numbers<[1], [0], [0], [1], [0, 0, 1, 1], [], []>} : vector<128x128xf32>, vector<128x128xf32>, vector<128x128xf32> -> vector<128x128xf32>
      %16 = vector.extract_strided_slice %12 {offsets = [2, 0], sizes = [1, 128], strides = [1, 1]} : vector<8x128xf32> to vector<1x128xf32>
      %17 = vector.broadcast %16 : vector<1x128xf32> to vector<128x128xf32>
      %18 = arith.addf %15, %17 : vector<128x128xf32>
      %cst_6 = arith.constant 0.000000e+00 : f32
      %19 = vector.broadcast %cst_6 : f32 to vector<128x128xf32>
      %20 = arith.cmpf oge, %18, %19 : vector<128x128xf32>
      %cst_7 = arith.constant 0.00999999977 : f32
      %21 = vector.broadcast %cst_7 : f32 to vector<128x128xf32>
      %22 = arith.mulf %21, %18 : vector<128x128xf32>
      %23 = arith.select %20, %18, %22 : vector<128x128xi1>, vector<128x128xf32>
      %c400 = arith.constant 400 : index
      %c0_8 = arith.constant 0 : index
      %24 = vector.load %arg8[%c400, %c0_8] : memref<528x128xf32, #tpu.memory_space<vmem>>, vector<128x128xf32>
      %cst_9 = arith.constant dense<0.000000e+00> : vector<128x128xf32>
      %25 = tpu.matmul %23, %24, %cst_9 {dimension_numbers = #tpu.dot_dimension_numbers<[1], [0], [0], [1], [0, 0, 1, 1], [], []>} : vector<128x128xf32>, vector<128x128xf32>, vector<128x128xf32> -> vector<128x128xf32>
      %26 = vector.extract_strided_slice %12 {offsets = [3, 0], sizes = [1, 128], strides = [1, 1]} : vector<8x128xf32> to vector<1x128xf32>
      %27 = vector.broadcast %26 : vector<1x128xf32> to vector<128x128xf32>
      %28 = arith.addf %25, %27 : vector<128x128xf32>
      %c0_10 = arith.constant 0 : index
      %c0_11 = arith.constant 0 : index
      %29 = vector.load %arg9[%c0_10, %c0_11] : memref<128x128xf32, #tpu.memory_space<vmem>>, vector<128x128xf32>
      tpu.vector_store %arg9[%c0_10, %c0_11], %28 {strides = array<i32>} : memref<128x128xf32, #tpu.memory_space<vmem>>, vector<128x128xf32>,
    } else {
    }
    return
  }
  func.func @transform_0(%arg0: i32, %arg1: i32, %arg2: memref<2x2xi32, #tpu.memory_space<smem>>) -> (i32, i32) {
    %0 = arith.index_cast %arg0 : i32 to index
    %1 = arith.index_cast %arg1 : i32 to index
    %2 = memref.load %arg2[%0, %1] : memref<2x2xi32, #tpu.memory_space<smem>>
    %c0_i32 = arith.constant 0 : i32
    %c0_i32_0 = arith.constant 0 : i32
    return %2, %c0_i32 : i32, i32
  }
  func.func @transform_1(%arg0: i32, %arg1: i32, %arg2: memref<2x2xi32, #tpu.memory_space<smem>>) -> (i32, i32) {
    %0 = arith.index_cast %arg0 : i32 to index
    %1 = arith.index_cast %arg1 : i32 to index
    %2 = memref.load %arg2[%0, %1] : memref<2x2xi32, #tpu.memory_space<smem>>
    %c0_i32 = arith.constant 0 : i32
    %c0_i32_0 = arith.constant 0 : i32
    return %2, %c0_i32 : i32, i32
  }
  func.func @transform_2(%arg0: i32, %arg1: i32, %arg2: memref<2x2xi32, #tpu.memory_space<smem>>) -> (i32, i32) {
    %0 = arith.index_cast %arg0 : i32 to index
    %1 = arith.index_cast %arg1 : i32 to index
    %2 = memref.load %arg2[%0, %1] : memref<2x2xi32, #tpu.memory_space<smem>>
    %c0_i32 = arith.constant 0 : i32
    %c0_i32_0 = arith.constant 0 : i32
    return %c0_i32, %2 : i32, i32
  }
  func.func @transform_3(%arg0: i32, %arg1: i32, %arg2: memref<2x2xi32, #tpu.memory_space<smem>>) -> (i32, i32) {
    %0 = arith.index_cast %arg0 : i32 to index
    %1 = arith.index_cast %arg1 : i32 to index
    %2 = memref.load %arg2[%0, %1] : memref<2x2xi32, #tpu.memory_space<smem>>
    %c0_i32 = arith.constant 0 : i32
    %c0_i32_0 = arith.constant 0 : i32
    return %2, %c0_i32 : i32, i32
  }
  func.func @transform_4(%arg0: i32, %arg1: i32, %arg2: memref<2x2xi32, #tpu.memory_space<smem>>) -> (i32, i32) {
    %c0_i32 = arith.constant 0 : i32
    %c0_i32_0 = arith.constant 0 : i32
    return %arg0, %c0_i32 : i32, i32
  }
  func.func @transform_5(%arg0: i32, %arg1: i32, %arg2: memref<2x2xi32, #tpu.memory_space<smem>>) -> (i32, i32) {
    %c0_i32 = arith.constant 0 : i32
    %c0_i32_0 = arith.constant 0 : i32
    %c0_i32_1 = arith.constant 0 : i32
    return %c0_i32, %c0_i32_0 : i32, i32
  }
  func.func @transform_6(%arg0: i32, %arg1: i32, %arg2: memref<2x2xi32, #tpu.memory_space<smem>>) -> (i32, i32) {
    %c0_i32 = arith.constant 0 : i32
    %c0_i32_0 = arith.constant 0 : i32
    return %arg0, %c0_i32 : i32, i32
  }
}

</mosaic_0001>

<llo_original>
// kernel: tpu_custom_call.1
$region0: #{tpu_custom_call.1}
  #allocation0 [shape = 'u32[]', space=smem, size = 0x4, offset = 0x4, fixed_abs, tag = 'smem constant byte address 0x4 - core index']
  #allocation1 [shape = 'u32[144,128]{1,0:T(1,128)}', space=vmem, size = 0x12000, scoped, tag = 'internal scratch']
  #allocation2 [shape = 'f32[128,128]{1,0:T(8,128)}', space=vmem, size = 0x10000, scoped, tag = 'scratch operand']
  #allocation3 [shape = 'f32[128,128]{1,0:T(8,128)}', space=vmem, size = 0x10000, scoped, tag = 'scratch operand']
  #allocation4 [shape = 's32[1]{0}', space=sflag, size = 0x4, scoped, tag = 'scoped memory for tpu_custom_call.1']
  #allocation5 [shape = 'u8[1024]{0}', space=smem, size = 0x400, scoped, tag = 'prefetched SMEM operand 0']
  %s0 = inlined_call_operand.vmem [shape: s32[2,2], index: 0, kind: input, shape index: {}]
  %s1 = inlined_call_operand.vmem [shape: f32[2560,128], index: 1, kind: input, shape index: {}]
  %s2 = inlined_call_operand.vmem [shape: f32[2560,8], index: 2, kind: input, shape index: {}]
  %s3 = inlined_call_operand.vmem [shape: s32[1,2560], index: 3, kind: input, shape index: {}]
  %s4 = inlined_call_operand.vmem [shape: s32[2560,1], index: 4, kind: input, shape index: {}]
  %s5 = inlined_call_operand.vmem [shape: f32[256,128], index: 5, kind: input, shape index: {}]
  %s6 = inlined_call_operand.vmem [shape: f32[528,128], index: 6, kind: input, shape index: {}]
  %s7 = inlined_call_operand.hbm [shape: f32[256,128], index: 7, kind: output, shape index: {}]
  %s8 = sld [smem:[#allocation0]]
  $region69: #{tpu_custom_call.1} parent=0
    _
  %s10 = ssub.s32 1, %s8
  %s11 = scalar_select 0, %s10, %s8
  %s12 = sshll.u32 %s0, 4
  %s13 = int_to_ptr.vmem [resolvable:$true] %s12
  %15 = dma.vmem_to_smem %s13, 32, [#allocation5], [#allocation4]
  %16 = dma.done [#allocation4], 32
  %17 = sfence
  $region1: #{tpu_custom_call.1} parent=0
    #allocation6 [shape = 'u8[131072]{0}', space=vmem, size = 0x20000, scoped, tag = 'output window, operand 0']
    #allocation7 [shape = 's32[2]{0}', space=sflag, size = 0x8, scoped, tag = 'scoped memory for tpu_custom_call.1']
    %18 = vsyncpa [#allocation7], 0
    %s19 = scalar_lea.sflag [#allocation7], 1
    %20 = vsyncpa %s19, 0
    loop: start=0, step=1, limit=6
    $region2: #{tpu_custom_call.1} parent=1 // loop_pre_header
      _
    $region3: #{tpu_custom_call.1} parent=1 // loop_header
      %s22 = sphi 0, %s26
      %p23 = scmp.ge.s32.totalorder %s22, 6
      %s29 = sphi 0, %s41
      %s30 = sphi 0, %s37
      %s31 = sphi 0, %s29
      %s32 = sphi 0, %s30
      %s33 = sphi 0, %s31
      %s34 = sphi 0, %s32
      %s60 = sphi 0, %s62
      %s63 = sphi 0, %s60
      %s64 = sphi 0, %s63
      %s80 = sphi 0, %s64
      %s102 = sphi 0, %s104
      %s105 = sphi 0, %s102
      %s106 = sphi 0, %s105
      %s122 = sphi 0, %s106
      %s144 = sphi 0, %s146
      %s147 = sphi 0, %s144
      %s148 = sphi 0, %s147
      %s164 = sphi 0, %s148
      %s186 = sphi 0, %s188
      %s189 = sphi 0, %s186
      %s190 = sphi 0, %s189
      %s206 = sphi 0, %s190
      %s212 = sphi 0, %s214
      %s215 = sphi 0, %s212
      %s216 = sphi 0, %s215
      %s232 = sphi 0, %s216
      %s236 = sphi 0, %s236
      %s238 = sphi 0, %s236
      %s239 = sphi 0, %s238
      %s253 = sphi 0, %s239
      %s259 = sphi 0, %s261
      %s262 = sphi 0, %s259
      %s263 = sphi 0, %s262
      %s279 = sphi 0, %s263
    $region4: #{tpu_custom_call.1} parent=1 // loop_header_branch
      %25 = sbr.rel (%p23) target = $region8
    $region5: #{tpu_custom_call.1} parent=1 // loop_body
      %s27 = ssub.s32 %s22, 1
      %s28 = ssub.s32 %s22, 2
      %s35 = sadd.s32 1, %s30
      %p36 = scmp.ge.s32.totalorder %s35, 2
      %s37 = scalar_select %p36, 0, %s35
      %s38 = sadd.s32 1, %s29
      %s39 = scalar_select %p36, %s38, %s29
      %p40 = scmp.ge.s32.totalorder %s39, 2
      %s41 = scalar_select %p40, 0, %s39
      %s42 = sshra.s32 %s30, 7
      %s43 = sand.u32 %s30, 127
      %s44 = sadd.s32 %s42, %s29
      %s45 = smul.u32 %s44, 128
      %s46 = sshra.s32 %s30, 7
      %s47 = sand.u32 %s30, 127
      %s48 = sadd.s32 %s45, %s47
      %s49 = sld [smem:[#allocation5 + %s48]]
      %s50 = sshra.s32 %s37, 7
      %s51 = sand.u32 %s37, 127
      %s52 = sadd.s32 %s50, %s41
      %s53 = smul.u32 %s52, 128
      %s54 = sshra.s32 %s37, 7
      %s55 = sand.u32 %s37, 127
      %s56 = sadd.s32 %s53, %s55
      %s57 = sld [smem:[#allocation5 + %s56]]
      %s58 = ssub.s32 %s49, %s57
      %p59 = scmp.eq.s32.totalorder %s58, 0
      %s61 = sadd.s32 %s60, 1
      %s62 = scalar_select %p59, %s60, %s61
      %p65 = pneg %p59
      %p66 = scmp.eq.s32.totalorder %s22, 3
      %p67 = por %p65, %p66
      %p68 = scmp.ne.s32.totalorder %s60, %s63
      %p69 = scmp.eq.s32.totalorder %s22, 0
      %p70 = por %p68, %p69
      %p71 = scmp.ne.s32.totalorder %s60, %s63
      %p72 = scmp.eq.s32.totalorder %s27, 3
      %p73 = por %p71, %p72
      %p74 = scmp.ne.s32.totalorder %s63, %s64
      %p75 = scmp.eq.s32.totalorder %s27, 0
      %p76 = por %p74, %p75
      %p77 = scmp.ne.s32.totalorder %s63, %s64
      %p78 = scmp.eq.s32.totalorder %s28, 3
      %p79 = por %p77, %p78
      %p81 = scmp.ne.s32.totalorder %s64, %s80
      %p82 = scmp.eq.s32.totalorder %s28, 0
      %p83 = por %p81, %p82
      %s84 = sshra.s32 %s30, 7
      %s85 = sand.u32 %s30, 127
      %s86 = sadd.s32 %s84, %s29
      %s87 = smul.u32 %s86, 128
      %s88 = sshra.s32 %s30, 7
      %s89 = sand.u32 %s30, 127
      %s90 = sadd.s32 %s87, %s89
      %s91 = sld [smem:[#allocation5 + %s90]]
      %s92 = sshra.s32 %s37, 7
      %s93 = sand.u32 %s37, 127
      %s94 = sadd.s32 %s92, %s41
      %s95 = smul.u32 %s94, 128
      %s96 = sshra.s32 %s37, 7
      %s97 = sand.u32 %s37, 127
      %s98 = sadd.s32 %s95, %s97
      %s99 = sld [smem:[#allocation5 + %s98]]
      %s100 = ssub.s32 %s91, %s99
      %p101 = scmp.eq.s32.totalorder %s100, 0
      %s103 = sadd.s32 %s102, 1
      %s104 = scalar_select %p101, %s102, %s103
      %p107 = pneg %p101
      %p108 = scmp.eq.s32.totalorder %s22, 3
      %p109 = por %p107, %p108
      %p110 = scmp.ne.s32.totalorder %s102, %s105
      %p111 = scmp.eq.s32.totalorder %s22, 0
      %p112 = por %p110, %p111
      %p113 = scmp.ne.s32.totalorder %s102, %s105
      %p114 = scmp.eq.s32.totalorder %s27, 3
      %p115 = por %p113, %p114
      %p116 = scmp.ne.s32.totalorder %s105, %s106
      %p117 = scmp.eq.s32.totalorder %s27, 0
      %p118 = por %p116, %p117
      %p119 = scmp.ne.s32.totalorder %s105, %s106
      %p120 = scmp.eq.s32.totalorder %s28, 3
      %p121 = por %p119, %p120
      %p123 = scmp.ne.s32.totalorder %s106, %s122
      %p124 = scmp.eq.s32.totalorder %s28, 0
      %p125 = por %p123, %p124
      %s126 = sshra.s32 %s30, 7
      %s127 = sand.u32 %s30, 127
      %s128 = sadd.s32 %s126, %s29
      %s129 = smul.u32 %s128, 128
      %s130 = sshra.s32 %s30, 7
      %s131 = sand.u32 %s30, 127
      %s132 = sadd.s32 %s129, %s131
      %s133 = sld [smem:[#allocation5 + %s132]]
      %s134 = sshra.s32 %s37, 7
      %s135 = sand.u32 %s37, 127
      %s136 = sadd.s32 %s134, %s41
      %s137 = smul.u32 %s136, 128
      %s138 = sshra.s32 %s37, 7
      %s139 = sand.u32 %s37, 127
      %s140 = sadd.s32 %s137, %s139
      %s141 = sld [smem:[#allocation5 + %s140]]
      %s142 = ssub.s32 %s133, %s141
      %p143 = scmp.eq.s32.totalorder %s142, 0
      %s145 = sadd.s32 %s144, 1
      %s146 = scalar_select %p143, %s144, %s145
      %p149 = pneg %p143
      %p150 = scmp.eq.s32.totalorder %s22, 3
      %p151 = por %p149, %p150
      %p152 = scmp.ne.s32.totalorder %s144, %s147
      %p153 = scmp.eq.s32.totalorder %s22, 0
      %p154 = por %p152, %p153
      %p155 = scmp.ne.s32.totalorder %s144, %s147
      %p156 = scmp.eq.s32.totalorder %s27, 3
      %p157 = por %p155, %p156
      %p158 = scmp.ne.s32.totalorder %s147, %s148
      %p159 = scmp.eq.s32.totalorder %s27, 0
      %p160 = por %p158, %p159
      %p161 = scmp.ne.s32.totalorder %s147, %s148
      %p162 = scmp.eq.s32.totalorder %s28, 3
      %p163 = por %p161, %p162
      %p165 = scmp.ne.s32.totalorder %s148, %s164
      %p166 = scmp.eq.s32.totalorder %s28, 0
      %p167 = por %p165, %p166
      %s168 = sshra.s32 %s30, 7
      %s169 = sand.u32 %s30, 127
      %s170 = sadd.s32 %s168, %s29
      %s171 = smul.u32 %s170, 128
      %s172 = sshra.s32 %s30, 7
      %s173 = sand.u32 %s30, 127
      %s174 = sadd.s32 %s171, %s173
      %s175 = sld [smem:[#allocation5 + %s174]]
      %s176 = sshra.s32 %s37, 7
      %s177 = sand.u32 %s37, 127
      %s178 = sadd.s32 %s176, %s41
      %s179 = smul.u32 %s178, 128
      %s180 = sshra.s32 %s37, 7
      %s181 = sand.u32 %s37, 127
      %s182 = sadd.s32 %s179, %s181
      %s183 = sld [smem:[#allocation5 + %s182]]
      %s184 = ssub.s32 %s175, %s183
      %p185 = scmp.eq.s32.totalorder %s184, 0
      %s187 = sadd.s32 %s186, 1
      %s188 = scalar_select %p185, %s186, %s187
      %p191 = pneg %p185
      %p192 = scmp.eq.s32.totalorder %s22, 3
      %p193 = por %p191, %p192
      %p194 = scmp.ne.s32.totalorder %s186, %s189
      %p195 = scmp.eq.s32.totalorder %s22, 0
      %p196 = por %p194, %p195
      %p197 = scmp.ne.s32.totalorder %s186, %s189
      %p198 = scmp.eq.s32.totalorder %s27, 3
      %p199 = por %p197, %p198
      %p200 = scmp.ne.s32.totalorder %s189, %s190
      %p201 = scmp.eq.s32.totalorder %s27, 0
      %p202 = por %p200, %p201
      %p203 = scmp.ne.s32.totalorder %s189, %s190
      %p204 = scmp.eq.s32.totalorder %s28, 3
      %p205 = por %p203, %p204
      %p207 = scmp.ne.s32.totalorder %s190, %s206
      %p208 = scmp.eq.s32.totalorder %s28, 0
      %p209 = por %p207, %p208
      %s210 = ssub.s32 %s29, %s41
      %p211 = scmp.eq.s32.totalorder %s210, 0
      %s213 = sadd.s32 %s212, 1
      %s214 = scalar_select %p211, %s212, %s213
      %p217 = pneg %p211
      %p218 = scmp.eq.s32.totalorder %s22, 3
      %p219 = por %p217, %p218
      %p220 = scmp.ne.s32.totalorder %s212, %s215
      %p221 = scmp.eq.s32.totalorder %s22, 0
      %p222 = por %p220, %p221
      %p223 = scmp.ne.s32.totalorder %s212, %s215
      %p224 = scmp.eq.s32.totalorder %s27, 3
      %p225 = por %p223, %p224
      %p226 = scmp.ne.s32.totalorder %s215, %s216
      %p227 = scmp.eq.s32.totalorder %s27, 0
      %p228 = por %p226, %p227
      %p229 = scmp.ne.s32.totalorder %s215, %s216
      %p230 = scmp.eq.s32.totalorder %s28, 3
      %p231 = por %p229, %p230
      %p233 = scmp.ne.s32.totalorder %s216, %s232
      %p234 = scmp.eq.s32.totalorder %s28, 0
      %p235 = por %p233, %p234
      %s237 = sadd.s32 %s236, 1
      %p240 = scmp.eq.s32.totalorder %s22, 3
      %p241 = scmp.ne.s32.totalorder %s236, %s238
      %p242 = scmp.eq.s32.totalorder %s22, 0
      %p243 = por %p241, %p242
      %p244 = scmp.ne.s32.totalorder %s236, %s238
      %p245 = scmp.eq.s32.totalorder %s27, 3
      %p246 = por %p244, %p245
      %p247 = scmp.ne.s32.totalorder %s238, %s239
      %p248 = scmp.eq.s32.totalorder %s27, 0
      %p249 = por %p247, %p248
      %p250 = scmp.ne.s32.totalorder %s238, %s239
      %p251 = scmp.eq.s32.totalorder %s28, 3
      %p252 = por %p250, %p251
      %p254 = scmp.ne.s32.totalorder %s239, %s253
      %p255 = scmp.eq.s32.totalorder %s28, 0
      %p256 = por %p254, %p255
      %s257 = ssub.s32 %s29, %s41
      %p258 = scmp.eq.s32.totalorder %s257, 0
      %s260 = sadd.s32 %s259, 1
      %s261 = scalar_select %p258, %s259, %s260
      %p264 = pneg %p258
      %p265 = scmp.eq.s32.totalorder %s22, 3
      %p266 = por %p264, %p265
      %p267 = scmp.ne.s32.totalorder %s259, %s262
      %p268 = scmp.eq.s32.totalorder %s22, 0
      %p269 = por %p267, %p268
      %p270 = scmp.ne.s32.totalorder %s259, %s262
      %p271 = scmp.eq.s32.totalorder %s27, 3
      %p272 = por %p270, %p271
      %p273 = scmp.ne.s32.totalorder %s262, %s263
      %p274 = scmp.eq.s32.totalorder %s27, 0
      %p275 = por %p273, %p274
      %p276 = scmp.ne.s32.totalorder %s262, %s263
      %p277 = scmp.eq.s32.totalorder %s28, 3
      %p278 = por %p276, %p277
      %p280 = scmp.ne.s32.totalorder %s263, %s279
      %p281 = scmp.eq.s32.totalorder %s28, 0
      %p282 = por %p280, %p281
      %p283 = scmp.le.s32.totalorder 1, %s22
      %p284 = scmp.lt.s32.totalorder %s22, 5
      %p285 = pnand %p283, %p284
      %p286 = pneg %p285
      // Predicated region
      $region9: #{tpu_custom_call.1} parent=5 // pred_check
        _
      $region10: #{tpu_custom_call.1} parent=5 // pred_check_branch
        %288 = sbr.rel (%p285) target = $region12
      $region11: #{tpu_custom_call.1} parent=5 // pred_region
        %s289 = ssub.s32 %s22, 1
        // Predicated region
        $region13: #{tpu_custom_call.1} parent=11 // pred_check
          %p290 = pneg %p249
        $region14: #{tpu_custom_call.1} parent=11 // pred_check_branch
          %292 = sbr.rel (%p290) target = $region16
        $region15: #{tpu_custom_call.1} parent=11 // pred_region
          _
        $region16: #{tpu_custom_call.1} parent=11 // pred_fallthru
          _
      $region12: #{tpu_custom_call.1} parent=5 // pred_fallthru
        _
      %p293 = scmp.lt.s32.totalorder %s22, 4
      // Predicated region
      $region17: #{tpu_custom_call.1} parent=5 // pred_check
        %p294 = pneg %p293
      $region18: #{tpu_custom_call.1} parent=5 // pred_check_branch
        %296 = sbr.rel (%p294) target = $region20
      $region19: #{tpu_custom_call.1} parent=5 // pred_region
        // Predicated region
        $region21: #{tpu_custom_call.1} parent=19 // pred_check
          %p297 = pneg %p70
        $region22: #{tpu_custom_call.1} parent=19 // pred_check_branch
          %299 = sbr.rel (%p297) target = $region24
        $region23: #{tpu_custom_call.1} parent=19 // pred_region
          %s300 = sshra.s32 %s30, 7
          %s301 = sand.u32 %s30, 127
          %s302 = sadd.s32 %s300, %s29
          %s303 = smul.u32 %s302, 128
          %s304 = sshra.s32 %s30, 7
          %s305 = sand.u32 %s30, 127
          %s306 = sadd.s32 %s303, %s305
          %s307 = sld [smem:[#allocation5 + %s306]]
          %s308 = smul.u32 64, %s307
          %p309 = scmp.lt.s32.totalorder %s308, 319
          %s310 = scalar_select %p309, %s308, 319
          %s311 = smul.addr %s310, 8
          %s312 = scalar_lea.vmem %s1, %s311
          %s313 = sshra.s32 %s30, 7
          %s314 = sand.u32 %s30, 127
          %s315 = sadd.s32 %s313, %s29
          %s316 = smul.u32 %s315, 128
          %s317 = sshra.s32 %s30, 7
          %s318 = sand.u32 %s30, 127
          %s319 = sadd.s32 %s316, %s318
          %s320 = sld [smem:[#allocation5 + %s319]]
          %s321 = smul.u32 64, %s320
        $region24: #{tpu_custom_call.1} parent=19 // pred_fallthru
          _
        // Predicated region
        $region25: #{tpu_custom_call.1} parent=19 // pred_check
          %p322 = pneg %p112
        $region26: #{tpu_custom_call.1} parent=19 // pred_check_branch
          %324 = sbr.rel (%p322) target = $region28
        $region27: #{tpu_custom_call.1} parent=19 // pred_region
          %s325 = sshra.s32 %s30, 7
          %s326 = sand.u32 %s30, 127
          %s327 = sadd.s32 %s325, %s29
          %s328 = smul.u32 %s327, 128
          %s329 = sshra.s32 %s30, 7
          %s330 = sand.u32 %s30, 127
          %s331 = sadd.s32 %s328, %s330
          %s332 = sld [smem:[#allocation5 + %s331]]
          %s333 = smul.u32 64, %s332
          %p334 = scmp.lt.s32.totalorder %s333, 319
          %s335 = scalar_select %p334, %s333, 319
          %s336 = smul.addr %s335, 8
          %s337 = scalar_lea.vmem %s2, %s336
          %s338 = sshra.s32 %s30, 7
          %s339 = sand.u32 %s30, 127
          %s340 = sadd.s32 %s338, %s29
          %s341 = smul.u32 %s340, 128
          %s342 = sshra.s32 %s30, 7
          %s343 = sand.u32 %s30, 127
          %s344 = sadd.s32 %s341, %s343
          %s345 = sld [smem:[#allocation5 + %s344]]
          %s346 = smul.u32 64, %s345
        $region28: #{tpu_custom_call.1} parent=19 // pred_fallthru
          _
        // Predicated region
        $region29: #{tpu_custom_call.1} parent=19 // pred_check
          %p347 = pneg %p154
        $region30: #{tpu_custom_call.1} parent=19 // pred_check_branch
          %349 = sbr.rel (%p347) target = $region32
        $region31: #{tpu_custom_call.1} parent=19 // pred_region
          %s350 = sshra.s32 %s30, 7
          %s351 = sand.u32 %s30, 127
          %s352 = sadd.s32 %s350, %s29
          %s353 = smul.u32 %s352, 128
          %s354 = sshra.s32 %s30, 7
          %s355 = sand.u32 %s30, 127
          %s356 = sadd.s32 %s353, %s355
          %s357 = sld [smem:[#allocation5 + %s356]]
          %s358 = smul.u32 4, %s357
          %p359 = scmp.lt.s32.totalorder %s358, 19
          %s360 = scalar_select %p359, %s358, 19
          %s361 = scalar_lea.vmem %s3, %s360
          %s362 = sshra.s32 %s30, 7
          %s363 = sand.u32 %s30, 127
          %s364 = sadd.s32 %s362, %s29
          %s365 = smul.u32 %s364, 128
          %s366 = sshra.s32 %s30, 7
          %s367 = sand.u32 %s30, 127
          %s368 = sadd.s32 %s365, %s367
          %s369 = sld [smem:[#allocation5 + %s368]]
          %s370 = smul.u32 4, %s369
        $region32: #{tpu_custom_call.1} parent=19 // pred_fallthru
          _
        // Predicated region
        $region33: #{tpu_custom_call.1} parent=19 // pred_check
          %p371 = pneg %p196
        $region34: #{tpu_custom_call.1} parent=19 // pred_check_branch
          %373 = sbr.rel (%p371) target = $region36
        $region35: #{tpu_custom_call.1} parent=19 // pred_region
          %s374 = sshra.s32 %s30, 7
          %s375 = sand.u32 %s30, 127
          %s376 = sadd.s32 %s374, %s29
          %s377 = smul.u32 %s376, 128
          %s378 = sshra.s32 %s30, 7
          %s379 = sand.u32 %s30, 127
          %s380 = sadd.s32 %s377, %s379
          %s381 = sld [smem:[#allocation5 + %s380]]
          %s382 = smul.u32 64, %s381
          %p383 = scmp.lt.s32.totalorder %s382, 319
          %s384 = scalar_select %p383, %s382, 319
          %s385 = smul.addr %s384, 8
          %s386 = scalar_lea.vmem %s4, %s385
          %s387 = sshra.s32 %s30, 7
          %s388 = sand.u32 %s30, 127
          %s389 = sadd.s32 %s387, %s29
          %s390 = smul.u32 %s389, 128
          %s391 = sshra.s32 %s30, 7
          %s392 = sand.u32 %s30, 127
          %s393 = sadd.s32 %s390, %s392
          %s394 = sld [smem:[#allocation5 + %s393]]
          %s395 = smul.u32 64, %s394
        $region36: #{tpu_custom_call.1} parent=19 // pred_fallthru
          _
        // Predicated region
        $region37: #{tpu_custom_call.1} parent=19 // pred_check
          %p396 = pneg %p222
        $region38: #{tpu_custom_call.1} parent=19 // pred_check_branch
          %398 = sbr.rel (%p396) target = $region40
        $region39: #{tpu_custom_call.1} parent=19 // pred_region
          %s399 = smul.u32 16, %s29
          %p400 = scmp.lt.s32.totalorder %s399, 31
          %s401 = scalar_select %p400, %s399, 31
          %s402 = smul.addr %s401, 8
          %s403 = scalar_lea.vmem %s5, %s402
          %s404 = smul.u32 16, %s29
        $region40: #{tpu_custom_call.1} parent=19 // pred_fallthru
          _
      $region20: #{tpu_custom_call.1} parent=5 // pred_fallthru
        _
      %p405 = scmp.le.s32.totalorder 1, %s22
      %p406 = scmp.lt.s32.totalorder %s22, 5
      %p407 = pnand %p405, %p406
      %p408 = pneg %p407
      // Predicated region
      $region41: #{tpu_custom_call.1} parent=5 // pred_check
        _
      $region42: #{tpu_custom_call.1} parent=5 // pred_check_branch
        %410 = sbr.rel (%p407) target = $region44
      $region43: #{tpu_custom_call.1} parent=5 // pred_region
        %s411 = ssub.s32 %s22, 1
        %s412 = sshra.s32 %s32, 7
        %s413 = sand.u32 %s32, 127
        %s414 = sadd.s32 %s412, %s31
        %s415 = smul.u32 %s414, 128
        %s416 = sshra.s32 %s32, 7
        %s417 = sand.u32 %s32, 127
        %s418 = sadd.s32 %s415, %s417
        %s419 = sld [smem:[#allocation5 + %s418]]
        %s420 = smul.u32 64, %s419
        %p421 = scmp.lt.s32.totalorder %s420, 319
        %s422 = scalar_select %p421, %s420, 319
        %s423 = smul.addr %s422, 8
        %s424 = scalar_lea.vmem %s1, %s423
        %p425 = pneg %p76
        %p426 = pneg %p73
        %s427 = sshra.s32 %s32, 7
        %s428 = sand.u32 %s32, 127
        %s429 = sadd.s32 %s427, %s31
        %s430 = smul.u32 %s429, 128
        %s431 = sshra.s32 %s32, 7
        %s432 = sand.u32 %s32, 127
        %s433 = sadd.s32 %s430, %s432
        %s434 = sld [smem:[#allocation5 + %s433]]
        %s435 = smul.u32 64, %s434
        %p436 = scmp.lt.s32.totalorder %s435, 319
        %s437 = scalar_select %p436, %s435, 319
        %s438 = smul.addr %s437, 8
        %s439 = scalar_lea.vmem %s2, %s438
        %p440 = pneg %p118
        %p441 = pneg %p115
        %s442 = sshra.s32 %s32, 7
        %s443 = sand.u32 %s32, 127
        %s444 = sadd.s32 %s442, %s31
        %s445 = smul.u32 %s444, 128
        %s446 = sshra.s32 %s32, 7
        %s447 = sand.u32 %s32, 127
        %s448 = sadd.s32 %s445, %s447
        %s449 = sld [smem:[#allocation5 + %s448]]
        %s450 = smul.u32 4, %s449
        %p451 = scmp.lt.s32.totalorder %s450, 19
        %s452 = scalar_select %p451, %s450, 19
        %s453 = scalar_lea.vmem %s3, %s452
        %p454 = pneg %p160
        %p455 = pneg %p157
        %s456 = sshra.s32 %s32, 7
        %s457 = sand.u32 %s32, 127
        %s458 = sadd.s32 %s456, %s31
        %s459 = smul.u32 %s458, 128
        %s460 = sshra.s32 %s32, 7
        %s461 = sand.u32 %s32, 127
        %s462 = sadd.s32 %s459, %s461
        %s463 = sld [smem:[#allocation5 + %s462]]
        %s464 = smul.u32 64, %s463
        %p465 = scmp.lt.s32.totalorder %s464, 319
        %s466 = scalar_select %p465, %s464, 319
        %s467 = smul.addr %s466, 8
        %s468 = scalar_lea.vmem %s4, %s467
        %p469 = pneg %p202
        %p470 = pneg %p199
        %s471 = smul.u32 16, %s31
        %p472 = scmp.lt.s32.totalorder %s471, 31
        %s473 = scalar_select %p472, %s471, 31
        %s474 = smul.addr %s473, 8
        %s475 = scalar_lea.vmem %s5, %s474
        %p476 = pneg %p228
        %p477 = pneg %p225
        %p478 = pneg %p249
        %p479 = pneg %p246
        %p480 = pneg %p275
        %p481 = pneg %p272
        %s482 = sand.u32 %s262, 1
        %s483 = scalar_lea.sflag [#allocation7], %s482
        %s484 = sand.u32 %s262, 1
        %s485 = smul.addr %s484, 128
        %s486 = scalar_lea.vmem [#allocation6], %s485
        %s487 = sshra.s32 %s32, 7
        %s488 = sand.u32 %s32, 127
        %s489 = sadd.s32 %s487, %s31
        %s490 = smul.u32 %s489, 128
        %s491 = sshra.s32 %s32, 7
        %s492 = sand.u32 %s32, 127
        %s493 = sadd.s32 %s490, %s492
        %s494 = sld [smem:[#allocation5 + %s493]]
        %s495 = smul.u32 64, %s494
        %p496 = scmp.lt.s32.totalorder %s495, 319
        %s497 = scalar_select %p496, %s495, 319
        %s498 = smul.addr %s497, 8
        %s499 = scalar_lea.vmem %s1, %s498
        %s500 = sshra.s32 %s32, 7
        %s501 = sand.u32 %s32, 127
        %s502 = sadd.s32 %s500, %s31
        %s503 = smul.u32 %s502, 128
        %s504 = sshra.s32 %s32, 7
        %s505 = sand.u32 %s32, 127
        %s506 = sadd.s32 %s503, %s505
        %s507 = sld [smem:[#allocation5 + %s506]]
        %s508 = smul.u32 64, %s507
        %s509 = sshra.s32 %s32, 7
        %s510 = sand.u32 %s32, 127
        %s511 = sadd.s32 %s509, %s31
        %s512 = smul.u32 %s511, 128
        %s513 = sshra.s32 %s32, 7
        %s514 = sand.u32 %s32, 127
        %s515 = sadd.s32 %s512, %s514
        %s516 = sld [smem:[#allocation5 + %s515]]
        %s517 = smul.u32 64, %s516
        %p518 = scmp.lt.s32.totalorder %s517, 319
        %s519 = scalar_select %p518, %s517, 319
        %s520 = smul.addr %s519, 8
        %s521 = scalar_lea.vmem %s2, %s520
        %s522 = sshra.s32 %s32, 7
        %s523 = sand.u32 %s32, 127
        %s524 = sadd.s32 %s522, %s31
        %s525 = smul.u32 %s524, 128
        %s526 = sshra.s32 %s32, 7
        %s527 = sand.u32 %s32, 127
        %s528 = sadd.s32 %s525, %s527
        %s529 = sld [smem:[#allocation5 + %s528]]
        %s530 = smul.u32 64, %s529
        %s531 = sshra.s32 %s32, 7
        %s532 = sand.u32 %s32, 127
        %s533 = sadd.s32 %s531, %s31
        %s534 = smul.u32 %s533, 128
        %s535 = sshra.s32 %s32, 7
        %s536 = sand.u32 %s32, 127
        %s537 = sadd.s32 %s534, %s536
        %s538 = sld [smem:[#allocation5 + %s537]]
        %s539 = smul.u32 4, %s538
        %p540 = scmp.lt.s32.totalorder %s539, 19
        %s541 = scalar_select %p540, %s539, 19
        %s542 = scalar_lea.vmem %s3, %s541
        %s543 = sshra.s32 %s32, 7
        %s544 = sand.u32 %s32, 127
        %s545 = sadd.s32 %s543, %s31
        %s546 = smul.u32 %s545, 128
        %s547 = sshra.s32 %s32, 7
        %s548 = sand.u32 %s32, 127
        %s549 = sadd.s32 %s546, %s548
        %s550 = sld [smem:[#allocation5 + %s549]]
        %s551 = smul.u32 4, %s550
        %s552 = sshra.s32 %s32, 7
        %s553 = sand.u32 %s32, 127
        %s554 = sadd.s32 %s552, %s31
        %s555 = smul.u32 %s554, 128
        %s556 = sshra.s32 %s32, 7
        %s557 = sand.u32 %s32, 127
        %s558 = sadd.s32 %s555, %s557
        %s559 = sld [smem:[#allocation5 + %s558]]
        %s560 = smul.u32 64, %s559
        %p561 = scmp.lt.s32.totalorder %s560, 319
        %s562 = scalar_select %p561, %s560, 319
        %s563 = smul.addr %s562, 8
        %s564 = scalar_lea.vmem %s4, %s563
        %s565 = sshra.s32 %s32, 7
        %s566 = sand.u32 %s32, 127
        %s567 = sadd.s32 %s565, %s31
        %s568 = smul.u32 %s567, 128
        %s569 = sshra.s32 %s32, 7
        %s570 = sand.u32 %s32, 127
        %s571 = sadd.s32 %s568, %s570
        %s572 = sld [smem:[#allocation5 + %s571]]
        %s573 = smul.u32 64, %s572
        %s574 = smul.u32 16, %s31
        %p575 = scmp.lt.s32.totalorder %s574, 31
        %s576 = scalar_select %p575, %s574, 31
        %s577 = smul.addr %s576, 8
        %s578 = scalar_lea.vmem %s5, %s577
        %s579 = smul.u32 16, %s31
        %s580 = smul.u32 16, %s31
        %p581 = scmp.eq.s32.totalorder %s32, 0
        // Predicated region
        $region45: #{tpu_custom_call.1} parent=43 // pred_check
          %p582 = pneg %p581
        $region46: #{tpu_custom_call.1} parent=43 // pred_check_branch
          %584 = sbr.rel (%p582) target = $region48
        $region47: #{tpu_custom_call.1} parent=43 // pred_region
          %585 = vst [vmem:[#allocation2] sm:$0xff] 0.0
          %586 = vst [vmem:[#allocation2 + $0x8] sm:$0xff] 0.0
          %587 = vst [vmem:[#allocation2 + $0x10] sm:$0xff] 0.0
          %588 = vst [vmem:[#allocation2 + $0x18] sm:$0xff] 0.0
          %589 = vst [vmem:[#allocation2 + $0x20] sm:$0xff] 0.0
          %590 = vst [vmem:[#allocation2 + $0x28] sm:$0xff] 0.0
          %591 = vst [vmem:[#allocation2 + $0x30] sm:$0xff] 0.0
          %592 = vst [vmem:[#allocation2 + $0x38] sm:$0xff] 0.0
          %593 = vst [vmem:[#allocation2 + $0x40] sm:$0xff] 0.0
          %594 = vst [vmem:[#allocation2 + $0x48] sm:$0xff] 0.0
          %595 = vst [vmem:[#allocation2 + $0x50] sm:$0xff] 0.0
          %596 = vst [vmem:[#allocation2 + $0x58] sm:$0xff] 0.0
          %597 = vst [vmem:[#allocation2 + $0x60] sm:$0xff] 0.0
          %598 = vst [vmem:[#allocation2 + $0x68] sm:$0xff] 0.0
          %599 = vst [vmem:[#allocation2 + $0x70] sm:$0xff] 0.0
          %600 = vst [vmem:[#allocation2 + $0x78] sm:$0xff] 0.0
          %v601 = vld [vmem:[%s578] sm:$0xff]
          %v602 = vld [vmem:[%s578 + $0x8] sm:$0xff]
          %v603 = vld [vmem:[%s578 + $0x10] sm:$0xff]
          %v604 = vld [vmem:[%s578 + $0x18] sm:$0xff]
          %v605 = vld [vmem:[%s578 + $0x20] sm:$0xff]
          %v606 = vld [vmem:[%s578 + $0x28] sm:$0xff]
          %v607 = vld [vmem:[%s578 + $0x30] sm:$0xff]
          %v608 = vld [vmem:[%s578 + $0x38] sm:$0xff]
          %v609 = vld [vmem:[%s578 + $0x40] sm:$0xff]
          %v610 = vld [vmem:[%s578 + $0x48] sm:$0xff]
          %v611 = vld [vmem:[%s578 + $0x50] sm:$0xff]
          %v612 = vld [vmem:[%s578 + $0x58] sm:$0xff]
          %v613 = vld [vmem:[%s578 + $0x60] sm:$0xff]
          %v614 = vld [vmem:[%s578 + $0x68] sm:$0xff]
          %v615 = vld [vmem:[%s578 + $0x70] sm:$0xff]
          %v616 = vld [vmem:[%s578 + $0x78] sm:$0xff]
          %v617 = vld [vmem:[%s6] sm:$0xff]
          %v618 = vld [vmem:[%s6 + $0x8] sm:$0xff]
          %v619 = vld [vmem:[%s6 + $0x10] sm:$0xff]
          %v620 = vld [vmem:[%s6 + $0x18] sm:$0xff]
          %v621 = vld [vmem:[%s6 + $0x20] sm:$0xff]
          %v622 = vld [vmem:[%s6 + $0x28] sm:$0xff]
          %v623 = vld [vmem:[%s6 + $0x30] sm:$0xff]
          %v624 = vld [vmem:[%s6 + $0x38] sm:$0xff]
          %v625 = vld [vmem:[%s6 + $0x40] sm:$0xff]
          %v626 = vld [vmem:[%s6 + $0x48] sm:$0xff]
          %v627 = vld [vmem:[%s6 + $0x50] sm:$0xff]
          %v628 = vld [vmem:[%s6 + $0x58] sm:$0xff]
          %v629 = vld [vmem:[%s6 + $0x60] sm:$0xff]
          %v630 = vld [vmem:[%s6 + $0x68] sm:$0xff]
          %v631 = vld [vmem:[%s6 + $0x70] sm:$0xff]
          %v632 = vld [vmem:[%s6 + $0x78] sm:$0xff]
          %633 = vmatprep.subr.mxu0 0.0
          %634 = vmatpush1.msra.mxu0 %v617
          %635 = vmatprep.subr.mxu0 0.0
          %636 = vmatpush1.msra.mxu0 %v618
          %637 = vmatprep.subr.mxu0 0.0
          %638 = vmatpush1.msra.mxu0 %v619
          %639 = vmatprep.subr.mxu0 0.0
          %640 = vmatpush1.msra.mxu0 %v620
          %641 = vmatprep.subr.mxu0 0.0
          %642 = vmatpush1.msra.mxu0 %v621
          %643 = vmatprep.subr.mxu0 0.0
          %644 = vmatpush1.msra.mxu0 %v622
          %645 = vmatprep.subr.mxu0 0.0
          %646 = vmatpush1.msra.mxu0 %v623
          %647 = vmatprep.subr.mxu0 0.0
          %648 = vmatpush1.msra.mxu0 %v624
          %649 = vmatprep.subr.mxu0 0.0
          %650 = vmatpush1.msra.mxu0 %v625
          %651 = vmatprep.subr.mxu0 0.0
          %652 = vmatpush1.msra.mxu0 %v626
          %653 = vmatprep.subr.mxu0 0.0
          %654 = vmatpush1.msra.mxu0 %v627
          %655 = vmatprep.subr.mxu0 0.0
          %656 = vmatpush1.msra.mxu0 %v628
          %657 = vmatprep.subr.mxu0 0.0
          %658 = vmatpush1.msra.mxu0 %v629
          %659 = vmatprep.subr.mxu0 0.0
          %660 = vmatpush1.msra.mxu0 %v630
          %661 = vmatprep.subr.mxu0 0.0
          %662 = vmatpush1.msra.mxu0 %v631
          %663 = vmatprep.subr.mxu0 0.0
          %664 = vmatpush1.msra.mxu0 %v632
          %665 = vmatprep.subr.mxu0 0.0
          %666 = vmatpush1.msra.mxu0 0.0
          %667 = vmatprep.subr.mxu0 0.0
          %668 = vmatpush1.msra.mxu0 0.0
          %669 = vmatprep.subr.mxu0 0.0
          %670 = vmatpush1.msra.mxu0 0.0
          %671 = vmatprep.subr.mxu0 0.0
          %672 = vmatpush1.msra.mxu0 0.0
          %673 = vmatprep.subr.mxu0 0.0
          %674 = vmatpush1.msra.mxu0 0.0
          %675 = vmatprep.subr.mxu0 0.0
          %676 = vmatpush1.msra.mxu0 0.0
          %677 = vmatprep.subr.mxu0 0.0
          %678 = vmatpush1.msra.mxu0 0.0
          %679 = vmatprep.subr.mxu0 0.0
          %680 = vmatpush1.msra.mxu0 0.0
          %681 = vmatprep.subr.mxu0 0.0
          %682 = vmatpush1.msra.mxu0 0.0
          %683 = vmatprep.subr.mxu0 0.0
          %684 = vmatpush1.msra.mxu0 0.0
          %685 = vmatprep.subr.mxu0 0.0
          %686 = vmatpush1.msra.mxu0 0.0
          %687 = vmatprep.subr.mxu0 0.0
          %688 = vmatpush1.msra.mxu0 0.0
          %689 = vmatprep.subr.mxu0 0.0
          %690 = vmatpush1.msra.mxu0 0.0
          %691 = vmatprep.subr.mxu0 0.0
          %692 = vmatpush1.msra.mxu0 0.0
          %693 = vmatprep.subr.mxu0 0.0
          %694 = vmatpush1.msra.mxu0 0.0
          %695 = vmatprep.subr.mxu0 0.0
          %696 = vmatpush1.msra.mxu0 0.0
          %697 = vmatprep.mubr.f32.mxu0 0.0
          %698 = vmatmul.mubr.f32.gmra.mrb[0].mxu0 %v601
          %v699 = vpop.f32.mrb[0].mxu0
          %v700 = vadd.f32 0.0, %v699
          %v701 = vpop.f32.mrb[0].mxu0
          %702 = vmatprep.mubr.f32.mxu0 0.0
          %703 = vmatmul.mubr.f32.gmra.mrb[0].mxu0 %v602
          %v704 = vpop.f32.mrb[0].mxu0
          %v705 = vadd.f32 0.0, %v704
          %v706 = vpop.f32.mrb[0].mxu0
          %707 = vmatprep.mubr.f32.mxu0 0.0
          %708 = vmatmul.mubr.f32.gmra.mrb[0].mxu0 %v603
          %v709 = vpop.f32.mrb[0].mxu0
          %v710 = vadd.f32 0.0, %v709
          %v711 = vpop.f32.mrb[0].mxu0
          %712 = vmatprep.mubr.f32.mxu0 0.0
          %713 = vmatmul.mubr.f32.gmra.mrb[0].mxu0 %v604
          %v714 = vpop.f32.mrb[0].mxu0
          %v715 = vadd.f32 0.0, %v714
          %v716 = vpop.f32.mrb[0].mxu0
          %717 = vmatprep.mubr.f32.mxu0 0.0
          %718 = vmatmul.mubr.f32.gmra.mrb[0].mxu0 %v605
          %v719 = vpop.f32.mrb[0].mxu0
          %v720 = vadd.f32 0.0, %v719
          %v721 = vpop.f32.mrb[0].mxu0
          %722 = vmatprep.mubr.f32.mxu0 0.0
          %723 = vmatmul.mubr.f32.gmra.mrb[0].mxu0 %v606
          %v724 = vpop.f32.mrb[0].mxu0
          %v725 = vadd.f32 0.0, %v724
          %v726 = vpop.f32.mrb[0].mxu0
          %727 = vmatprep.mubr.f32.mxu0 0.0
          %728 = vmatmul.mubr.f32.gmra.mrb[0].mxu0 %v607
          %v729 = vpop.f32.mrb[0].mxu0
          %v730 = vadd.f32 0.0, %v729
          %v731 = vpop.f32.mrb[0].mxu0
          %732 = vmatprep.mubr.f32.mxu0 0.0
          %733 = vmatmul.mubr.f32.gmra.mrb[0].mxu0 %v608
          %v734 = vpop.f32.mrb[0].mxu0
          %v735 = vadd.f32 0.0, %v734
          %v736 = vpop.f32.mrb[0].mxu0
          %737 = vmatprep.mubr.f32.mxu0 0.0
          %738 = vmatmul.mubr.f32.gmra.mrb[0].mxu0 %v609
          %v739 = vpop.f32.mrb[0].mxu0
          %v740 = vadd.f32 0.0, %v739
          %v741 = vpop.f32.mrb[0].mxu0
          %742 = vmatprep.mubr.f32.mxu0 0.0
          %743 = vmatmul.mubr.f32.gmra.mrb[0].mxu0 %v610
          %v744 = vpop.f32.mrb[0].mxu0
          %v745 = vadd.f32 0.0, %v744
          %v746 = vpop.f32.mrb[0].mxu0
          %747 = vmatprep.mubr.f32.mxu0 0.0
          %748 = vmatmul.mubr.f32.gmra.mrb[0].mxu0 %v611
          %v749 = vpop.f32.mrb[0].mxu0
          %v750 = vadd.f32 0.0, %v749
          %v751 = vpop.f32.mrb[0].mxu0
          %752 = vmatprep.mubr.f32.mxu0 0.0
          %753 = vmatmul.mubr.f32.gmra.mrb[0].mxu0 %v612
          %v754 = vpop.f32.mrb[0].mxu0
          %v755 = vadd.f32 0.0, %v754
          %v756 = vpop.f32.mrb[0].mxu0
          %757 = vmatprep.mubr.f32.mxu0 0.0
          %758 = vmatmul.mubr.f32.gmra.mrb[0].mxu0 %v613
          %v759 = vpop.f32.mrb[0].mxu0
          %v760 = vadd.f32 0.0, %v759
          %v761 = vpop.f32.mrb[0].mxu0
          %762 = vmatprep.mubr.f32.mxu0 0.0
          %763 = vmatmul.mubr.f32.gmra.mrb[0].mxu0 %v614
          %v764 = vpop.f32.mrb[0].mxu0
          %v765 = vadd.f32 0.0, %v764
          %v766 = vpop.f32.mrb[0].mxu0
          %767 = vmatprep.mubr.f32.mxu0 0.0
          %768 = vmatmul.mubr.f32.gmra.mrb[0].mxu0 %v615
          %v769 = vpop.f32.mrb[0].mxu0
          %v770 = vadd.f32 0.0, %v769
          %v771 = vpop.f32.mrb[0].mxu0
          %772 = vmatprep.mubr.f32.mxu0 0.0
          %773 = vmatmul.mubr.f32.gmra.mrb[0].mxu0 %v616
          %v774 = vpop.f32.mrb[0].mxu0
          %v775 = vadd.f32 0.0, %v774
          %v776 = vpop.f32.mrb[0].mxu0
          %777 = vdwg.mxu0
          %778 = vst [vmem:[#allocation3] sm:$0xff] %v700
          %779 = vst [vmem:[#allocation3 + $0x8] sm:$0xff] %v705
          %780 = vst [vmem:[#allocation3 + $0x10] sm:$0xff] %v710
          %781 = vst [vmem:[#allocation3 + $0x18] sm:$0xff] %v715
          %782 = vst [vmem:[#allocation3 + $0x20] sm:$0xff] %v720
          %783 = vst [vmem:[#allocation3 + $0x28] sm:$0xff] %v725
          %784 = vst [vmem:[#allocation3 + $0x30] sm:$0xff] %v730
          %785 = vst [vmem:[#allocation3 + $0x38] sm:$0xff] %v735
          %786 = vst [vmem:[#allocation3 + $0x40] sm:$0xff] %v740
          %787 = vst [vmem:[#allocation3 + $0x48] sm:$0xff] %v745
          %788 = vst [vmem:[#allocation3 + $0x50] sm:$0xff] %v750
          %789 = vst [vmem:[#allocation3 + $0x58] sm:$0xff] %v755
          %790 = vst [vmem:[#allocation3 + $0x60] sm:$0xff] %v760
          %791 = vst [vmem:[#allocation3 + $0x68] sm:$0xff] %v765
          %792 = vst [vmem:[#allocation3 + $0x70] sm:$0xff] %v770
          %793 = vst [vmem:[#allocation3 + $0x78] sm:$0xff] %v775
        $region48: #{tpu_custom_call.1} parent=43 // pred_fallthru
          _
        %s794 = sshra.s32 %s32, 7
        %s795 = sand.u32 %s32, 127
        %s796 = sadd.s32 %s794, %s31
        %s797 = smul.u32 %s796, 128
        %s798 = sshra.s32 %s32, 7
        %s799 = sand.u32 %s32, 127
        %s800 = sadd.s32 %s797, %s799
        %s801 = sld [smem:[#allocation5 + %s800]]
        %p802 = scmp.ne.s32.totalorder %s801, 4
        // Predicated region
        $region49: #{tpu_custom_call.1} parent=43 // pred_check
          %p803 = pneg %p802
        $region50: #{tpu_custom_call.1} parent=43 // pred_check_branch
          %805 = sbr.rel (%p803) target = $region52
        $region51: #{tpu_custom_call.1} parent=43 // pred_region
          %v806 = vld [vmem:[%s542] sm:$0xf]
          %v807 = vld [vmem:[%s564] sm:$0xff]
          %v808 = vld [vmem:[%s564 + $0x8] sm:$0xff]
          %v809 = vld [vmem:[%s564 + $0x10] sm:$0xff]
          %v810 = vld [vmem:[%s564 + $0x18] sm:$0xff]
          %v811 = vld [vmem:[%s564 + $0x20] sm:$0xff]
          %v812 = vld [vmem:[%s564 + $0x28] sm:$0xff]
          %v813 = vld [vmem:[%s564 + $0x30] sm:$0xff]
          %v814 = vld [vmem:[%s564 + $0x38] sm:$0xff]
          %v815 = vld [vmem:[%s564 + $0x40] sm:$0xff]
          %v816 = vld [vmem:[%s564 + $0x48] sm:$0xff]
          %v817 = vld [vmem:[%s564 + $0x50] sm:$0xff]
          %v818 = vld [vmem:[%s564 + $0x58] sm:$0xff]
          %v819 = vld [vmem:[%s564 + $0x60] sm:$0xff]
          %v820 = vld [vmem:[%s564 + $0x68] sm:$0xff]
          %v821 = vld [vmem:[%s564 + $0x70] sm:$0xff]
          %v822 = vld [vmem:[%s564 + $0x78] sm:$0xff]
          %v823 = vld [vmem:[%s564 + $0x80] sm:$0xff]
          %v824 = vld [vmem:[%s564 + $0x88] sm:$0xff]
          %v825 = vld [vmem:[%s564 + $0x90] sm:$0xff]
          %v826 = vld [vmem:[%s564 + $0x98] sm:$0xff]
          %v827 = vld [vmem:[%s564 + $0xa0] sm:$0xff]
          %v828 = vld [vmem:[%s564 + $0xa8] sm:$0xff]
          %v829 = vld [vmem:[%s564 + $0xb0] sm:$0xff]
          %v830 = vld [vmem:[%s564 + $0xb8] sm:$0xff]
          %v831 = vld [vmem:[%s564 + $0xc0] sm:$0xff]
          %v832 = vld [vmem:[%s564 + $0xc8] sm:$0xff]
          %v833 = vld [vmem:[%s564 + $0xd0] sm:$0xff]
          %v834 = vld [vmem:[%s564 + $0xd8] sm:$0xff]
          %v835 = vld [vmem:[%s564 + $0xe0] sm:$0xff]
          %v836 = vld [vmem:[%s564 + $0xe8] sm:$0xff]
          %v837 = vld [vmem:[%s564 + $0xf0] sm:$0xff]
          %v838 = vld [vmem:[%s564 + $0xf8] sm:$0xff]
          %v839 = vld [vmem:[%s564 + $0x100] sm:$0xff]
          %v840 = vld [vmem:[%s564 + $0x108] sm:$0xff]
          %v841 = vld [vmem:[%s564 + $0x110] sm:$0xff]
          %v842 = vld [vmem:[%s564 + $0x118] sm:$0xff]
          %v843 = vld [vmem:[%s564 + $0x120] sm:$0xff]
          %v844 = vld [vmem:[%s564 + $0x128] sm:$0xff]
          %v845 = vld [vmem:[%s564 + $0x130] sm:$0xff]
          %v846 = vld [vmem:[%s564 + $0x138] sm:$0xff]
          %v847 = vld [vmem:[%s564 + $0x140] sm:$0xff]
          %v848 = vld [vmem:[%s564 + $0x148] sm:$0xff]
          %v849 = vld [vmem:[%s564 + $0x150] sm:$0xff]
          %v850 = vld [vmem:[%s564 + $0x158] sm:$0xff]
          %v851 = vld [vmem:[%s564 + $0x160] sm:$0xff]
          %v852 = vld [vmem:[%s564 + $0x168] sm:$0xff]
          %v853 = vld [vmem:[%s564 + $0x170] sm:$0xff]
          %v854 = vld [vmem:[%s564 + $0x178] sm:$0xff]
          %v855 = vld [vmem:[%s564 + $0x180] sm:$0xff]
          %v856 = vld [vmem:[%s564 + $0x188] sm:$0xff]
          %v857 = vld [vmem:[%s564 + $0x190] sm:$0xff]
          %v858 = vld [vmem:[%s564 + $0x198] sm:$0xff]
          %v859 = vld [vmem:[%s564 + $0x1a0] sm:$0xff]
          %v860 = vld [vmem:[%s564 + $0x1a8] sm:$0xff]
          %v861 = vld [vmem:[%s564 + $0x1b0] sm:$0xff]
          %v862 = vld [vmem:[%s564 + $0x1b8] sm:$0xff]
          %v863 = vld [vmem:[%s564 + $0x1c0] sm:$0xff]
          %v864 = vld [vmem:[%s564 + $0x1c8] sm:$0xff]
          %v865 = vld [vmem:[%s564 + $0x1d0] sm:$0xff]
          %v866 = vld [vmem:[%s564 + $0x1d8] sm:$0xff]
          %v867 = vld [vmem:[%s564 + $0x1e0] sm:$0xff]
          %v868 = vld [vmem:[%s564 + $0x1e8] sm:$0xff]
          %v869 = vld [vmem:[%s564 + $0x1f0] sm:$0xff]
          %v870 = vld [vmem:[%s564 + $0x1f8] sm:$0xff]
          %v871 = vlaneseq
          %v872 = vshrl.u32 %v871, 7
          %v873 = vadd.s32 %v872, 8
          %v874 = vadd.s32 %v872, 16
          %v875 = vadd.s32 %v872, 24
          %v876 = vadd.s32 %v872, 32
          %v877 = vadd.s32 %v872, 40
          %v878 = vadd.s32 %v872, 48
          %v879 = vadd.s32 %v872, 56
          %v880 = vadd.s32 %v872, 64
          %v881 = vadd.s32 %v872, 72
          %v882 = vadd.s32 %v872, 80
          %v883 = vadd.s32 %v872, 88
          %v884 = vadd.s32 %v872, 96
          %v885 = vadd.s32 %v872, 104
          %v886 = vadd.s32 %v872, 112
          %v887 = vadd.s32 %v872, 120
          %v888 = vlaneseq
          %v889 = vshrl.u32 %v888, 7
          %v890 = vsub.s32 0, %v889
          %v891 = vrot.slane %v806, %v890
          %v892 = vlaneseq
          %v893 = vshrl.u32 %v892, 7
          %v894 = vsub.s32 1, %v893
          %v895 = vrot.slane %v806, %v894
          %v896 = vlaneseq
          %v897 = vshrl.u32 %v896, 7
          %v898 = vsub.s32 2, %v897
          %v899 = vrot.slane %v806, %v898
          %v900 = vlaneseq
          %v901 = vshrl.u32 %v900, 7
          %v902 = vsub.s32 3, %v901
          %v903 = vrot.slane %v806, %v902
          %vm904 = vcmp.eq.s32.totalorder %v872, %v891
          %vm905 = vcmp.eq.s32.totalorder %v872, %v895
          %vm906 = vcmp.eq.s32.totalorder %v872, %v899
          %vm907 = vcmp.eq.s32.totalorder %v872, %v903
          %vm908 = vcmp.eq.s32.totalorder %v873, %v891
          %vm909 = vcmp.eq.s32.totalorder %v873, %v895
          %vm910 = vcmp.eq.s32.totalorder %v873, %v899
          %vm911 = vcmp.eq.s32.totalorder %v873, %v903
          %vm912 = vcmp.eq.s32.totalorder %v874, %v891
          %vm913 = vcmp.eq.s32.totalorder %v874, %v895
          %vm914 = vcmp.eq.s32.totalorder %v874, %v899
          %vm915 = vcmp.eq.s32.totalorder %v874, %v903
          %vm916 = vcmp.eq.s32.totalorder %v875, %v891
          %vm917 = vcmp.eq.s32.totalorder %v875, %v895
          %vm918 = vcmp.eq.s32.totalorder %v875, %v899
          %vm919 = vcmp.eq.s32.totalorder %v875, %v903
          %vm920 = vcmp.eq.s32.totalorder %v876, %v891
          %vm921 = vcmp.eq.s32.totalorder %v876, %v895
          %vm922 = vcmp.eq.s32.totalorder %v876, %v899
          %vm923 = vcmp.eq.s32.totalorder %v876, %v903
          %vm924 = vcmp.eq.s32.totalorder %v877, %v891
          %vm925 = vcmp.eq.s32.totalorder %v877, %v895
          %vm926 = vcmp.eq.s32.totalorder %v877, %v899
          %vm927 = vcmp.eq.s32.totalorder %v877, %v903
          %vm928 = vcmp.eq.s32.totalorder %v878, %v891
          %vm929 = vcmp.eq.s32.totalorder %v878, %v895
          %vm930 = vcmp.eq.s32.totalorder %v878, %v899
          %vm931 = vcmp.eq.s32.totalorder %v878, %v903
          %vm932 = vcmp.eq.s32.totalorder %v879, %v891
          %vm933 = vcmp.eq.s32.totalorder %v879, %v895
          %vm934 = vcmp.eq.s32.totalorder %v879, %v899
          %vm935 = vcmp.eq.s32.totalorder %v879, %v903
          %vm936 = vcmp.eq.s32.totalorder %v880, %v891
          %vm937 = vcmp.eq.s32.totalorder %v880, %v895
          %vm938 = vcmp.eq.s32.totalorder %v880, %v899
          %vm939 = vcmp.eq.s32.totalorder %v880, %v903
          %vm940 = vcmp.eq.s32.totalorder %v881, %v891
          %vm941 = vcmp.eq.s32.totalorder %v881, %v895
          %vm942 = vcmp.eq.s32.totalorder %v881, %v899
          %vm943 = vcmp.eq.s32.totalorder %v881, %v903
          %vm944 = vcmp.eq.s32.totalorder %v882, %v891
          %vm945 = vcmp.eq.s32.totalorder %v882, %v895
          %vm946 = vcmp.eq.s32.totalorder %v882, %v899
          %vm947 = vcmp.eq.s32.totalorder %v882, %v903
          %vm948 = vcmp.eq.s32.totalorder %v883, %v891
          %vm949 = vcmp.eq.s32.totalorder %v883, %v895
          %vm950 = vcmp.eq.s32.totalorder %v883, %v899
          %vm951 = vcmp.eq.s32.totalorder %v883, %v903
          %vm952 = vcmp.eq.s32.totalorder %v884, %v891
          %vm953 = vcmp.eq.s32.totalorder %v884, %v895
          %vm954 = vcmp.eq.s32.totalorder %v884, %v899
          %vm955 = vcmp.eq.s32.totalorder %v884, %v903
          %vm956 = vcmp.eq.s32.totalorder %v885, %v891
          %vm957 = vcmp.eq.s32.totalorder %v885, %v895
          %vm958 = vcmp.eq.s32.totalorder %v885, %v899
          %vm959 = vcmp.eq.s32.totalorder %v885, %v903
          %vm960 = vcmp.eq.s32.totalorder %v886, %v891
          %vm961 = vcmp.eq.s32.totalorder %v886, %v895
          %vm962 = vcmp.eq.s32.totalorder %v886, %v899
          %vm963 = vcmp.eq.s32.totalorder %v886, %v903
          %vm964 = vcmp.eq.s32.totalorder %v887, %v891
          %vm965 = vcmp.eq.s32.totalorder %v887, %v895
          %vm966 = vcmp.eq.s32.totalorder %v887, %v899
          %vm967 = vcmp.eq.s32.totalorder %v887, %v903
          %v968 = vsel %vm904, 1, 0
          %v969 = vsel %vm905, 1, 0
          %v970 = vsel %vm906, 1, 0
          %v971 = vsel %vm907, 1, 0
          %v972 = vsel %vm908, 1, 0
          %v973 = vsel %vm909, 1, 0
          %v974 = vsel %vm910, 1, 0
          %v975 = vsel %vm911, 1, 0
          %v976 = vsel %vm912, 1, 0
          %v977 = vsel %vm913, 1, 0
          %v978 = vsel %vm914, 1, 0
          %v979 = vsel %vm915, 1, 0
          %v980 = vsel %vm916, 1, 0
          %v981 = vsel %vm917, 1, 0
          %v982 = vsel %vm918, 1, 0
          %v983 = vsel %vm919, 1, 0
          %v984 = vsel %vm920, 1, 0
          %v985 = vsel %vm921, 1, 0
          %v986 = vsel %vm922, 1, 0
          %v987 = vsel %vm923, 1, 0
          %v988 = vsel %vm924, 1, 0
          %v989 = vsel %vm925, 1, 0
          %v990 = vsel %vm926, 1, 0
          %v991 = vsel %vm927, 1, 0
          %v992 = vsel %vm928, 1, 0
          %v993 = vsel %vm929, 1, 0
          %v994 = vsel %vm930, 1, 0
          %v995 = vsel %vm931, 1, 0
          %v996 = vsel %vm932, 1, 0
          %v997 = vsel %vm933, 1, 0
          %v998 = vsel %vm934, 1, 0
          %v999 = vsel %vm935, 1, 0
          %v1000 = vsel %vm936, 1, 0
          %v1001 = vsel %vm937, 1, 0
          %v1002 = vsel %vm938, 1, 0
          %v1003 = vsel %vm939, 1, 0
          %v1004 = vsel %vm940, 1, 0
          %v1005 = vsel %vm941, 1, 0
          %v1006 = vsel %vm942, 1, 0
          %v1007 = vsel %vm943, 1, 0
          %v1008 = vsel %vm944, 1, 0
          %v1009 = vsel %vm945, 1, 0
          %v1010 = vsel %vm946, 1, 0
          %v1011 = vsel %vm947, 1, 0
          %v1012 = vsel %vm948, 1, 0
          %v1013 = vsel %vm949, 1, 0
          %v1014 = vsel %vm950, 1, 0
          %v1015 = vsel %vm951, 1, 0
          %v1016 = vsel %vm952, 1, 0
          %v1017 = vsel %vm953, 1, 0
          %v1018 = vsel %vm954, 1, 0
          %v1019 = vsel %vm955, 1, 0
          %v1020 = vsel %vm956, 1, 0
          %v1021 = vsel %vm957, 1, 0
          %v1022 = vsel %vm958, 1, 0
          %v1023 = vsel %vm959, 1, 0
          %v1024 = vsel %vm960, 1, 0
          %v1025 = vsel %vm961, 1, 0
          %v1026 = vsel %vm962, 1, 0
          %v1027 = vsel %vm963, 1, 0
          %v1028 = vsel %vm964, 1, 0
          %v1029 = vsel %vm965, 1, 0
          %v1030 = vsel %vm966, 1, 0
          %v1031 = vsel %vm967, 1, 0
          %v1032 = vcvt.s32.f32 %v968
          %v1033 = vcvt.s32.f32 %v969
          %v1034 = vcvt.s32.f32 %v970
          %v1035 = vcvt.s32.f32 %v971
          %v1036 = vcvt.s32.f32 %v972
          %v1037 = vcvt.s32.f32 %v973
          %v1038 = vcvt.s32.f32 %v974
          %v1039 = vcvt.s32.f32 %v975
          %v1040 = vcvt.s32.f32 %v976
          %v1041 = vcvt.s32.f32 %v977
          %v1042 = vcvt.s32.f32 %v978
          %v1043 = vcvt.s32.f32 %v979
          %v1044 = vcvt.s32.f32 %v980
          %v1045 = vcvt.s32.f32 %v981
          %v1046 = vcvt.s32.f32 %v982
          %v1047 = vcvt.s32.f32 %v983
          %v1048 = vcvt.s32.f32 %v984
          %v1049 = vcvt.s32.f32 %v985
          %v1050 = vcvt.s32.f32 %v986
          %v1051 = vcvt.s32.f32 %v987
          %v1052 = vcvt.s32.f32 %v988
          %v1053 = vcvt.s32.f32 %v989
          %v1054 = vcvt.s32.f32 %v990
          %v1055 = vcvt.s32.f32 %v991
          %v1056 = vcvt.s32.f32 %v992
          %v1057 = vcvt.s32.f32 %v993
          %v1058 = vcvt.s32.f32 %v994
          %v1059 = vcvt.s32.f32 %v995
          %v1060 = vcvt.s32.f32 %v996
          %v1061 = vcvt.s32.f32 %v997
          %v1062 = vcvt.s32.f32 %v998
          %v1063 = vcvt.s32.f32 %v999
          %v1064 = vcvt.s32.f32 %v1000
          %v1065 = vcvt.s32.f32 %v1001
          %v1066 = vcvt.s32.f32 %v1002
          %v1067 = vcvt.s32.f32 %v1003
          %v1068 = vcvt.s32.f32 %v1004
          %v1069 = vcvt.s32.f32 %v1005
          %v1070 = vcvt.s32.f32 %v1006
          %v1071 = vcvt.s32.f32 %v1007
          %v1072 = vcvt.s32.f32 %v1008
          %v1073 = vcvt.s32.f32 %v1009
          %v1074 = vcvt.s32.f32 %v1010
          %v1075 = vcvt.s32.f32 %v1011
          %v1076 = vcvt.s32.f32 %v1012
          %v1077 = vcvt.s32.f32 %v1013
          %v1078 = vcvt.s32.f32 %v1014
          %v1079 = vcvt.s32.f32 %v1015
          %v1080 = vcvt.s32.f32 %v1016
          %v1081 = vcvt.s32.f32 %v1017
          %v1082 = vcvt.s32.f32 %v1018
          %v1083 = vcvt.s32.f32 %v1019
          %v1084 = vcvt.s32.f32 %v1020
          %v1085 = vcvt.s32.f32 %v1021
          %v1086 = vcvt.s32.f32 %v1022
          %v1087 = vcvt.s32.f32 %v1023
          %v1088 = vcvt.s32.f32 %v1024
          %v1089 = vcvt.s32.f32 %v1025
          %v1090 = vcvt.s32.f32 %v1026
          %v1091 = vcvt.s32.f32 %v1027
          %v1092 = vcvt.s32.f32 %v1028
          %v1093 = vcvt.s32.f32 %v1029
          %v1094 = vcvt.s32.f32 %v1030
          %v1095 = vcvt.s32.f32 %v1031
          %v1096 = vlaneseq
          %v1097 = vand.u32 %v1096, 127
          %1098 = vset.pattern.permute.xlu0 0
          %1099 = vperm.xlu0 %1098, %v807
          %v1100 = vpop.permute.xlu0 %1099
          %1101 = vset.pattern.permute.xlu0 0
          %1102 = vperm.xlu0 %1101, %v808
          %v1103 = vpop.permute.xlu0 %1102
          %1104 = vset.pattern.permute.xlu0 0
          %1105 = vperm.xlu0 %1104, %v809
          %v1106 = vpop.permute.xlu0 %1105
          %1107 = vset.pattern.permute.xlu0 0
          %1108 = vperm.xlu0 %1107, %v810
          %v1109 = vpop.permute.xlu0 %1108
          %1110 = vset.pattern.permute.xlu0 0
          %1111 = vperm.xlu0 %1110, %v811
          %v1112 = vpop.permute.xlu0 %1111
          %1113 = vset.pattern.permute.xlu0 0
          %1114 = vperm.xlu0 %1113, %v812
          %v1115 = vpop.permute.xlu0 %1114
          %1116 = vset.pattern.permute.xlu0 0
          %1117 = vperm.xlu0 %1116, %v813
          %v1118 = vpop.permute.xlu0 %1117
          %1119 = vset.pattern.permute.xlu0 0
          %1120 = vperm.xlu0 %1119, %v814
          %v1121 = vpop.permute.xlu0 %1120
          %1122 = vset.pattern.permute.xlu0 0
          %1123 = vperm.xlu0 %1122, %v815
          %v1124 = vpop.permute.xlu0 %1123
          %1125 = vset.pattern.permute.xlu0 0
          %1126 = vperm.xlu0 %1125, %v816
          %v1127 = vpop.permute.xlu0 %1126
          %1128 = vset.pattern.permute.xlu0 0
          %1129 = vperm.xlu0 %1128, %v817
          %v1130 = vpop.permute.xlu0 %1129
          %1131 = vset.pattern.permute.xlu0 0
          %1132 = vperm.xlu0 %1131, %v818
          %v1133 = vpop.permute.xlu0 %1132
          %1134 = vset.pattern.permute.xlu0 0
          %1135 = vperm.xlu0 %1134, %v819
          %v1136 = vpop.permute.xlu0 %1135
          %1137 = vset.pattern.permute.xlu0 0
          %1138 = vperm.xlu0 %1137, %v820
          %v1139 = vpop.permute.xlu0 %1138
          %1140 = vset.pattern.permute.xlu0 0
          %1141 = vperm.xlu0 %1140, %v821
          %v1142 = vpop.permute.xlu0 %1141
          %1143 = vset.pattern.permute.xlu0 0
          %1144 = vperm.xlu0 %1143, %v822
          %v1145 = vpop.permute.xlu0 %1144
          %1146 = vset.pattern.permute.xlu0 0
          %1147 = vperm.xlu0 %1146, %v823
          %v1148 = vpop.permute.xlu0 %1147
          %1149 = vset.pattern.permute.xlu0 0
          %1150 = vperm.xlu0 %1149, %v824
          %v1151 = vpop.permute.xlu0 %1150
          %1152 = vset.pattern.permute.xlu0 0
          %1153 = vperm.xlu0 %1152, %v825
          %v1154 = vpop.permute.xlu0 %1153
          %1155 = vset.pattern.permute.xlu0 0
          %1156 = vperm.xlu0 %1155, %v826
          %v1157 = vpop.permute.xlu0 %1156
          %1158 = vset.pattern.permute.xlu0 0
          %1159 = vperm.xlu0 %1158, %v827
          %v1160 = vpop.permute.xlu0 %1159
          %1161 = vset.pattern.permute.xlu0 0
          %1162 = vperm.xlu0 %1161, %v828
          %v1163 = vpop.permute.xlu0 %1162
          %1164 = vset.pattern.permute.xlu0 0
          %1165 = vperm.xlu0 %1164, %v829
          %v1166 = vpop.permute.xlu0 %1165
          %1167 = vset.pattern.permute.xlu0 0
          %1168 = vperm.xlu0 %1167, %v830
          %v1169 = vpop.permute.xlu0 %1168
          %1170 = vset.pattern.permute.xlu0 0
          %1171 = vperm.xlu0 %1170, %v831
          %v1172 = vpop.permute.xlu0 %1171
          %1173 = vset.pattern.permute.xlu0 0
          %1174 = vperm.xlu0 %1173, %v832
          %v1175 = vpop.permute.xlu0 %1174
          %1176 = vset.pattern.permute.xlu0 0
          %1177 = vperm.xlu0 %1176, %v833
          %v1178 = vpop.permute.xlu0 %1177
          %1179 = vset.pattern.permute.xlu0 0
          %1180 = vperm.xlu0 %1179, %v834
          %v1181 = vpop.permute.xlu0 %1180
          %1182 = vset.pattern.permute.xlu0 0
          %1183 = vperm.xlu0 %1182, %v835
          %v1184 = vpop.permute.xlu0 %1183
          %1185 = vset.pattern.permute.xlu0 0
          %1186 = vperm.xlu0 %1185, %v836
          %v1187 = vpop.permute.xlu0 %1186
          %1188 = vset.pattern.permute.xlu0 0
          %1189 = vperm.xlu0 %1188, %v837
          %v1190 = vpop.permute.xlu0 %1189
          %1191 = vset.pattern.permute.xlu0 0
          %1192 = vperm.xlu0 %1191, %v838
          %v1193 = vpop.permute.xlu0 %1192
          %1194 = vset.pattern.permute.xlu0 0
          %1195 = vperm.xlu0 %1194, %v839
          %v1196 = vpop.permute.xlu0 %1195
          %1197 = vset.pattern.permute.xlu0 0
          %1198 = vperm.xlu0 %1197, %v840
          %v1199 = vpop.permute.xlu0 %1198
          %1200 = vset.pattern.permute.xlu0 0
          %1201 = vperm.xlu0 %1200, %v841
          %v1202 = vpop.permute.xlu0 %1201
          %1203 = vset.pattern.permute.xlu0 0
          %1204 = vperm.xlu0 %1203, %v842
          %v1205 = vpop.permute.xlu0 %1204
          %1206 = vset.pattern.permute.xlu0 0
          %1207 = vperm.xlu0 %1206, %v843
          %v1208 = vpop.permute.xlu0 %1207
          %1209 = vset.pattern.permute.xlu0 0
          %1210 = vperm.xlu0 %1209, %v844
          %v1211 = vpop.permute.xlu0 %1210
          %1212 = vset.pattern.permute.xlu0 0
          %1213 = vperm.xlu0 %1212, %v845
          %v1214 = vpop.permute.xlu0 %1213
          %1215 = vset.pattern.permute.xlu0 0
          %1216 = vperm.xlu0 %1215, %v846
          %v1217 = vpop.permute.xlu0 %1216
          %1218 = vset.pattern.permute.xlu0 0
          %1219 = vperm.xlu0 %1218, %v847
          %v1220 = vpop.permute.xlu0 %1219
          %1221 = vset.pattern.permute.xlu0 0
          %1222 = vperm.xlu0 %1221, %v848
          %v1223 = vpop.permute.xlu0 %1222
          %1224 = vset.pattern.permute.xlu0 0
          %1225 = vperm.xlu0 %1224, %v849
          %v1226 = vpop.permute.xlu0 %1225
          %1227 = vset.pattern.permute.xlu0 0
          %1228 = vperm.xlu0 %1227, %v850
          %v1229 = vpop.permute.xlu0 %1228
          %1230 = vset.pattern.permute.xlu0 0
          %1231 = vperm.xlu0 %1230, %v851
          %v1232 = vpop.permute.xlu0 %1231
          %1233 = vset.pattern.permute.xlu0 0
          %1234 = vperm.xlu0 %1233, %v852
          %v1235 = vpop.permute.xlu0 %1234
          %1236 = vset.pattern.permute.xlu0 0
          %1237 = vperm.xlu0 %1236, %v853
          %v1238 = vpop.permute.xlu0 %1237
          %1239 = vset.pattern.permute.xlu0 0
          %1240 = vperm.xlu0 %1239, %v854
          %v1241 = vpop.permute.xlu0 %1240
          %1242 = vset.pattern.permute.xlu0 0
          %1243 = vperm.xlu0 %1242, %v855
          %v1244 = vpop.permute.xlu0 %1243
          %1245 = vset.pattern.permute.xlu0 0
          %1246 = vperm.xlu0 %1245, %v856
          %v1247 = vpop.permute.xlu0 %1246
          %1248 = vset.pattern.permute.xlu0 0
          %1249 = vperm.xlu0 %1248, %v857
          %v1250 = vpop.permute.xlu0 %1249
          %1251 = vset.pattern.permute.xlu0 0
          %1252 = vperm.xlu0 %1251, %v858
          %v1253 = vpop.permute.xlu0 %1252
          %1254 = vset.pattern.permute.xlu0 0
          %1255 = vperm.xlu0 %1254, %v859
          %v1256 = vpop.permute.xlu0 %1255
          %1257 = vset.pattern.permute.xlu0 0
          %1258 = vperm.xlu0 %1257, %v860
          %v1259 = vpop.permute.xlu0 %1258
          %1260 = vset.pattern.permute.xlu0 0
          %1261 = vperm.xlu0 %1260, %v861
          %v1262 = vpop.permute.xlu0 %1261
          %1263 = vset.pattern.permute.xlu0 0
          %1264 = vperm.xlu0 %1263, %v862
          %v1265 = vpop.permute.xlu0 %1264
          %1266 = vset.pattern.permute.xlu0 0
          %1267 = vperm.xlu0 %1266, %v863
          %v1268 = vpop.permute.xlu0 %1267
          %1269 = vset.pattern.permute.xlu0 0
          %1270 = vperm.xlu0 %1269, %v864
          %v1271 = vpop.permute.xlu0 %1270
          %1272 = vset.pattern.permute.xlu0 0
          %1273 = vperm.xlu0 %1272, %v865
          %v1274 = vpop.permute.xlu0 %1273
          %1275 = vset.pattern.permute.xlu0 0
          %1276 = vperm.xlu0 %1275, %v866
          %v1277 = vpop.permute.xlu0 %1276
          %1278 = vset.pattern.permute.xlu0 0
          %1279 = vperm.xlu0 %1278, %v867
          %v1280 = vpop.permute.xlu0 %1279
          %1281 = vset.pattern.permute.xlu0 0
          %1282 = vperm.xlu0 %1281, %v868
          %v1283 = vpop.permute.xlu0 %1282
          %1284 = vset.pattern.permute.xlu0 0
          %1285 = vperm.xlu0 %1284, %v869
          %v1286 = vpop.permute.xlu0 %1285
          %1287 = vset.pattern.permute.xlu0 0
          %1288 = vperm.xlu0 %1287, %v870
          %v1289 = vpop.permute.xlu0 %1288
          %vm1290 = vcmp.eq.s32.totalorder %v1097, %v1100
          %vm1291 = vcmp.eq.s32.totalorder %v1097, %v1103
          %vm1292 = vcmp.eq.s32.totalorder %v1097, %v1106
          %vm1293 = vcmp.eq.s32.totalorder %v1097, %v1109
          %vm1294 = vcmp.eq.s32.totalorder %v1097, %v1112
          %vm1295 = vcmp.eq.s32.totalorder %v1097, %v1115
          %vm1296 = vcmp.eq.s32.totalorder %v1097, %v1118
          %vm1297 = vcmp.eq.s32.totalorder %v1097, %v1121
          %vm1298 = vcmp.eq.s32.totalorder %v1097, %v1124
          %vm1299 = vcmp.eq.s32.totalorder %v1097, %v1127
          %vm1300 = vcmp.eq.s32.totalorder %v1097, %v1130
          %vm1301 = vcmp.eq.s32.totalorder %v1097, %v1133
          %vm1302 = vcmp.eq.s32.totalorder %v1097, %v1136
          %vm1303 = vcmp.eq.s32.totalorder %v1097, %v1139
          %vm1304 = vcmp.eq.s32.totalorder %v1097, %v1142
          %vm1305 = vcmp.eq.s32.totalorder %v1097, %v1145
          %vm1306 = vcmp.eq.s32.totalorder %v1097, %v1148
          %vm1307 = vcmp.eq.s32.totalorder %v1097, %v1151
          %vm1308 = vcmp.eq.s32.totalorder %v1097, %v1154
          %vm1309 = vcmp.eq.s32.totalorder %v1097, %v1157
          %vm1310 = vcmp.eq.s32.totalorder %v1097, %v1160
          %vm1311 = vcmp.eq.s32.totalorder %v1097, %v1163
          %vm1312 = vcmp.eq.s32.totalorder %v1097, %v1166
          %vm1313 = vcmp.eq.s32.totalorder %v1097, %v1169
          %vm1314 = vcmp.eq.s32.totalorder %v1097, %v1172
          %vm1315 = vcmp.eq.s32.totalorder %v1097, %v1175
          %vm1316 = vcmp.eq.s32.totalorder %v1097, %v1178
          %vm1317 = vcmp.eq.s32.totalorder %v1097, %v1181
          %vm1318 = vcmp.eq.s32.totalorder %v1097, %v1184
          %vm1319 = vcmp.eq.s32.totalorder %v1097, %v1187
          %vm1320 = vcmp.eq.s32.totalorder %v1097, %v1190
          %vm1321 = vcmp.eq.s32.totalorder %v1097, %v1193
          %vm1322 = vcmp.eq.s32.totalorder %v1097, %v1196
          %vm1323 = vcmp.eq.s32.totalorder %v1097, %v1199
          %vm1324 = vcmp.eq.s32.totalorder %v1097, %v1202
          %vm1325 = vcmp.eq.s32.totalorder %v1097, %v1205
          %vm1326 = vcmp.eq.s32.totalorder %v1097, %v1208
          %vm1327 = vcmp.eq.s32.totalorder %v1097, %v1211
          %vm1328 = vcmp.eq.s32.totalorder %v1097, %v1214
          %vm1329 = vcmp.eq.s32.totalorder %v1097, %v1217
          %vm1330 = vcmp.eq.s32.totalorder %v1097, %v1220
          %vm1331 = vcmp.eq.s32.totalorder %v1097, %v1223
          %vm1332 = vcmp.eq.s32.totalorder %v1097, %v1226
          %vm1333 = vcmp.eq.s32.totalorder %v1097, %v1229
          %vm1334 = vcmp.eq.s32.totalorder %v1097, %v1232
          %vm1335 = vcmp.eq.s32.totalorder %v1097, %v1235
          %vm1336 = vcmp.eq.s32.totalorder %v1097, %v1238
          %vm1337 = vcmp.eq.s32.totalorder %v1097, %v1241
          %vm1338 = vcmp.eq.s32.totalorder %v1097, %v1244
          %vm1339 = vcmp.eq.s32.totalorder %v1097, %v1247
          %vm1340 = vcmp.eq.s32.totalorder %v1097, %v1250
          %vm1341 = vcmp.eq.s32.totalorder %v1097, %v1253
          %vm1342 = vcmp.eq.s32.totalorder %v1097, %v1256
          %vm1343 = vcmp.eq.s32.totalorder %v1097, %v1259
          %vm1344 = vcmp.eq.s32.totalorder %v1097, %v1262
          %vm1345 = vcmp.eq.s32.totalorder %v1097, %v1265
          %vm1346 = vcmp.eq.s32.totalorder %v1097, %v1268
          %vm1347 = vcmp.eq.s32.totalorder %v1097, %v1271
          %vm1348 = vcmp.eq.s32.totalorder %v1097, %v1274
          %vm1349 = vcmp.eq.s32.totalorder %v1097, %v1277
          %vm1350 = vcmp.eq.s32.totalorder %v1097, %v1280
          %vm1351 = vcmp.eq.s32.totalorder %v1097, %v1283
          %vm1352 = vcmp.eq.s32.totalorder %v1097, %v1286
          %vm1353 = vcmp.eq.s32.totalorder %v1097, %v1289
          %v1354 = vsel %vm1290, 1, 0
          %v1355 = vsel %vm1291, 1, 0
          %v1356 = vsel %vm1292, 1, 0
          %v1357 = vsel %vm1293, 1, 0
          %v1358 = vsel %vm1294, 1, 0
          %v1359 = vsel %vm1295, 1, 0
          %v1360 = vsel %vm1296, 1, 0
          %v1361 = vsel %vm1297, 1, 0
          %v1362 = vsel %vm1298, 1, 0
          %v1363 = vsel %vm1299, 1, 0
          %v1364 = vsel %vm1300, 1, 0
          %v1365 = vsel %vm1301, 1, 0
          %v1366 = vsel %vm1302, 1, 0
          %v1367 = vsel %vm1303, 1, 0
          %v1368 = vsel %vm1304, 1, 0
          %v1369 = vsel %vm1305, 1, 0
          %v1370 = vsel %vm1306, 1, 0
          %v1371 = vsel %vm1307, 1, 0
          %v1372 = vsel %vm1308, 1, 0
          %v1373 = vsel %vm1309, 1, 0
          %v1374 = vsel %vm1310, 1, 0
          %v1375 = vsel %vm1311, 1, 0
          %v1376 = vsel %vm1312, 1, 0
          %v1377 = vsel %vm1313, 1, 0
          %v1378 = vsel %vm1314, 1, 0
          %v1379 = vsel %vm1315, 1, 0
          %v1380 = vsel %vm1316, 1, 0
          %v1381 = vsel %vm1317, 1, 0
          %v1382 = vsel %vm1318, 1, 0
          %v1383 = vsel %vm1319, 1, 0
          %v1384 = vsel %vm1320, 1, 0
          %v1385 = vsel %vm1321, 1, 0
          %v1386 = vsel %vm1322, 1, 0
          %v1387 = vsel %vm1323, 1, 0
          %v1388 = vsel %vm1324, 1, 0
          %v1389 = vsel %vm1325, 1, 0
          %v1390 = vsel %vm1326, 1, 0
          %v1391 = vsel %vm1327, 1, 0
          %v1392 = vsel %vm1328, 1, 0
          %v1393 = vsel %vm1329, 1, 0
          %v1394 = vsel %vm1330, 1, 0
          %v1395 = vsel %vm1331, 1, 0
          %v1396 = vsel %vm1332, 1, 0
          %v1397 = vsel %vm1333, 1, 0
          %v1398 = vsel %vm1334, 1, 0
          %v1399 = vsel %vm1335, 1, 0
          %v1400 = vsel %vm1336, 1, 0
          %v1401 = vsel %vm1337, 1, 0
          %v1402 = vsel %vm1338, 1, 0
          %v1403 = vsel %vm1339, 1, 0
          %v1404 = vsel %vm1340, 1, 0
          %v1405 = vsel %vm1341, 1, 0
          %v1406 = vsel %vm1342, 1, 0
          %v1407 = vsel %vm1343, 1, 0
          %v1408 = vsel %vm1344, 1, 0
          %v1409 = vsel %vm1345, 1, 0
          %v1410 = vsel %vm1346, 1, 0
          %v1411 = vsel %vm1347, 1, 0
          %v1412 = vsel %vm1348, 1, 0
          %v1413 = vsel %vm1349, 1, 0
          %v1414 = vsel %vm1350, 1, 0
          %v1415 = vsel %vm1351, 1, 0
          %v1416 = vsel %vm1352, 1, 0
          %v1417 = vsel %vm1353, 1, 0
          %v1418 = vcvt.s32.f32 %v1354
          %v1419 = vcvt.s32.f32 %v1355
          %v1420 = vcvt.s32.f32 %v1356
          %v1421 = vcvt.s32.f32 %v1357
          %v1422 = vcvt.s32.f32 %v1358
          %v1423 = vcvt.s32.f32 %v1359
          %v1424 = vcvt.s32.f32 %v1360
          %v1425 = vcvt.s32.f32 %v1361
          %v1426 = vcvt.s32.f32 %v1362
          %v1427 = vcvt.s32.f32 %v1363
          %v1428 = vcvt.s32.f32 %v1364
          %v1429 = vcvt.s32.f32 %v1365
          %v1430 = vcvt.s32.f32 %v1366
          %v1431 = vcvt.s32.f32 %v1367
          %v1432 = vcvt.s32.f32 %v1368
          %v1433 = vcvt.s32.f32 %v1369
          %v1434 = vcvt.s32.f32 %v1370
          %v1435 = vcvt.s32.f32 %v1371
          %v1436 = vcvt.s32.f32 %v1372
          %v1437 = vcvt.s32.f32 %v1373
          %v1438 = vcvt.s32.f32 %v1374
          %v1439 = vcvt.s32.f32 %v1375
          %v1440 = vcvt.s32.f32 %v1376
          %v1441 = vcvt.s32.f32 %v1377
          %v1442 = vcvt.s32.f32 %v1378
          %v1443 = vcvt.s32.f32 %v1379
          %v1444 = vcvt.s32.f32 %v1380
          %v1445 = vcvt.s32.f32 %v1381
          %v1446 = vcvt.s32.f32 %v1382
          %v1447 = vcvt.s32.f32 %v1383
          %v1448 = vcvt.s32.f32 %v1384
          %v1449 = vcvt.s32.f32 %v1385
          %v1450 = vcvt.s32.f32 %v1386
          %v1451 = vcvt.s32.f32 %v1387
          %v1452 = vcvt.s32.f32 %v1388
          %v1453 = vcvt.s32.f32 %v1389
          %v1454 = vcvt.s32.f32 %v1390
          %v1455 = vcvt.s32.f32 %v1391
          %v1456 = vcvt.s32.f32 %v1392
          %v1457 = vcvt.s32.f32 %v1393
          %v1458 = vcvt.s32.f32 %v1394
          %v1459 = vcvt.s32.f32 %v1395
          %v1460 = vcvt.s32.f32 %v1396
          %v1461 = vcvt.s32.f32 %v1397
          %v1462 = vcvt.s32.f32 %v1398
          %v1463 = vcvt.s32.f32 %v1399
          %v1464 = vcvt.s32.f32 %v1400
          %v1465 = vcvt.s32.f32 %v1401
          %v1466 = vcvt.s32.f32 %v1402
          %v1467 = vcvt.s32.f32 %v1403
          %v1468 = vcvt.s32.f32 %v1404
          %v1469 = vcvt.s32.f32 %v1405
          %v1470 = vcvt.s32.f32 %v1406
          %v1471 = vcvt.s32.f32 %v1407
          %v1472 = vcvt.s32.f32 %v1408
          %v1473 = vcvt.s32.f32 %v1409
          %v1474 = vcvt.s32.f32 %v1410
          %v1475 = vcvt.s32.f32 %v1411
          %v1476 = vcvt.s32.f32 %v1412
          %v1477 = vcvt.s32.f32 %v1413
          %v1478 = vcvt.s32.f32 %v1414
          %v1479 = vcvt.s32.f32 %v1415
          %v1480 = vcvt.s32.f32 %v1416
          %v1481 = vcvt.s32.f32 %v1417
          %v1482 = vld [vmem:[#allocation3] sm:$0xff]
          %v1483 = vld [vmem:[#allocation3 + $0x8] sm:$0xff]
          %v1484 = vld [vmem:[#allocation3 + $0x10] sm:$0xff]
          %v1485 = vld [vmem:[#allocation3 + $0x18] sm:$0xff]
          %v1486 = vld [vmem:[#allocation3 + $0x20] sm:$0xff]
          %v1487 = vld [vmem:[#allocation3 + $0x28] sm:$0xff]
          %v1488 = vld [vmem:[#allocation3 + $0x30] sm:$0xff]
          %v1489 = vld [vmem:[#allocation3 + $0x38] sm:$0xff]
          %v1490 = vld [vmem:[#allocation3 + $0x40] sm:$0xff]
          %v1491 = vld [vmem:[#allocation3 + $0x48] sm:$0xff]
          %v1492 = vld [vmem:[#allocation3 + $0x50] sm:$0xff]
          %v1493 = vld [vmem:[#allocation3 + $0x58] sm:$0xff]
          %v1494 = vld [vmem:[#allocation3 + $0x60] sm:$0xff]
          %v1495 = vld [vmem:[#allocation3 + $0x68] sm:$0xff]
          %v1496 = vld [vmem:[#allocation3 + $0x70] sm:$0xff]
          %v1497 = vld [vmem:[#allocation3 + $0x78] sm:$0xff]
          %v1498 = vld [vmem:[%s499] sm:$0xff]
          %v1499 = vld [vmem:[%s499 + $0x8] sm:$0xff]
          %v1500 = vld [vmem:[%s499 + $0x10] sm:$0xff]
          %v1501 = vld [vmem:[%s499 + $0x18] sm:$0xff]
          %v1502 = vld [vmem:[%s499 + $0x20] sm:$0xff]
          %v1503 = vld [vmem:[%s499 + $0x28] sm:$0xff]
          %v1504 = vld [vmem:[%s499 + $0x30] sm:$0xff]
          %v1505 = vld [vmem:[%s499 + $0x38] sm:$0xff]
          %v1506 = vld [vmem:[%s499 + $0x40] sm:$0xff]
          %v1507 = vld [vmem:[%s499 + $0x48] sm:$0xff]
          %v1508 = vld [vmem:[%s499 + $0x50] sm:$0xff]
          %v1509 = vld [vmem:[%s499 + $0x58] sm:$0xff]
          %v1510 = vld [vmem:[%s499 + $0x60] sm:$0xff]
          %v1511 = vld [vmem:[%s499 + $0x68] sm:$0xff]
          %v1512 = vld [vmem:[%s499 + $0x70] sm:$0xff]
          %v1513 = vld [vmem:[%s499 + $0x78] sm:$0xff]
          %v1514 = vld [vmem:[%s499 + $0x80] sm:$0xff]
          %v1515 = vld [vmem:[%s499 + $0x88] sm:$0xff]
          %v1516 = vld [vmem:[%s499 + $0x90] sm:$0xff]
          %v1517 = vld [vmem:[%s499 + $0x98] sm:$0xff]
          %v1518 = vld [vmem:[%s499 + $0xa0] sm:$0xff]
          %v1519 = vld [vmem:[%s499 + $0xa8] sm:$0xff]
          %v1520 = vld [vmem:[%s499 + $0xb0] sm:$0xff]
          %v1521 = vld [vmem:[%s499 + $0xb8] sm:$0xff]
          %v1522 = vld [vmem:[%s499 + $0xc0] sm:$0xff]
          %v1523 = vld [vmem:[%s499 + $0xc8] sm:$0xff]
          %v1524 = vld [vmem:[%s499 + $0xd0] sm:$0xff]
          %v1525 = vld [vmem:[%s499 + $0xd8] sm:$0xff]
          %v1526 = vld [vmem:[%s499 + $0xe0] sm:$0xff]
          %v1527 = vld [vmem:[%s499 + $0xe8] sm:$0xff]
          %v1528 = vld [vmem:[%s499 + $0xf0] sm:$0xff]
          %v1529 = vld [vmem:[%s499 + $0xf8] sm:$0xff]
          %v1530 = vld [vmem:[%s499 + $0x100] sm:$0xff]
          %v1531 = vld [vmem:[%s499 + $0x108] sm:$0xff]
          %v1532 = vld [vmem:[%s499 + $0x110] sm:$0xff]
          %v1533 = vld [vmem:[%s499 + $0x118] sm:$0xff]
          %v1534 = vld [vmem:[%s499 + $0x120] sm:$0xff]
          %v1535 = vld [vmem:[%s499 + $0x128] sm:$0xff]
          %v1536 = vld [vmem:[%s499 + $0x130] sm:$0xff]
          %v1537 = vld [vmem:[%s499 + $0x138] sm:$0xff]
          %v1538 = vld [vmem:[%s499 + $0x140] sm:$0xff]
          %v1539 = vld [vmem:[%s499 + $0x148] sm:$0xff]
          %v1540 = vld [vmem:[%s499 + $0x150] sm:$0xff]
          %v1541 = vld [vmem:[%s499 + $0x158] sm:$0xff]
          %v1542 = vld [vmem:[%s499 + $0x160] sm:$0xff]
          %v1543 = vld [vmem:[%s499 + $0x168] sm:$0xff]
          %v1544 = vld [vmem:[%s499 + $0x170] sm:$0xff]
          %v1545 = vld [vmem:[%s499 + $0x178] sm:$0xff]
          %v1546 = vld [vmem:[%s499 + $0x180] sm:$0xff]
          %v1547 = vld [vmem:[%s499 + $0x188] sm:$0xff]
          %v1548 = vld [vmem:[%s499 + $0x190] sm:$0xff]
          %v1549 = vld [vmem:[%s499 + $0x198] sm:$0xff]
          %v1550 = vld [vmem:[%s499 + $0x1a0] sm:$0xff]
          %v1551 = vld [vmem:[%s499 + $0x1a8] sm:$0xff]
          %v1552 = vld [vmem:[%s499 + $0x1b0] sm:$0xff]
          %v1553 = vld [vmem:[%s499 + $0x1b8] sm:$0xff]
          %v1554 = vld [vmem:[%s499 + $0x1c0] sm:$0xff]
          %v1555 = vld [vmem:[%s499 + $0x1c8] sm:$0xff]
          %v1556 = vld [vmem:[%s499 + $0x1d0] sm:$0xff]
          %v1557 = vld [vmem:[%s499 + $0x1d8] sm:$0xff]
          %v1558 = vld [vmem:[%s499 + $0x1e0] sm:$0xff]
          %v1559 = vld [vmem:[%s499 + $0x1e8] sm:$0xff]
          %v1560 = vld [vmem:[%s499 + $0x1f0] sm:$0xff]
          %v1561 = vld [vmem:[%s499 + $0x1f8] sm:$0xff]
          %v1562 = vld [vmem:[%s6 + $0x80] sm:$0xff]
          %v1563 = vld [vmem:[%s6 + $0x88] sm:$0xff]
          %v1564 = vld [vmem:[%s6 + $0x90] sm:$0xff]
          %v1565 = vld [vmem:[%s6 + $0x98] sm:$0xff]
          %v1566 = vld [vmem:[%s6 + $0xa0] sm:$0xff]
          %v1567 = vld [vmem:[%s6 + $0xa8] sm:$0xff]
          %v1568 = vld [vmem:[%s6 + $0xb0] sm:$0xff]
          %v1569 = vld [vmem:[%s6 + $0xb8] sm:$0xff]
          %v1570 = vld [vmem:[%s6 + $0xc0] sm:$0xff]
          %v1571 = vld [vmem:[%s6 + $0xc8] sm:$0xff]
          %v1572 = vld [vmem:[%s6 + $0xd0] sm:$0xff]
          %v1573 = vld [vmem:[%s6 + $0xd8] sm:$0xff]
          %v1574 = vld [vmem:[%s6 + $0xe0] sm:$0xff]
          %v1575 = vld [vmem:[%s6 + $0xe8] sm:$0xff]
          %v1576 = vld [vmem:[%s6 + $0xf0] sm:$0xff]
          %v1577 = vld [vmem:[%s6 + $0xf8] sm:$0xff]
          %1578 = vmatprep.subr.mxu0 0.0
          %1579 = vmatpush1.msra.mxu0 %v1562
          %1580 = vmatprep.subr.mxu0 0.0
          %1581 = vmatpush1.msra.mxu0 %v1563
          %1582 = vmatprep.subr.mxu0 0.0
          %1583 = vmatpush1.msra.mxu0 %v1564
          %1584 = vmatprep.subr.mxu0 0.0
          %1585 = vmatpush1.msra.mxu0 %v1565
          %1586 = vmatprep.subr.mxu0 0.0
          %1587 = vmatpush1.msra.mxu0 %v1566
          %1588 = vmatprep.subr.mxu0 0.0
          %1589 = vmatpush1.msra.mxu0 %v1567
          %1590 = vmatprep.subr.mxu0 0.0
          %1591 = vmatpush1.msra.mxu0 %v1568
          %1592 = vmatprep.subr.mxu0 0.0
          %1593 = vmatpush1.msra.mxu0 %v1569
          %1594 = vmatprep.subr.mxu0 0.0
          %1595 = vmatpush1.msra.mxu0 %v1570
          %1596 = vmatprep.subr.mxu0 0.0
          %1597 = vmatpush1.msra.mxu0 %v1571
          %1598 = vmatprep.subr.mxu0 0.0
          %1599 = vmatpush1.msra.mxu0 %v1572
          %1600 = vmatprep.subr.mxu0 0.0
          %1601 = vmatpush1.msra.mxu0 %v1573
          %1602 = vmatprep.subr.mxu0 0.0
          %1603 = vmatpush1.msra.mxu0 %v1574
          %1604 = vmatprep.subr.mxu0 0.0
          %1605 = vmatpush1.msra.mxu0 %v1575
          %1606 = vmatprep.subr.mxu0 0.0
          %1607 = vmatpush1.msra.mxu0 %v1576
          %1608 = vmatprep.subr.mxu0 0.0
          %1609 = vmatpush1.msra.mxu0 %v1577
          %1610 = vmatprep.subr.mxu0 0.0
          %1611 = vmatpush1.msra.mxu0 0.0
          %1612 = vmatprep.subr.mxu0 0.0
          %1613 = vmatpush1.msra.mxu0 0.0
          %1614 = vmatprep.subr.mxu0 0.0
          %1615 = vmatpush1.msra.mxu0 0.0
          %1616 = vmatprep.subr.mxu0 0.0
          %1617 = vmatpush1.msra.mxu0 0.0
          %1618 = vmatprep.subr.mxu0 0.0
          %1619 = vmatpush1.msra.mxu0 0.0
          %1620 = vmatprep.subr.mxu0 0.0
          %1621 = vmatpush1.msra.mxu0 0.0
          %1622 = vmatprep.subr.mxu0 0.0
          %1623 = vmatpush1.msra.mxu0 0.0
          %1624 = vmatprep.subr.mxu0 0.0
          %1625 = vmatpush1.msra.mxu0 0.0
          %1626 = vmatprep.subr.mxu0 0.0
          %1627 = vmatpush1.msra.mxu0 0.0
          %1628 = vmatprep.subr.mxu0 0.0
          %1629 = vmatpush1.msra.mxu0 0.0
          %1630 = vmatprep.subr.mxu0 0.0
          %1631 = vmatpush1.msra.mxu0 0.0
          %1632 = vmatprep.subr.mxu0 0.0
          %1633 = vmatpush1.msra.mxu0 0.0
          %1634 = vmatprep.subr.mxu0 0.0
          %1635 = vmatpush1.msra.mxu0 0.0
          %1636 = vmatprep.subr.mxu0 0.0
          %1637 = vmatpush1.msra.mxu0 0.0
          %1638 = vmatprep.subr.mxu0 0.0
          %1639 = vmatpush1.msra.mxu0 0.0
          %1640 = vmatprep.subr.mxu0 0.0
          %1641 = vmatpush1.msra.mxu0 0.0
          %1642 = vmatprep.mubr.f32.mxu0 0.0
          %1643 = vmatmul.mubr.f32.gmra.mrb[0].mxu0 %v1498
          %v1644 = vpop.f32.mrb[0].mxu0
          %v1645 = vadd.f32 0.0, %v1644
          %v1646 = vpop.f32.mrb[0].mxu0
          %1647 = vmatprep.mubr.f32.mxu0 0.0
          %1648 = vmatmul.mubr.f32.gmra.mrb[0].mxu0 %v1499
          %v1649 = vpop.f32.mrb[0].mxu0
          %v1650 = vadd.f32 0.0, %v1649
          %v1651 = vpop.f32.mrb[0].mxu0
          %1652 = vmatprep.mubr.f32.mxu0 0.0
          %1653 = vmatmul.mubr.f32.gmra.mrb[0].mxu0 %v1500
          %v1654 = vpop.f32.mrb[0].mxu0
          %v1655 = vadd.f32 0.0, %v1654
          %v1656 = vpop.f32.mrb[0].mxu0
          %1657 = vmatprep.mubr.f32.mxu0 0.0
          %1658 = vmatmul.mubr.f32.gmra.mrb[0].mxu0 %v1501
          %v1659 = vpop.f32.mrb[0].mxu0
          %v1660 = vadd.f32 0.0, %v1659
          %v1661 = vpop.f32.mrb[0].mxu0
          %1662 = vmatprep.mubr.f32.mxu0 0.0
          %1663 = vmatmul.mubr.f32.gmra.mrb[0].mxu0 %v1502
          %v1664 = vpop.f32.mrb[0].mxu0
          %v1665 = vadd.f32 0.0, %v1664
          %v1666 = vpop.f32.mrb[0].mxu0
          %1667 = vmatprep.mubr.f32.mxu0 0.0
          %1668 = vmatmul.mubr.f32.gmra.mrb[0].mxu0 %v1503
          %v1669 = vpop.f32.mrb[0].mxu0
          %v1670 = vadd.f32 0.0, %v1669
          %v1671 = vpop.f32.mrb[0].mxu0
          %1672 = vmatprep.mubr.f32.mxu0 0.0
          %1673 = vmatmul.mubr.f32.gmra.mrb[0].mxu0 %v1504
          %v1674 = vpop.f32.mrb[0].mxu0
          %v1675 = vadd.f32 0.0, %v1674
          %v1676 = vpop.f32.mrb[0].mxu0
          %1677 = vmatprep.mubr.f32.mxu0 0.0
          %1678 = vmatmul.mubr.f32.gmra.mrb[0].mxu0 %v1505
          %v1679 = vpop.f32.mrb[0].mxu0
          %v1680 = vadd.f32 0.0, %v1679
          %v1681 = vpop.f32.mrb[0].mxu0
          %1682 = vmatprep.mubr.f32.mxu0 0.0
          %1683 = vmatmul.mubr.f32.gmra.mrb[0].mxu0 %v1506
          %v1684 = vpop.f32.mrb[0].mxu0
          %v1685 = vadd.f32 0.0, %v1684
          %v1686 = vpop.f32.mrb[0].mxu0
          %1687 = vmatprep.mubr.f32.mxu0 0.0
          %1688 = vmatmul.mubr.f32.gmra.mrb[0].mxu0 %v1507
          %v1689 = vpop.f32.mrb[0].mxu0
          %v1690 = vadd.f32 0.0, %v1689
          %v1691 = vpop.f32.mrb[0].mxu0
          %1692 = vmatprep.mubr.f32.mxu0 0.0
          %1693 = vmatmul.mubr.f32.gmra.mrb[0].mxu0 %v1508
          %v1694 = vpop.f32.mrb[0].mxu0
          %v1695 = vadd.f32 0.0, %v1694
          %v1696 = vpop.f32.mrb[0].mxu0
          %1697 = vmatprep.mubr.f32.mxu0 0.0
          %1698 = vmatmul.mubr.f32.gmra.mrb[0].mxu0 %v1509
          %v1699 = vpop.f32.mrb[0].mxu0
          %v1700 = vadd.f32 0.0, %v1699
          %v1701 = vpop.f32.mrb[0].mxu0
          %1702 = vmatprep.mubr.f32.mxu0 0.0
          %1703 = vmatmul.mubr.f32.gmra.mrb[0].mxu0 %v1510
          %v1704 = vpop.f32.mrb[0].mxu0
          %v1705 = vadd.f32 0.0, %v1704
          %v1706 = vpop.f32.mrb[0].mxu0
          %1707 = vmatprep.mubr.f32.mxu0 0.0
          %1708 = vmatmul.mubr.f32.gmra.mrb[0].mxu0 %v1511
          %v1709 = vpop.f32.mrb[0].mxu0
          %v1710 = vadd.f32 0.0, %v1709
          %v1711 = vpop.f32.mrb[0].mxu0
          %1712 = vmatprep.mubr.f32.mxu0 0.0
          %1713 = vmatmul.mubr.f32.gmra.mrb[0].mxu0 %v1512
          %v1714 = vpop.f32.mrb[0].mxu0
          %v1715 = vadd.f32 0.0, %v1714
          %v1716 = vpop.f32.mrb[0].mxu0
          %1717 = vmatprep.mubr.f32.mxu0 0.0
          %1718 = vmatmul.mubr.f32.gmra.mrb[0].mxu0 %v1513
          %v1719 = vpop.f32.mrb[0].mxu0
          %v1720 = vadd.f32 0.0, %v1719
          %v1721 = vpop.f32.mrb[0].mxu0
          %1722 = vmatprep.mubr.f32.mxu0 0.0
          %1723 = vmatmul.mubr.f32.gmra.mrb[0].mxu0 %v1514
          %v1724 = vpop.f32.mrb[0].mxu0
          %v1725 = vadd.f32 0.0, %v1724
          %v1726 = vpop.f32.mrb[0].mxu0
          %1727 = vmatprep.mubr.f32.mxu0 0.0
          %1728 = vmatmul.mubr.f32.gmra.mrb[0].mxu0 %v1515
          %v1729 = vpop.f32.mrb[0].mxu0
          %v1730 = vadd.f32 0.0, %v1729
          %v1731 = vpop.f32.mrb[0].mxu0
          %1732 = vmatprep.mubr.f32.mxu0 0.0
          %1733 = vmatmul.mubr.f32.gmra.mrb[0].mxu0 %v1516
          %v1734 = vpop.f32.mrb[0].mxu0
          %v1735 = vadd.f32 0.0, %v1734
          %v1736 = vpop.f32.mrb[0].mxu0
          %1737 = vmatprep.mubr.f32.mxu0 0.0
          %1738 = vmatmul.mubr.f32.gmra.mrb[0].mxu0 %v1517
          %v1739 = vpop.f32.mrb[0].mxu0
          %v1740 = vadd.f32 0.0, %v1739
          %v1741 = vpop.f32.mrb[0].mxu0
          %1742 = vmatprep.mubr.f32.mxu0 0.0
          %1743 = vmatmul.mubr.f32.gmra.mrb[0].mxu0 %v1518
          %v1744 = vpop.f32.mrb[0].mxu0
          %v1745 = vadd.f32 0.0, %v1744
          %v1746 = vpop.f32.mrb[0].mxu0
          %1747 = vmatprep.mubr.f32.mxu0 0.0
          %1748 = vmatmul.mubr.f32.gmra.mrb[0].mxu0 %v1519
          %v1749 = vpop.f32.mrb[0].mxu0
          %v1750 = vadd.f32 0.0, %v1749
          %v1751 = vpop.f32.mrb[0].mxu0
          %1752 = vmatprep.mubr.f32.mxu0 0.0
          %1753 = vmatmul.mubr.f32.gmra.mrb[0].mxu0 %v1520
          %v1754 = vpop.f32.mrb[0].mxu0
          %v1755 = vadd.f32 0.0, %v1754
          %v1756 = vpop.f32.mrb[0].mxu0
          %1757 = vmatprep.mubr.f32.mxu0 0.0
          %1758 = vmatmul.mubr.f32.gmra.mrb[0].mxu0 %v1521
          %v1759 = vpop.f32.mrb[0].mxu0
          %v1760 = vadd.f32 0.0, %v1759
          %v1761 = vpop.f32.mrb[0].mxu0
          %1762 = vmatprep.mubr.f32.mxu0 0.0
          %1763 = vmatmul.mubr.f32.gmra.mrb[0].mxu0 %v1522
          %v1764 = vpop.f32.mrb[0].mxu0
          %v1765 = vadd.f32 0.0, %v1764
          %v1766 = vpop.f32.mrb[0].mxu0
          %1767 = vmatprep.mubr.f32.mxu0 0.0
          %1768 = vmatmul.mubr.f32.gmra.mrb[0].mxu0 %v1523
          %v1769 = vpop.f32.mrb[0].mxu0
          %v1770 = vadd.f32 0.0, %v1769
          %v1771 = vpop.f32.mrb[0].mxu0
          %1772 = vmatprep.mubr.f32.mxu0 0.0
          %1773 = vmatmul.mubr.f32.gmra.mrb[0].mxu0 %v1524
          %v1774 = vpop.f32.mrb[0].mxu0
          %v1775 = vadd.f32 0.0, %v1774
          %v1776 = vpop.f32.mrb[0].mxu0
          %1777 = vmatprep.mubr.f32.mxu0 0.0
          %1778 = vmatmul.mubr.f32.gmra.mrb[0].mxu0 %v1525
          %v1779 = vpop.f32.mrb[0].mxu0
          %v1780 = vadd.f32 0.0, %v1779
          %v1781 = vpop.f32.mrb[0].mxu0
          %1782 = vmatprep.mubr.f32.mxu0 0.0
          %1783 = vmatmul.mubr.f32.gmra.mrb[0].mxu0 %v1526
          %v1784 = vpop.f32.mrb[0].mxu0
          %v1785 = vadd.f32 0.0, %v1784
          %v1786 = vpop.f32.mrb[0].mxu0
          %1787 = vmatprep.mubr.f32.mxu0 0.0
          %1788 = vmatmul.mubr.f32.gmra.mrb[0].mxu0 %v1527
          %v1789 = vpop.f32.mrb[0].mxu0
          %v1790 = vadd.f32 0.0, %v1789
          %v1791 = vpop.f32.mrb[0].mxu0
          %1792 = vmatprep.mubr.f32.mxu0 0.0
          %1793 = vmatmul.mubr.f32.gmra.mrb[0].mxu0 %v1528
          %v1794 = vpop.f32.mrb[0].mxu0
          %v1795 = vadd.f32 0.0, %v1794
          %v1796 = vpop.f32.mrb[0].mxu0
          %1797 = vmatprep.mubr.f32.mxu0 0.0
          %1798 = vmatmul.mubr.f32.gmra.mrb[0].mxu0 %v1529
          %v1799 = vpop.f32.mrb[0].mxu0
          %v1800 = vadd.f32 0.0, %v1799
          %v1801 = vpop.f32.mrb[0].mxu0
          %1802 = vmatprep.mubr.f32.mxu0 0.0
          %1803 = vmatmul.mubr.f32.gmra.mrb[0].mxu0 %v1530
          %v1804 = vpop.f32.mrb[0].mxu0
          %v1805 = vadd.f32 0.0, %v1804
          %v1806 = vpop.f32.mrb[0].mxu0
          %1807 = vmatprep.mubr.f32.mxu0 0.0
          %1808 = vmatmul.mubr.f32.gmra.mrb[0].mxu0 %v1531
          %v1809 = vpop.f32.mrb[0].mxu0
          %v1810 = vadd.f32 0.0, %v1809
          %v1811 = vpop.f32.mrb[0].mxu0
          %1812 = vmatprep.mubr.f32.mxu0 0.0
          %1813 = vmatmul.mubr.f32.gmra.mrb[0].mxu0 %v1532
          %v1814 = vpop.f32.mrb[0].mxu0
          %v1815 = vadd.f32 0.0, %v1814
          %v1816 = vpop.f32.mrb[0].mxu0
          %1817 = vmatprep.mubr.f32.mxu0 0.0
          %1818 = vmatmul.mubr.f32.gmra.mrb[0].mxu0 %v1533
          %v1819 = vpop.f32.mrb[0].mxu0
          %v1820 = vadd.f32 0.0, %v1819
          %v1821 = vpop.f32.mrb[0].mxu0
          %1822 = vmatprep.mubr.f32.mxu0 0.0
          %1823 = vmatmul.mubr.f32.gmra.mrb[0].mxu0 %v1534
          %v1824 = vpop.f32.mrb[0].mxu0
          %v1825 = vadd.f32 0.0, %v1824
          %v1826 = vpop.f32.mrb[0].mxu0
          %1827 = vmatprep.mubr.f32.mxu0 0.0
          %1828 = vmatmul.mubr.f32.gmra.mrb[0].mxu0 %v1535
          %v1829 = vpop.f32.mrb[0].mxu0
          %v1830 = vadd.f32 0.0, %v1829
          %v1831 = vpop.f32.mrb[0].mxu0
          %1832 = vmatprep.mubr.f32.mxu0 0.0
          %1833 = vmatmul.mubr.f32.gmra.mrb[0].mxu0 %v1536
          %v1834 = vpop.f32.mrb[0].mxu0
          %v1835 = vadd.f32 0.0, %v1834
          %v1836 = vpop.f32.mrb[0].mxu0
          %1837 = vmatprep.mubr.f32.mxu0 0.0
          %1838 = vmatmul.mubr.f32.gmra.mrb[0].mxu0 %v1537
          %v1839 = vpop.f32.mrb[0].mxu0
          %v1840 = vadd.f32 0.0, %v1839
          %v1841 = vpop.f32.mrb[0].mxu0
          %1842 = vmatprep.mubr.f32.mxu0 0.0
          %1843 = vmatmul.mubr.f32.gmra.mrb[0].mxu0 %v1538
          %v1844 = vpop.f32.mrb[0].mxu0
          %v1845 = vadd.f32 0.0, %v1844
          %v1846 = vpop.f32.mrb[0].mxu0
          %1847 = vmatprep.mubr.f32.mxu0 0.0
          %1848 = vmatmul.mubr.f32.gmra.mrb[0].mxu0 %v1539
          %v1849 = vpop.f32.mrb[0].mxu0
          %v1850 = vadd.f32 0.0, %v1849
          %v1851 = vpop.f32.mrb[0].mxu0
          %1852 = vmatprep.mubr.f32.mxu0 0.0
          %1853 = vmatmul.mubr.f32.gmra.mrb[0].mxu0 %v1540
          %v1854 = vpop.f32.mrb[0].mxu0
          %v1855 = vadd.f32 0.0, %v1854
          %v1856 = vpop.f32.mrb[0].mxu0
          %1857 = vmatprep.mubr.f32.mxu0 0.0
          %1858 = vmatmul.mubr.f32.gmra.mrb[0].mxu0 %v1541
          %v1859 = vpop.f32.mrb[0].mxu0
          %v1860 = vadd.f32 0.0, %v1859
          %v1861 = vpop.f32.mrb[0].mxu0
          %1862 = vmatprep.mubr.f32.mxu0 0.0
          %1863 = vmatmul.mubr.f32.gmra.mrb[0].mxu0 %v1542
          %v1864 = vpop.f32.mrb[0].mxu0
          %v1865 = vadd.f32 0.0, %v1864
          %v1866 = vpop.f32.mrb[0].mxu0
          %1867 = vmatprep.mubr.f32.mxu0 0.0
          %1868 = vmatmul.mubr.f32.gmra.mrb[0].mxu0 %v1543
          %v1869 = vpop.f32.mrb[0].mxu0
          %v1870 = vadd.f32 0.0, %v1869
          %v1871 = vpop.f32.mrb[0].mxu0
          %1872 = vmatprep.mubr.f32.mxu0 0.0
          %1873 = vmatmul.mubr.f32.gmra.mrb[0].mxu0 %v1544
          %v1874 = vpop.f32.mrb[0].mxu0
          %v1875 = vadd.f32 0.0, %v1874
          %v1876 = vpop.f32.mrb[0].mxu0
          %1877 = vmatprep.mubr.f32.mxu0 0.0
          %1878 = vmatmul.mubr.f32.gmra.mrb[0].mxu0 %v1545
          %v1879 = vpop.f32.mrb[0].mxu0
          %v1880 = vadd.f32 0.0, %v1879
          %v1881 = vpop.f32.mrb[0].mxu0
          %1882 = vmatprep.mubr.f32.mxu0 0.0
          %1883 = vmatmul.mubr.f32.gmra.mrb[0].mxu0 %v1546
          %v1884 = vpop.f32.mrb[0].mxu0
          %v1885 = vadd.f32 0.0, %v1884
          %v1886 = vpop.f32.mrb[0].mxu0
          %1887 = vmatprep.mubr.f32.mxu0 0.0
          %1888 = vmatmul.mubr.f32.gmra.mrb[0].mxu0 %v1547
          %v1889 = vpop.f32.mrb[0].mxu0
          %v1890 = vadd.f32 0.0, %v1889
          %v1891 = vpop.f32.mrb[0].mxu0
          %1892 = vmatprep.mubr.f32.mxu0 0.0
          %1893 = vmatmul.mubr.f32.gmra.mrb[0].mxu0 %v1548
          %v1894 = vpop.f32.mrb[0].mxu0
          %v1895 = vadd.f32 0.0, %v1894
          %v1896 = vpop.f32.mrb[0].mxu0
          %1897 = vmatprep.mubr.f32.mxu0 0.0
          %1898 = vmatmul.mubr.f32.gmra.mrb[0].mxu0 %v1549
          %v1899 = vpop.f32.mrb[0].mxu0
          %v1900 = vadd.f32 0.0, %v1899
          %v1901 = vpop.f32.mrb[0].mxu0
          %1902 = vmatprep.mubr.f32.mxu0 0.0
          %1903 = vmatmul.mubr.f32.gmra.mrb[0].mxu0 %v1550
          %v1904 = vpop.f32.mrb[0].mxu0
          %v1905 = vadd.f32 0.0, %v1904
          %v1906 = vpop.f32.mrb[0].mxu0
          %1907 = vmatprep.mubr.f32.mxu0 0.0
          %1908 = vmatmul.mubr.f32.gmra.mrb[0].mxu0 %v1551
          %v1909 = vpop.f32.mrb[0].mxu0
          %v1910 = vadd.f32 0.0, %v1909
          %v1911 = vpop.f32.mrb[0].mxu0
          %1912 = vmatprep.mubr.f32.mxu0 0.0
          %1913 = vmatmul.mubr.f32.gmra.mrb[0].mxu0 %v1552
          %v1914 = vpop.f32.mrb[0].mxu0
          %v1915 = vadd.f32 0.0, %v1914
          %v1916 = vpop.f32.mrb[0].mxu0
          %1917 = vmatprep.mubr.f32.mxu0 0.0
          %1918 = vmatmul.mubr.f32.gmra.mrb[0].mxu0 %v1553
          %v1919 = vpop.f32.mrb[0].mxu0
          %v1920 = vadd.f32 0.0, %v1919
          %v1921 = vpop.f32.mrb[0].mxu0
          %1922 = vmatprep.mubr.f32.mxu0 0.0
          %1923 = vmatmul.mubr.f32.gmra.mrb[0].mxu0 %v1554
          %v1924 = vpop.f32.mrb[0].mxu0
          %v1925 = vadd.f32 0.0, %v1924
          %v1926 = vpop.f32.mrb[0].mxu0
          %1927 = vmatprep.mubr.f32.mxu0 0.0
          %1928 = vmatmul.mubr.f32.gmra.mrb[0].mxu0 %v1555
          %v1929 = vpop.f32.mrb[0].mxu0
          %v1930 = vadd.f32 0.0, %v1929
          %v1931 = vpop.f32.mrb[0].mxu0
          %1932 = vmatprep.mubr.f32.mxu0 0.0
          %1933 = vmatmul.mubr.f32.gmra.mrb[0].mxu0 %v1556
          %v1934 = vpop.f32.mrb[0].mxu0
          %v1935 = vadd.f32 0.0, %v1934
          %v1936 = vpop.f32.mrb[0].mxu0
          %1937 = vmatprep.mubr.f32.mxu0 0.0
          %1938 = vmatmul.mubr.f32.gmra.mrb[0].mxu0 %v1557
          %v1939 = vpop.f32.mrb[0].mxu0
          %v1940 = vadd.f32 0.0, %v1939
          %v1941 = vpop.f32.mrb[0].mxu0
          %1942 = vmatprep.mubr.f32.mxu0 0.0
          %1943 = vmatmul.mubr.f32.gmra.mrb[0].mxu0 %v1558
          %v1944 = vpop.f32.mrb[0].mxu0
          %v1945 = vadd.f32 0.0, %v1944
          %v1946 = vpop.f32.mrb[0].mxu0
          %1947 = vmatprep.mubr.f32.mxu0 0.0
          %1948 = vmatmul.mubr.f32.gmra.mrb[0].mxu0 %v1559
          %v1949 = vpop.f32.mrb[0].mxu0
          %v1950 = vadd.f32 0.0, %v1949
          %v1951 = vpop.f32.mrb[0].mxu0
          %1952 = vmatprep.mubr.f32.mxu0 0.0
          %1953 = vmatmul.mubr.f32.gmra.mrb[0].mxu0 %v1560
          %v1954 = vpop.f32.mrb[0].mxu0
          %v1955 = vadd.f32 0.0, %v1954
          %v1956 = vpop.f32.mrb[0].mxu0
          %1957 = vmatprep.mubr.f32.mxu0 0.0
          %1958 = vmatmul.mubr.f32.gmra.mrb[0].mxu0 %v1561
          %v1959 = vpop.f32.mrb[0].mxu0
          %v1960 = vadd.f32 0.0, %v1959
          %v1961 = vpop.f32.mrb[0].mxu0
          %1962 = vdwg.mxu0
          %1963 = vmatprep.subr.mxu0 0.0
          %1964 = vmatpush1.msra.mxu0 %v1482
          %1965 = vmatprep.subr.mxu0 0.0
          %1966 = vmatpush1.msra.mxu0 %v1483
          %1967 = vmatprep.subr.mxu0 0.0
          %1968 = vmatpush1.msra.mxu0 %v1484
          %1969 = vmatprep.subr.mxu0 0.0
          %1970 = vmatpush1.msra.mxu0 %v1485
          %1971 = vmatprep.subr.mxu0 0.0
          %1972 = vmatpush1.msra.mxu0 %v1486
          %1973 = vmatprep.subr.mxu0 0.0
          %1974 = vmatpush1.msra.mxu0 %v1487
          %1975 = vmatprep.subr.mxu0 0.0
          %1976 = vmatpush1.msra.mxu0 %v1488
          %1977 = vmatprep.subr.mxu0 0.0
          %1978 = vmatpush1.msra.mxu0 %v1489
          %1979 = vmatprep.subr.mxu0 0.0
          %1980 = vmatpush1.msra.mxu0 %v1490
          %1981 = vmatprep.subr.mxu0 0.0
          %1982 = vmatpush1.msra.mxu0 %v1491
          %1983 = vmatprep.subr.mxu0 0.0
          %1984 = vmatpush1.msra.mxu0 %v1492
          %1985 = vmatprep.subr.mxu0 0.0
          %1986 = vmatpush1.msra.mxu0 %v1493
          %1987 = vmatprep.subr.mxu0 0.0
          %1988 = vmatpush1.msra.mxu0 %v1494
          %1989 = vmatprep.subr.mxu0 0.0
          %1990 = vmatpush1.msra.mxu0 %v1495
          %1991 = vmatprep.subr.mxu0 0.0
          %1992 = vmatpush1.msra.mxu0 %v1496
          %1993 = vmatprep.subr.mxu0 0.0
          %1994 = vmatpush1.msra.mxu0 %v1497
          %1995 = vmatprep.subr.mxu0 0.0
          %1996 = vmatpush1.msra.mxu0 0.0
          %1997 = vmatprep.subr.mxu0 0.0
          %1998 = vmatpush1.msra.mxu0 0.0
          %1999 = vmatprep.subr.mxu0 0.0
          %2000 = vmatpush1.msra.mxu0 0.0
          %2001 = vmatprep.subr.mxu0 0.0
          %2002 = vmatpush1.msra.mxu0 0.0
          %2003 = vmatprep.subr.mxu0 0.0
          %2004 = vmatpush1.msra.mxu0 0.0
          %2005 = vmatprep.subr.mxu0 0.0
          %2006 = vmatpush1.msra.mxu0 0.0
          %2007 = vmatprep.subr.mxu0 0.0
          %2008 = vmatpush1.msra.mxu0 0.0
          %2009 = vmatprep.subr.mxu0 0.0
          %2010 = vmatpush1.msra.mxu0 0.0
          %2011 = vmatprep.subr.mxu0 0.0
          %2012 = vmatpush1.msra.mxu0 0.0
          %2013 = vmatprep.subr.mxu0 0.0
          %2014 = vmatpush1.msra.mxu0 0.0
          %2015 = vmatprep.subr.mxu0 0.0
          %2016 = vmatpush1.msra.mxu0 0.0
          %2017 = vmatprep.subr.mxu0 0.0
          %2018 = vmatpush1.msra.mxu0 0.0
          %2019 = vmatprep.subr.mxu0 0.0
          %2020 = vmatpush1.msra.mxu0 0.0
          %2021 = vmatprep.subr.mxu0 0.0
          %2022 = vmatpush1.msra.mxu0 0.0
          %2023 = vmatprep.subr.mxu0 0.0
          %2024 = vmatpush1.msra.mxu0 0.0
          %2025 = vmatprep.subr.mxu0 0.0
          %2026 = vmatpush1.msra.mxu0 0.0
          %2027 = vmatprep.mubr.f32.mxu0 0.0
          %2028 = vmatmul.mubr.f32.gmra.mrb[0].mxu0 %v1418
          %v2029 = vpop.f32.mrb[0].mxu0
          %v2030 = vadd.f32 %v1645, %v2029
          %v2031 = vpop.f32.mrb[0].mxu0
          %2032 = vmatprep.mubr.f32.mxu0 0.0
          %2033 = vmatmul.mubr.f32.gmra.mrb[0].mxu0 %v1419
          %v2034 = vpop.f32.mrb[0].mxu0
          %v2035 = vadd.f32 %v1650, %v2034
          %v2036 = vpop.f32.mrb[0].mxu0
          %2037 = vmatprep.mubr.f32.mxu0 0.0
          %2038 = vmatmul.mubr.f32.gmra.mrb[0].mxu0 %v1420
          %v2039 = vpop.f32.mrb[0].mxu0
          %v2040 = vadd.f32 %v1655, %v2039
          %v2041 = vpop.f32.mrb[0].mxu0
          %2042 = vmatprep.mubr.f32.mxu0 0.0
          %2043 = vmatmul.mubr.f32.gmra.mrb[0].mxu0 %v1421
          %v2044 = vpop.f32.mrb[0].mxu0
          %v2045 = vadd.f32 %v1660, %v2044
          %v2046 = vpop.f32.mrb[0].mxu0
          %2047 = vmatprep.mubr.f32.mxu0 0.0
          %2048 = vmatmul.mubr.f32.gmra.mrb[0].mxu0 %v1422
          %v2049 = vpop.f32.mrb[0].mxu0
          %v2050 = vadd.f32 %v1665, %v2049
          %v2051 = vpop.f32.mrb[0].mxu0
          %2052 = vmatprep.mubr.f32.mxu0 0.0
          %2053 = vmatmul.mubr.f32.gmra.mrb[0].mxu0 %v1423
          %v2054 = vpop.f32.mrb[0].mxu0
          %v2055 = vadd.f32 %v1670, %v2054
          %v2056 = vpop.f32.mrb[0].mxu0
          %2057 = vmatprep.mubr.f32.mxu0 0.0
          %2058 = vmatmul.mubr.f32.gmra.mrb[0].mxu0 %v1424
          %v2059 = vpop.f32.mrb[0].mxu0
          %v2060 = vadd.f32 %v1675, %v2059
          %v2061 = vpop.f32.mrb[0].mxu0
          %2062 = vmatprep.mubr.f32.mxu0 0.0
          %2063 = vmatmul.mubr.f32.gmra.mrb[0].mxu0 %v1425
          %v2064 = vpop.f32.mrb[0].mxu0
          %v2065 = vadd.f32 %v1680, %v2064
          %v2066 = vpop.f32.mrb[0].mxu0
          %2067 = vmatprep.mubr.f32.mxu0 0.0
          %2068 = vmatmul.mubr.f32.gmra.mrb[0].mxu0 %v1426
          %v2069 = vpop.f32.mrb[0].mxu0
          %v2070 = vadd.f32 %v1685, %v2069
          %v2071 = vpop.f32.mrb[0].mxu0
          %2072 = vmatprep.mubr.f32.mxu0 0.0
          %2073 = vmatmul.mubr.f32.gmra.mrb[0].mxu0 %v1427
          %v2074 = vpop.f32.mrb[0].mxu0
          %v2075 = vadd.f32 %v1690, %v2074
          %v2076 = vpop.f32.mrb[0].mxu0
          %2077 = vmatprep.mubr.f32.mxu0 0.0
          %2078 = vmatmul.mubr.f32.gmra.mrb[0].mxu0 %v1428
          %v2079 = vpop.f32.mrb[0].mxu0
          %v2080 = vadd.f32 %v1695, %v2079
          %v2081 = vpop.f32.mrb[0].mxu0
          %2082 = vmatprep.mubr.f32.mxu0 0.0
          %2083 = vmatmul.mubr.f32.gmra.mrb[0].mxu0 %v1429
          %v2084 = vpop.f32.mrb[0].mxu0
          %v2085 = vadd.f32 %v1700, %v2084
          %v2086 = vpop.f32.mrb[0].mxu0
          %2087 = vmatprep.mubr.f32.mxu0 0.0
          %2088 = vmatmul.mubr.f32.gmra.mrb[0].mxu0 %v1430
          %v2089 = vpop.f32.mrb[0].mxu0
          %v2090 = vadd.f32 %v1705, %v2089
          %v2091 = vpop.f32.mrb[0].mxu0
          %2092 = vmatprep.mubr.f32.mxu0 0.0
          %2093 = vmatmul.mubr.f32.gmra.mrb[0].mxu0 %v1431
          %v2094 = vpop.f32.mrb[0].mxu0
          %v2095 = vadd.f32 %v1710, %v2094
          %v2096 = vpop.f32.mrb[0].mxu0
          %2097 = vmatprep.mubr.f32.mxu0 0.0
          %2098 = vmatmul.mubr.f32.gmra.mrb[0].mxu0 %v1432
          %v2099 = vpop.f32.mrb[0].mxu0
          %v2100 = vadd.f32 %v1715, %v2099
          %v2101 = vpop.f32.mrb[0].mxu0
          %2102 = vmatprep.mubr.f32.mxu0 0.0
          %2103 = vmatmul.mubr.f32.gmra.mrb[0].mxu0 %v1433
          %v2104 = vpop.f32.mrb[0].mxu0
          %v2105 = vadd.f32 %v1720, %v2104
          %v2106 = vpop.f32.mrb[0].mxu0
          %2107 = vmatprep.mubr.f32.mxu0 0.0
          %2108 = vmatmul.mubr.f32.gmra.mrb[0].mxu0 %v1434
          %v2109 = vpop.f32.mrb[0].mxu0
          %v2110 = vadd.f32 %v1725, %v2109
          %v2111 = vpop.f32.mrb[0].mxu0
          %2112 = vmatprep.mubr.f32.mxu0 0.0
          %2113 = vmatmul.mubr.f32.gmra.mrb[0].mxu0 %v1435
          %v2114 = vpop.f32.mrb[0].mxu0
          %v2115 = vadd.f32 %v1730, %v2114
          %v2116 = vpop.f32.mrb[0].mxu0
          %2117 = vmatprep.mubr.f32.mxu0 0.0
          %2118 = vmatmul.mubr.f32.gmra.mrb[0].mxu0 %v1436
          %v2119 = vpop.f32.mrb[0].mxu0
          %v2120 = vadd.f32 %v1735, %v2119
          %v2121 = vpop.f32.mrb[0].mxu0
          %2122 = vmatprep.mubr.f32.mxu0 0.0
          %2123 = vmatmul.mubr.f32.gmra.mrb[0].mxu0 %v1437
          %v2124 = vpop.f32.mrb[0].mxu0
          %v2125 = vadd.f32 %v1740, %v2124
          %v2126 = vpop.f32.mrb[0].mxu0
          %2127 = vmatprep.mubr.f32.mxu0 0.0
          %2128 = vmatmul.mubr.f32.gmra.mrb[0].mxu0 %v1438
          %v2129 = vpop.f32.mrb[0].mxu0
          %v2130 = vadd.f32 %v1745, %v2129
          %v2131 = vpop.f32.mrb[0].mxu0
          %2132 = vmatprep.mubr.f32.mxu0 0.0
          %2133 = vmatmul.mubr.f32.gmra.mrb[0].mxu0 %v1439
          %v2134 = vpop.f32.mrb[0].mxu0
          %v2135 = vadd.f32 %v1750, %v2134
          %v2136 = vpop.f32.mrb[0].mxu0
          %2137 = vmatprep.mubr.f32.mxu0 0.0
          %2138 = vmatmul.mubr.f32.gmra.mrb[0].mxu0 %v1440
          %v2139 = vpop.f32.mrb[0].mxu0
          %v2140 = vadd.f32 %v1755, %v2139
          %v2141 = vpop.f32.mrb[0].mxu0
          %2142 = vmatprep.mubr.f32.mxu0 0.0
          %2143 = vmatmul.mubr.f32.gmra.mrb[0].mxu0 %v1441
          %v2144 = vpop.f32.mrb[0].mxu0
          %v2145 = vadd.f32 %v1760, %v2144
          %v2146 = vpop.f32.mrb[0].mxu0
          %2147 = vmatprep.mubr.f32.mxu0 0.0
          %2148 = vmatmul.mubr.f32.gmra.mrb[0].mxu0 %v1442
          %v2149 = vpop.f32.mrb[0].mxu0
          %v2150 = vadd.f32 %v1765, %v2149
          %v2151 = vpop.f32.mrb[0].mxu0
          %2152 = vmatprep.mubr.f32.mxu0 0.0
          %2153 = vmatmul.mubr.f32.gmra.mrb[0].mxu0 %v1443
          %v2154 = vpop.f32.mrb[0].mxu0
          %v2155 = vadd.f32 %v1770, %v2154
          %v2156 = vpop.f32.mrb[0].mxu0
          %2157 = vmatprep.mubr.f32.mxu0 0.0
          %2158 = vmatmul.mubr.f32.gmra.mrb[0].mxu0 %v1444
          %v2159 = vpop.f32.mrb[0].mxu0
          %v2160 = vadd.f32 %v1775, %v2159
          %v2161 = vpop.f32.mrb[0].mxu0
          %2162 = vmatprep.mubr.f32.mxu0 0.0
          %2163 = vmatmul.mubr.f32.gmra.mrb[0].mxu0 %v1445
          %v2164 = vpop.f32.mrb[0].mxu0
          %v2165 = vadd.f32 %v1780, %v2164
          %v2166 = vpop.f32.mrb[0].mxu0
          %2167 = vmatprep.mubr.f32.mxu0 0.0
          %2168 = vmatmul.mubr.f32.gmra.mrb[0].mxu0 %v1446
          %v2169 = vpop.f32.mrb[0].mxu0
          %v2170 = vadd.f32 %v1785, %v2169
          %v2171 = vpop.f32.mrb[0].mxu0
          %2172 = vmatprep.mubr.f32.mxu0 0.0
          %2173 = vmatmul.mubr.f32.gmra.mrb[0].mxu0 %v1447
          %v2174 = vpop.f32.mrb[0].mxu0
          %v2175 = vadd.f32 %v1790, %v2174
          %v2176 = vpop.f32.mrb[0].mxu0
          %2177 = vmatprep.mubr.f32.mxu0 0.0
          %2178 = vmatmul.mubr.f32.gmra.mrb[0].mxu0 %v1448
          %v2179 = vpop.f32.mrb[0].mxu0
          %v2180 = vadd.f32 %v1795, %v2179
          %v2181 = vpop.f32.mrb[0].mxu0
          %2182 = vmatprep.mubr.f32.mxu0 0.0
          %2183 = vmatmul.mubr.f32.gmra.mrb[0].mxu0 %v1449
          %v2184 = vpop.f32.mrb[0].mxu0
          %v2185 = vadd.f32 %v1800, %v2184
          %v2186 = vpop.f32.mrb[0].mxu0
          %2187 = vmatprep.mubr.f32.mxu0 0.0
          %2188 = vmatmul.mubr.f32.gmra.mrb[0].mxu0 %v1450
          %v2189 = vpop.f32.mrb[0].mxu0
          %v2190 = vadd.f32 %v1805, %v2189
          %v2191 = vpop.f32.mrb[0].mxu0
          %2192 = vmatprep.mubr.f32.mxu0 0.0
          %2193 = vmatmul.mubr.f32.gmra.mrb[0].mxu0 %v1451
          %v2194 = vpop.f32.mrb[0].mxu0
          %v2195 = vadd.f32 %v1810, %v2194
          %v2196 = vpop.f32.mrb[0].mxu0
          %2197 = vmatprep.mubr.f32.mxu0 0.0
          %2198 = vmatmul.mubr.f32.gmra.mrb[0].mxu0 %v1452
          %v2199 = vpop.f32.mrb[0].mxu0
          %v2200 = vadd.f32 %v1815, %v2199
          %v2201 = vpop.f32.mrb[0].mxu0
          %2202 = vmatprep.mubr.f32.mxu0 0.0
          %2203 = vmatmul.mubr.f32.gmra.mrb[0].mxu0 %v1453
          %v2204 = vpop.f32.mrb[0].mxu0
          %v2205 = vadd.f32 %v1820, %v2204
          %v2206 = vpop.f32.mrb[0].mxu0
          %2207 = vmatprep.mubr.f32.mxu0 0.0
          %2208 = vmatmul.mubr.f32.gmra.mrb[0].mxu0 %v1454
          %v2209 = vpop.f32.mrb[0].mxu0
          %v2210 = vadd.f32 %v1825, %v2209
          %v2211 = vpop.f32.mrb[0].mxu0
          %2212 = vmatprep.mubr.f32.mxu0 0.0
          %2213 = vmatmul.mubr.f32.gmra.mrb[0].mxu0 %v1455
          %v2214 = vpop.f32.mrb[0].mxu0
          %v2215 = vadd.f32 %v1830, %v2214
          %v2216 = vpop.f32.mrb[0].mxu0
          %2217 = vmatprep.mubr.f32.mxu0 0.0
          %2218 = vmatmul.mubr.f32.gmra.mrb[0].mxu0 %v1456
          %v2219 = vpop.f32.mrb[0].mxu0
          %v2220 = vadd.f32 %v1835, %v2219
          %v2221 = vpop.f32.mrb[0].mxu0
          %2222 = vmatprep.mubr.f32.mxu0 0.0
          %2223 = vmatmul.mubr.f32.gmra.mrb[0].mxu0 %v1457
          %v2224 = vpop.f32.mrb[0].mxu0
          %v2225 = vadd.f32 %v1840, %v2224
          %v2226 = vpop.f32.mrb[0].mxu0
          %2227 = vmatprep.mubr.f32.mxu0 0.0
          %2228 = vmatmul.mubr.f32.gmra.mrb[0].mxu0 %v1458
          %v2229 = vpop.f32.mrb[0].mxu0
          %v2230 = vadd.f32 %v1845, %v2229
          %v2231 = vpop.f32.mrb[0].mxu0
          %2232 = vmatprep.mubr.f32.mxu0 0.0
          %2233 = vmatmul.mubr.f32.gmra.mrb[0].mxu0 %v1459
          %v2234 = vpop.f32.mrb[0].mxu0
          %v2235 = vadd.f32 %v1850, %v2234
          %v2236 = vpop.f32.mrb[0].mxu0
          %2237 = vmatprep.mubr.f32.mxu0 0.0
          %2238 = vmatmul.mubr.f32.gmra.mrb[0].mxu0 %v1460
          %v2239 = vpop.f32.mrb[0].mxu0
          %v2240 = vadd.f32 %v1855, %v2239
          %v2241 = vpop.f32.mrb[0].mxu0
          %2242 = vmatprep.mubr.f32.mxu0 0.0
          %2243 = vmatmul.mubr.f32.gmra.mrb[0].mxu0 %v1461
          %v2244 = vpop.f32.mrb[0].mxu0
          %v2245 = vadd.f32 %v1860, %v2244
          %v2246 = vpop.f32.mrb[0].mxu0
          %2247 = vmatprep.mubr.f32.mxu0 0.0
          %2248 = vmatmul.mubr.f32.gmra.mrb[0].mxu0 %v1462
          %v2249 = vpop.f32.mrb[0].mxu0
          %v2250 = vadd.f32 %v1865, %v2249
          %v2251 = vpop.f32.mrb[0].mxu0
          %2252 = vmatprep.mubr.f32.mxu0 0.0
          %2253 = vmatmul.mubr.f32.gmra.mrb[0].mxu0 %v1463
          %v2254 = vpop.f32.mrb[0].mxu0
          %v2255 = vadd.f32 %v1870, %v2254
          %v2256 = vpop.f32.mrb[0].mxu0
          %2257 = vmatprep.mubr.f32.mxu0 0.0
          %2258 = vmatmul.mubr.f32.gmra.mrb[0].mxu0 %v1464
          %v2259 = vpop.f32.mrb[0].mxu0
          %v2260 = vadd.f32 %v1875, %v2259
          %v2261 = vpop.f32.mrb[0].mxu0
          %2262 = vmatprep.mubr.f32.mxu0 0.0
          %2263 = vmatmul.mubr.f32.gmra.mrb[0].mxu0 %v1465
          %v2264 = vpop.f32.mrb[0].mxu0
          %v2265 = vadd.f32 %v1880, %v2264
          %v2266 = vpop.f32.mrb[0].mxu0
          %2267 = vmatprep.mubr.f32.mxu0 0.0
          %2268 = vmatmul.mubr.f32.gmra.mrb[0].mxu0 %v1466
          %v2269 = vpop.f32.mrb[0].mxu0
          %v2270 = vadd.f32 %v1885, %v2269
          %v2271 = vpop.f32.mrb[0].mxu0
          %2272 = vmatprep.mubr.f32.mxu0 0.0
          %2273 = vmatmul.mubr.f32.gmra.mrb[0].mxu0 %v1467
          %v2274 = vpop.f32.mrb[0].mxu0
          %v2275 = vadd.f32 %v1890, %v2274
          %v2276 = vpop.f32.mrb[0].mxu0
          %2277 = vmatprep.mubr.f32.mxu0 0.0
          %2278 = vmatmul.mubr.f32.gmra.mrb[0].mxu0 %v1468
          %v2279 = vpop.f32.mrb[0].mxu0
          %v2280 = vadd.f32 %v1895, %v2279
          %v2281 = vpop.f32.mrb[0].mxu0
          %2282 = vmatprep.mubr.f32.mxu0 0.0
          %2283 = vmatmul.mubr.f32.gmra.mrb[0].mxu0 %v1469
          %v2284 = vpop.f32.mrb[0].mxu0
          %v2285 = vadd.f32 %v1900, %v2284
          %v2286 = vpop.f32.mrb[0].mxu0
          %2287 = vmatprep.mubr.f32.mxu0 0.0
          %2288 = vmatmul.mubr.f32.gmra.mrb[0].mxu0 %v1470
          %v2289 = vpop.f32.mrb[0].mxu0
          %v2290 = vadd.f32 %v1905, %v2289
          %v2291 = vpop.f32.mrb[0].mxu0
          %2292 = vmatprep.mubr.f32.mxu0 0.0
          %2293 = vmatmul.mubr.f32.gmra.mrb[0].mxu0 %v1471
          %v2294 = vpop.f32.mrb[0].mxu0
          %v2295 = vadd.f32 %v1910, %v2294
          %v2296 = vpop.f32.mrb[0].mxu0
          %2297 = vmatprep.mubr.f32.mxu0 0.0
          %2298 = vmatmul.mubr.f32.gmra.mrb[0].mxu0 %v1472
          %v2299 = vpop.f32.mrb[0].mxu0
          %v2300 = vadd.f32 %v1915, %v2299
          %v2301 = vpop.f32.mrb[0].mxu0
          %2302 = vmatprep.mubr.f32.mxu0 0.0
          %2303 = vmatmul.mubr.f32.gmra.mrb[0].mxu0 %v1473
          %v2304 = vpop.f32.mrb[0].mxu0
          %v2305 = vadd.f32 %v1920, %v2304
          %v2306 = vpop.f32.mrb[0].mxu0
          %2307 = vmatprep.mubr.f32.mxu0 0.0
          %2308 = vmatmul.mubr.f32.gmra.mrb[0].mxu0 %v1474
          %v2309 = vpop.f32.mrb[0].mxu0
          %v2310 = vadd.f32 %v1925, %v2309
          %v2311 = vpop.f32.mrb[0].mxu0
          %2312 = vmatprep.mubr.f32.mxu0 0.0
          %2313 = vmatmul.mubr.f32.gmra.mrb[0].mxu0 %v1475
          %v2314 = vpop.f32.mrb[0].mxu0
          %v2315 = vadd.f32 %v1930, %v2314
          %v2316 = vpop.f32.mrb[0].mxu0
          %2317 = vmatprep.mubr.f32.mxu0 0.0
          %2318 = vmatmul.mubr.f32.gmra.mrb[0].mxu0 %v1476
          %v2319 = vpop.f32.mrb[0].mxu0
          %v2320 = vadd.f32 %v1935, %v2319
          %v2321 = vpop.f32.mrb[0].mxu0
          %2322 = vmatprep.mubr.f32.mxu0 0.0
          %2323 = vmatmul.mubr.f32.gmra.mrb[0].mxu0 %v1477
          %v2324 = vpop.f32.mrb[0].mxu0
          %v2325 = vadd.f32 %v1940, %v2324
          %v2326 = vpop.f32.mrb[0].mxu0
          %2327 = vmatprep.mubr.f32.mxu0 0.0
          %2328 = vmatmul.mubr.f32.gmra.mrb[0].mxu0 %v1478
          %v2329 = vpop.f32.mrb[0].mxu0
          %v2330 = vadd.f32 %v1945, %v2329
          %v2331 = vpop.f32.mrb[0].mxu0
          %2332 = vmatprep.mubr.f32.mxu0 0.0
          %2333 = vmatmul.mubr.f32.gmra.mrb[0].mxu0 %v1479
          %v2334 = vpop.f32.mrb[0].mxu0
          %v2335 = vadd.f32 %v1950, %v2334
          %v2336 = vpop.f32.mrb[0].mxu0
          %2337 = vmatprep.mubr.f32.mxu0 0.0
          %2338 = vmatmul.mubr.f32.gmra.mrb[0].mxu0 %v1480
          %v2339 = vpop.f32.mrb[0].mxu0
          %v2340 = vadd.f32 %v1955, %v2339
          %v2341 = vpop.f32.mrb[0].mxu0
          %2342 = vmatprep.mubr.f32.mxu0 0.0
          %2343 = vmatmul.mubr.f32.gmra.mrb[0].mxu0 %v1481
          %v2344 = vpop.f32.mrb[0].mxu0
          %v2345 = vadd.f32 %v1960, %v2344
          %v2346 = vpop.f32.mrb[0].mxu0
          %2347 = vdwg.mxu0
          %v2348 = vld [vmem:[%s521] sm:$0xff]
          %v2349 = vld [vmem:[%s521 + $0x8] sm:$0xff]
          %v2350 = vld [vmem:[%s521 + $0x10] sm:$0xff]
          %v2351 = vld [vmem:[%s521 + $0x18] sm:$0xff]
          %v2352 = vld [vmem:[%s521 + $0x20] sm:$0xff]
          %v2353 = vld [vmem:[%s521 + $0x28] sm:$0xff]
          %v2354 = vld [vmem:[%s521 + $0x30] sm:$0xff]
          %v2355 = vld [vmem:[%s521 + $0x38] sm:$0xff]
          %v2356 = vld [vmem:[%s521 + $0x40] sm:$0xff]
          %v2357 = vld [vmem:[%s521 + $0x48] sm:$0xff]
          %v2358 = vld [vmem:[%s521 + $0x50] sm:$0xff]
          %v2359 = vld [vmem:[%s521 + $0x58] sm:$0xff]
          %v2360 = vld [vmem:[%s521 + $0x60] sm:$0xff]
          %v2361 = vld [vmem:[%s521 + $0x68] sm:$0xff]
          %v2362 = vld [vmem:[%s521 + $0x70] sm:$0xff]
          %v2363 = vld [vmem:[%s521 + $0x78] sm:$0xff]
          %v2364 = vld [vmem:[%s521 + $0x80] sm:$0xff]
          %v2365 = vld [vmem:[%s521 + $0x88] sm:$0xff]
          %v2366 = vld [vmem:[%s521 + $0x90] sm:$0xff]
          %v2367 = vld [vmem:[%s521 + $0x98] sm:$0xff]
          %v2368 = vld [vmem:[%s521 + $0xa0] sm:$0xff]
          %v2369 = vld [vmem:[%s521 + $0xa8] sm:$0xff]
          %v2370 = vld [vmem:[%s521 + $0xb0] sm:$0xff]
          %v2371 = vld [vmem:[%s521 + $0xb8] sm:$0xff]
          %v2372 = vld [vmem:[%s521 + $0xc0] sm:$0xff]
          %v2373 = vld [vmem:[%s521 + $0xc8] sm:$0xff]
          %v2374 = vld [vmem:[%s521 + $0xd0] sm:$0xff]
          %v2375 = vld [vmem:[%s521 + $0xd8] sm:$0xff]
          %v2376 = vld [vmem:[%s521 + $0xe0] sm:$0xff]
          %v2377 = vld [vmem:[%s521 + $0xe8] sm:$0xff]
          %v2378 = vld [vmem:[%s521 + $0xf0] sm:$0xff]
          %v2379 = vld [vmem:[%s521 + $0xf8] sm:$0xff]
          %v2380 = vld [vmem:[%s521 + $0x100] sm:$0xff]
          %v2381 = vld [vmem:[%s521 + $0x108] sm:$0xff]
          %v2382 = vld [vmem:[%s521 + $0x110] sm:$0xff]
          %v2383 = vld [vmem:[%s521 + $0x118] sm:$0xff]
          %v2384 = vld [vmem:[%s521 + $0x120] sm:$0xff]
          %v2385 = vld [vmem:[%s521 + $0x128] sm:$0xff]
          %v2386 = vld [vmem:[%s521 + $0x130] sm:$0xff]
          %v2387 = vld [vmem:[%s521 + $0x138] sm:$0xff]
          %v2388 = vld [vmem:[%s521 + $0x140] sm:$0xff]
          %v2389 = vld [vmem:[%s521 + $0x148] sm:$0xff]
          %v2390 = vld [vmem:[%s521 + $0x150] sm:$0xff]
          %v2391 = vld [vmem:[%s521 + $0x158] sm:$0xff]
          %v2392 = vld [vmem:[%s521 + $0x160] sm:$0xff]
          %v2393 = vld [vmem:[%s521 + $0x168] sm:$0xff]
          %v2394 = vld [vmem:[%s521 + $0x170] sm:$0xff]
          %v2395 = vld [vmem:[%s521 + $0x178] sm:$0xff]
          %v2396 = vld [vmem:[%s521 + $0x180] sm:$0xff]
          %v2397 = vld [vmem:[%s521 + $0x188] sm:$0xff]
          %v2398 = vld [vmem:[%s521 + $0x190] sm:$0xff]
          %v2399 = vld [vmem:[%s521 + $0x198] sm:$0xff]
          %v2400 = vld [vmem:[%s521 + $0x1a0] sm:$0xff]
          %v2401 = vld [vmem:[%s521 + $0x1a8] sm:$0xff]
          %v2402 = vld [vmem:[%s521 + $0x1b0] sm:$0xff]
          %v2403 = vld [vmem:[%s521 + $0x1b8] sm:$0xff]
          %v2404 = vld [vmem:[%s521 + $0x1c0] sm:$0xff]
          %v2405 = vld [vmem:[%s521 + $0x1c8] sm:$0xff]
          %v2406 = vld [vmem:[%s521 + $0x1d0] sm:$0xff]
          %v2407 = vld [vmem:[%s521 + $0x1d8] sm:$0xff]
          %v2408 = vld [vmem:[%s521 + $0x1e0] sm:$0xff]
          %v2409 = vld [vmem:[%s521 + $0x1e8] sm:$0xff]
          %v2410 = vld [vmem:[%s521 + $0x1f0] sm:$0xff]
          %v2411 = vld [vmem:[%s521 + $0x1f8] sm:$0xff]
          %v2412 = vld [vmem:[%s6 + $0x100] sm:$0xff]
          %vm2413 = vcmask 64512
          %v2415 = vsel %vm2413, %v2348, 0
          %v2418 = vsel %vm2413, %v2349, 0
          %v2421 = vsel %vm2413, %v2350, 0
          %v2424 = vsel %vm2413, %v2351, 0
          %v2427 = vsel %vm2413, %v2352, 0
          %v2430 = vsel %vm2413, %v2353, 0
          %v2433 = vsel %vm2413, %v2354, 0
          %v2436 = vsel %vm2413, %v2355, 0
          %v2439 = vsel %vm2413, %v2356, 0
          %v2442 = vsel %vm2413, %v2357, 0
          %v2445 = vsel %vm2413, %v2358, 0
          %v2448 = vsel %vm2413, %v2359, 0
          %v2451 = vsel %vm2413, %v2360, 0
          %v2454 = vsel %vm2413, %v2361, 0
          %v2457 = vsel %vm2413, %v2362, 0
          %v2460 = vsel %vm2413, %v2363, 0
          %v2463 = vsel %vm2413, %v2364, 0
          %v2466 = vsel %vm2413, %v2365, 0
          %v2469 = vsel %vm2413, %v2366, 0
          %v2472 = vsel %vm2413, %v2367, 0
          %v2475 = vsel %vm2413, %v2368, 0
          %v2478 = vsel %vm2413, %v2369, 0
          %v2481 = vsel %vm2413, %v2370, 0
          %v2484 = vsel %vm2413, %v2371, 0
          %v2487 = vsel %vm2413, %v2372, 0
          %v2490 = vsel %vm2413, %v2373, 0
          %v2493 = vsel %vm2413, %v2374, 0
          %v2496 = vsel %vm2413, %v2375, 0
          %v2499 = vsel %vm2413, %v2376, 0
          %v2502 = vsel %vm2413, %v2377, 0
          %v2505 = vsel %vm2413, %v2378, 0
          %v2508 = vsel %vm2413, %v2379, 0
          %v2511 = vsel %vm2413, %v2380, 0
          %v2514 = vsel %vm2413, %v2381, 0
          %v2517 = vsel %vm2413, %v2382, 0
          %v2520 = vsel %vm2413, %v2383, 0
          %v2523 = vsel %vm2413, %v2384, 0
          %v2526 = vsel %vm2413, %v2385, 0
          %v2529 = vsel %vm2413, %v2386, 0
          %v2532 = vsel %vm2413, %v2387, 0
          %v2535 = vsel %vm2413, %v2388, 0
          %v2538 = vsel %vm2413, %v2389, 0
          %v2541 = vsel %vm2413, %v2390, 0
          %v2544 = vsel %vm2413, %v2391, 0
          %v2547 = vsel %vm2413, %v2392, 0
          %v2550 = vsel %vm2413, %v2393, 0
          %v2553 = vsel %vm2413, %v2394, 0
          %v2556 = vsel %vm2413, %v2395, 0
          %v2559 = vsel %vm2413, %v2396, 0
          %v2562 = vsel %vm2413, %v2397, 0
          %v2565 = vsel %vm2413, %v2398, 0
          %v2568 = vsel %vm2413, %v2399, 0
          %v2571 = vsel %vm2413, %v2400, 0
          %v2574 = vsel %vm2413, %v2401, 0
          %v2577 = vsel %vm2413, %v2402, 0
          %v2580 = vsel %vm2413, %v2403, 0
          %v2583 = vsel %vm2413, %v2404, 0
          %v2586 = vsel %vm2413, %v2405, 0
          %v2589 = vsel %vm2413, %v2406, 0
          %v2592 = vsel %vm2413, %v2407, 0
          %v2595 = vsel %vm2413, %v2408, 0
          %v2598 = vsel %vm2413, %v2409, 0
          %v2601 = vsel %vm2413, %v2410, 0
          %v2604 = vsel %vm2413, %v2411, 0
          %2606 = vmatprep.subr.mxu0 0.0
          %2607 = vmatpush1.msra.mxu0 %v2412
          %2608 = vmatprep.subr.mxu0 0.0
          %2609 = vmatpush1.msra.mxu0 0.0
          %2610 = vmatprep.subr.mxu0 0.0
          %2611 = vmatpush1.msra.mxu0 0.0
          %2612 = vmatprep.subr.mxu0 0.0
          %2613 = vmatpush1.msra.mxu0 0.0
          %2614 = vmatprep.subr.mxu0 0.0
          %2615 = vmatpush1.msra.mxu0 0.0
          %2616 = vmatprep.subr.mxu0 0.0
          %2617 = vmatpush1.msra.mxu0 0.0
          %2618 = vmatprep.subr.mxu0 0.0
          %2619 = vmatpush1.msra.mxu0 0.0
          %2620 = vmatprep.subr.mxu0 0.0
          %2621 = vmatpush1.msra.mxu0 0.0
          %2622 = vmatprep.subr.mxu0 0.0
          %2623 = vmatpush1.msra.mxu0 0.0
          %2624 = vmatprep.subr.mxu0 0.0
          %2625 = vmatpush1.msra.mxu0 0.0
          %2626 = vmatprep.subr.mxu0 0.0
          %2627 = vmatpush1.msra.mxu0 0.0
          %2628 = vmatprep.subr.mxu0 0.0
          %2629 = vmatpush1.msra.mxu0 0.0
          %2630 = vmatprep.subr.mxu0 0.0
          %2631 = vmatpush1.msra.mxu0 0.0
          %2632 = vmatprep.subr.mxu0 0.0
          %2633 = vmatpush1.msra.mxu0 0.0
          %2634 = vmatprep.subr.mxu0 0.0
          %2635 = vmatpush1.msra.mxu0 0.0
          %2636 = vmatprep.subr.mxu0 0.0
          %2637 = vmatpush1.msra.mxu0 0.0
          %2638 = vmatprep.subr.mxu0 0.0
          %2639 = vmatpush1.msra.mxu0 0.0
          %2640 = vmatprep.subr.mxu0 0.0
          %2641 = vmatpush1.msra.mxu0 0.0
          %2642 = vmatprep.subr.mxu0 0.0
          %2643 = vmatpush1.msra.mxu0 0.0
          %2644 = vmatprep.subr.mxu0 0.0
          %2645 = vmatpush1.msra.mxu0 0.0
          %2646 = vmatprep.subr.mxu0 0.0
          %2647 = vmatpush1.msra.mxu0 0.0
          %2648 = vmatprep.subr.mxu0 0.0
          %2649 = vmatpush1.msra.mxu0 0.0
          %2650 = vmatprep.subr.mxu0 0.0
          %2651 = vmatpush1.msra.mxu0 0.0
          %2652 = vmatprep.subr.mxu0 0.0
          %2653 = vmatpush1.msra.mxu0 0.0
          %2654 = vmatprep.subr.mxu0 0.0
          %2655 = vmatpush1.msra.mxu0 0.0
          %2656 = vmatprep.subr.mxu0 0.0
          %2657 = vmatpush1.msra.mxu0 0.0
          %2658 = vmatprep.subr.mxu0 0.0
          %2659 = vmatpush1.msra.mxu0 0.0
          %2660 = vmatprep.subr.mxu0 0.0
          %2661 = vmatpush1.msra.mxu0 0.0
          %2662 = vmatprep.subr.mxu0 0.0
          %2663 = vmatpush1.msra.mxu0 0.0
          %2664 = vmatprep.subr.mxu0 0.0
          %2665 = vmatpush1.msra.mxu0 0.0
          %2666 = vmatprep.subr.mxu0 0.0
          %2667 = vmatpush1.msra.mxu0 0.0
          %2668 = vmatprep.subr.mxu0 0.0
          %2669 = vmatpush1.msra.mxu0 0.0
          %2670 = vmatprep.mubr.f32.mxu0 0.0
          %2671 = vmatmul.mubr.f32.gmra.mrb[0].mxu0 %v2415
          %v2672 = vpop.f32.mrb[0].mxu0
          %v2673 = vadd.f32 0.0, %v2672
          %v2674 = vpop.f32.mrb[0].mxu0
          %2675 = vmatprep.mubr.f32.mxu0 0.0
          %2676 = vmatmul.mubr.f32.gmra.mrb[0].mxu0 %v2418
          %v2677 = vpop.f32.mrb[0].mxu0
          %v2678 = vadd.f32 0.0, %v2677
          %v2679 = vpop.f32.mrb[0].mxu0
          %2680 = vmatprep.mubr.f32.mxu0 0.0
          %2681 = vmatmul.mubr.f32.gmra.mrb[0].mxu0 %v2421
          %v2682 = vpop.f32.mrb[0].mxu0
          %v2683 = vadd.f32 0.0, %v2682
          %v2684 = vpop.f32.mrb[0].mxu0
          %2685 = vmatprep.mubr.f32.mxu0 0.0
          %2686 = vmatmul.mubr.f32.gmra.mrb[0].mxu0 %v2424
          %v2687 = vpop.f32.mrb[0].mxu0
          %v2688 = vadd.f32 0.0, %v2687
          %v2689 = vpop.f32.mrb[0].mxu0
          %2690 = vmatprep.mubr.f32.mxu0 0.0
          %2691 = vmatmul.mubr.f32.gmra.mrb[0].mxu0 %v2427
          %v2692 = vpop.f32.mrb[0].mxu0
          %v2693 = vadd.f32 0.0, %v2692
          %v2694 = vpop.f32.mrb[0].mxu0
          %2695 = vmatprep.mubr.f32.mxu0 0.0
          %2696 = vmatmul.mubr.f32.gmra.mrb[0].mxu0 %v2430
          %v2697 = vpop.f32.mrb[0].mxu0
          %v2698 = vadd.f32 0.0, %v2697
          %v2699 = vpop.f32.mrb[0].mxu0
          %2700 = vmatprep.mubr.f32.mxu0 0.0
          %2701 = vmatmul.mubr.f32.gmra.mrb[0].mxu0 %v2433
          %v2702 = vpop.f32.mrb[0].mxu0
          %v2703 = vadd.f32 0.0, %v2702
          %v2704 = vpop.f32.mrb[0].mxu0
          %2705 = vmatprep.mubr.f32.mxu0 0.0
          %2706 = vmatmul.mubr.f32.gmra.mrb[0].mxu0 %v2436
          %v2707 = vpop.f32.mrb[0].mxu0
          %v2708 = vadd.f32 0.0, %v2707
          %v2709 = vpop.f32.mrb[0].mxu0
          %2710 = vmatprep.mubr.f32.mxu0 0.0
          %2711 = vmatmul.mubr.f32.gmra.mrb[0].mxu0 %v2439
          %v2712 = vpop.f32.mrb[0].mxu0
          %v2713 = vadd.f32 0.0, %v2712
          %v2714 = vpop.f32.mrb[0].mxu0
          %2715 = vmatprep.mubr.f32.mxu0 0.0
          %2716 = vmatmul.mubr.f32.gmra.mrb[0].mxu0 %v2442
          %v2717 = vpop.f32.mrb[0].mxu0
          %v2718 = vadd.f32 0.0, %v2717
          %v2719 = vpop.f32.mrb[0].mxu0
          %2720 = vmatprep.mubr.f32.mxu0 0.0
          %2721 = vmatmul.mubr.f32.gmra.mrb[0].mxu0 %v2445
          %v2722 = vpop.f32.mrb[0].mxu0
          %v2723 = vadd.f32 0.0, %v2722
          %v2724 = vpop.f32.mrb[0].mxu0
          %2725 = vmatprep.mubr.f32.mxu0 0.0
          %2726 = vmatmul.mubr.f32.gmra.mrb[0].mxu0 %v2448
          %v2727 = vpop.f32.mrb[0].mxu0
          %v2728 = vadd.f32 0.0, %v2727
          %v2729 = vpop.f32.mrb[0].mxu0
          %2730 = vmatprep.mubr.f32.mxu0 0.0
          %2731 = vmatmul.mubr.f32.gmra.mrb[0].mxu0 %v2451
          %v2732 = vpop.f32.mrb[0].mxu0
          %v2733 = vadd.f32 0.0, %v2732
          %v2734 = vpop.f32.mrb[0].mxu0
          %2735 = vmatprep.mubr.f32.mxu0 0.0
          %2736 = vmatmul.mubr.f32.gmra.mrb[0].mxu0 %v2454
          %v2737 = vpop.f32.mrb[0].mxu0
          %v2738 = vadd.f32 0.0, %v2737
          %v2739 = vpop.f32.mrb[0].mxu0
          %2740 = vmatprep.mubr.f32.mxu0 0.0
          %2741 = vmatmul.mubr.f32.gmra.mrb[0].mxu0 %v2457
          %v2742 = vpop.f32.mrb[0].mxu0
          %v2743 = vadd.f32 0.0, %v2742
          %v2744 = vpop.f32.mrb[0].mxu0
          %2745 = vmatprep.mubr.f32.mxu0 0.0
          %2746 = vmatmul.mubr.f32.gmra.mrb[0].mxu0 %v2460
          %v2747 = vpop.f32.mrb[0].mxu0
          %v2748 = vadd.f32 0.0, %v2747
          %v2749 = vpop.f32.mrb[0].mxu0
          %2750 = vmatprep.mubr.f32.mxu0 0.0
          %2751 = vmatmul.mubr.f32.gmra.mrb[0].mxu0 %v2463
          %v2752 = vpop.f32.mrb[0].mxu0
          %v2753 = vadd.f32 0.0, %v2752
          %v2754 = vpop.f32.mrb[0].mxu0
          %2755 = vmatprep.mubr.f32.mxu0 0.0
          %2756 = vmatmul.mubr.f32.gmra.mrb[0].mxu0 %v2466
          %v2757 = vpop.f32.mrb[0].mxu0
          %v2758 = vadd.f32 0.0, %v2757
          %v2759 = vpop.f32.mrb[0].mxu0
          %2760 = vmatprep.mubr.f32.mxu0 0.0
          %2761 = vmatmul.mubr.f32.gmra.mrb[0].mxu0 %v2469
          %v2762 = vpop.f32.mrb[0].mxu0
          %v2763 = vadd.f32 0.0, %v2762
          %v2764 = vpop.f32.mrb[0].mxu0
          %2765 = vmatprep.mubr.f32.mxu0 0.0
          %2766 = vmatmul.mubr.f32.gmra.mrb[0].mxu0 %v2472
          %v2767 = vpop.f32.mrb[0].mxu0
          %v2768 = vadd.f32 0.0, %v2767
          %v2769 = vpop.f32.mrb[0].mxu0
          %2770 = vmatprep.mubr.f32.mxu0 0.0
          %2771 = vmatmul.mubr.f32.gmra.mrb[0].mxu0 %v2475
          %v2772 = vpop.f32.mrb[0].mxu0
          %v2773 = vadd.f32 0.0, %v2772
          %v2774 = vpop.f32.mrb[0].mxu0
          %2775 = vmatprep.mubr.f32.mxu0 0.0
          %2776 = vmatmul.mubr.f32.gmra.mrb[0].mxu0 %v2478
          %v2777 = vpop.f32.mrb[0].mxu0
          %v2778 = vadd.f32 0.0, %v2777
          %v2779 = vpop.f32.mrb[0].mxu0
          %2780 = vmatprep.mubr.f32.mxu0 0.0
          %2781 = vmatmul.mubr.f32.gmra.mrb[0].mxu0 %v2481
          %v2782 = vpop.f32.mrb[0].mxu0
          %v2783 = vadd.f32 0.0, %v2782
          %v2784 = vpop.f32.mrb[0].mxu0
          %2785 = vmatprep.mubr.f32.mxu0 0.0
          %2786 = vmatmul.mubr.f32.gmra.mrb[0].mxu0 %v2484
          %v2787 = vpop.f32.mrb[0].mxu0
          %v2788 = vadd.f32 0.0, %v2787
          %v2789 = vpop.f32.mrb[0].mxu0
          %2790 = vmatprep.mubr.f32.mxu0 0.0
          %2791 = vmatmul.mubr.f32.gmra.mrb[0].mxu0 %v2487
          %v2792 = vpop.f32.mrb[0].mxu0
          %v2793 = vadd.f32 0.0, %v2792
          %v2794 = vpop.f32.mrb[0].mxu0
          %2795 = vmatprep.mubr.f32.mxu0 0.0
          %2796 = vmatmul.mubr.f32.gmra.mrb[0].mxu0 %v2490
          %v2797 = vpop.f32.mrb[0].mxu0
          %v2798 = vadd.f32 0.0, %v2797
          %v2799 = vpop.f32.mrb[0].mxu0
          %2800 = vmatprep.mubr.f32.mxu0 0.0
          %2801 = vmatmul.mubr.f32.gmra.mrb[0].mxu0 %v2493
          %v2802 = vpop.f32.mrb[0].mxu0
          %v2803 = vadd.f32 0.0, %v2802
          %v2804 = vpop.f32.mrb[0].mxu0
          %2805 = vmatprep.mubr.f32.mxu0 0.0
          %2806 = vmatmul.mubr.f32.gmra.mrb[0].mxu0 %v2496
          %v2807 = vpop.f32.mrb[0].mxu0
          %v2808 = vadd.f32 0.0, %v2807
          %v2809 = vpop.f32.mrb[0].mxu0
          %2810 = vmatprep.mubr.f32.mxu0 0.0
          %2811 = vmatmul.mubr.f32.gmra.mrb[0].mxu0 %v2499
          %v2812 = vpop.f32.mrb[0].mxu0
          %v2813 = vadd.f32 0.0, %v2812
          %v2814 = vpop.f32.mrb[0].mxu0
          %2815 = vmatprep.mubr.f32.mxu0 0.0
          %2816 = vmatmul.mubr.f32.gmra.mrb[0].mxu0 %v2502
          %v2817 = vpop.f32.mrb[0].mxu0
          %v2818 = vadd.f32 0.0, %v2817
          %v2819 = vpop.f32.mrb[0].mxu0
          %2820 = vmatprep.mubr.f32.mxu0 0.0
          %2821 = vmatmul.mubr.f32.gmra.mrb[0].mxu0 %v2505
          %v2822 = vpop.f32.mrb[0].mxu0
          %v2823 = vadd.f32 0.0, %v2822
          %v2824 = vpop.f32.mrb[0].mxu0
          %2825 = vmatprep.mubr.f32.mxu0 0.0
          %2826 = vmatmul.mubr.f32.gmra.mrb[0].mxu0 %v2508
          %v2827 = vpop.f32.mrb[0].mxu0
          %v2828 = vadd.f32 0.0, %v2827
          %v2829 = vpop.f32.mrb[0].mxu0
          %2830 = vmatprep.mubr.f32.mxu0 0.0
          %2831 = vmatmul.mubr.f32.gmra.mrb[0].mxu0 %v2511
          %v2832 = vpop.f32.mrb[0].mxu0
          %v2833 = vadd.f32 0.0, %v2832
          %v2834 = vpop.f32.mrb[0].mxu0
          %2835 = vmatprep.mubr.f32.mxu0 0.0
          %2836 = vmatmul.mubr.f32.gmra.mrb[0].mxu0 %v2514
          %v2837 = vpop.f32.mrb[0].mxu0
          %v2838 = vadd.f32 0.0, %v2837
          %v2839 = vpop.f32.mrb[0].mxu0
          %2840 = vmatprep.mubr.f32.mxu0 0.0
          %2841 = vmatmul.mubr.f32.gmra.mrb[0].mxu0 %v2517
          %v2842 = vpop.f32.mrb[0].mxu0
          %v2843 = vadd.f32 0.0, %v2842
          %v2844 = vpop.f32.mrb[0].mxu0
          %2845 = vmatprep.mubr.f32.mxu0 0.0
          %2846 = vmatmul.mubr.f32.gmra.mrb[0].mxu0 %v2520
          %v2847 = vpop.f32.mrb[0].mxu0
          %v2848 = vadd.f32 0.0, %v2847
          %v2849 = vpop.f32.mrb[0].mxu0
          %2850 = vmatprep.mubr.f32.mxu0 0.0
          %2851 = vmatmul.mubr.f32.gmra.mrb[0].mxu0 %v2523
          %v2852 = vpop.f32.mrb[0].mxu0
          %v2853 = vadd.f32 0.0, %v2852
          %v2854 = vpop.f32.mrb[0].mxu0
          %2855 = vmatprep.mubr.f32.mxu0 0.0
          %2856 = vmatmul.mubr.f32.gmra.mrb[0].mxu0 %v2526
          %v2857 = vpop.f32.mrb[0].mxu0
          %v2858 = vadd.f32 0.0, %v2857
          %v2859 = vpop.f32.mrb[0].mxu0
          %2860 = vmatprep.mubr.f32.mxu0 0.0
          %2861 = vmatmul.mubr.f32.gmra.mrb[0].mxu0 %v2529
          %v2862 = vpop.f32.mrb[0].mxu0
          %v2863 = vadd.f32 0.0, %v2862
          %v2864 = vpop.f32.mrb[0].mxu0
          %2865 = vmatprep.mubr.f32.mxu0 0.0
          %2866 = vmatmul.mubr.f32.gmra.mrb[0].mxu0 %v2532
          %v2867 = vpop.f32.mrb[0].mxu0
          %v2868 = vadd.f32 0.0, %v2867
          %v2869 = vpop.f32.mrb[0].mxu0
          %2870 = vmatprep.mubr.f32.mxu0 0.0
          %2871 = vmatmul.mubr.f32.gmra.mrb[0].mxu0 %v2535
          %v2872 = vpop.f32.mrb[0].mxu0
          %v2873 = vadd.f32 0.0, %v2872
          %v2874 = vpop.f32.mrb[0].mxu0
          %2875 = vmatprep.mubr.f32.mxu0 0.0
          %2876 = vmatmul.mubr.f32.gmra.mrb[0].mxu0 %v2538
          %v2877 = vpop.f32.mrb[0].mxu0
          %v2878 = vadd.f32 0.0, %v2877
          %v2879 = vpop.f32.mrb[0].mxu0
          %2880 = vmatprep.mubr.f32.mxu0 0.0
          %2881 = vmatmul.mubr.f32.gmra.mrb[0].mxu0 %v2541
          %v2882 = vpop.f32.mrb[0].mxu0
          %v2883 = vadd.f32 0.0, %v2882
          %v2884 = vpop.f32.mrb[0].mxu0
          %2885 = vmatprep.mubr.f32.mxu0 0.0
          %2886 = vmatmul.mubr.f32.gmra.mrb[0].mxu0 %v2544
          %v2887 = vpop.f32.mrb[0].mxu0
          %v2888 = vadd.f32 0.0, %v2887
          %v2889 = vpop.f32.mrb[0].mxu0
          %2890 = vmatprep.mubr.f32.mxu0 0.0
          %2891 = vmatmul.mubr.f32.gmra.mrb[0].mxu0 %v2547
          %v2892 = vpop.f32.mrb[0].mxu0
          %v2893 = vadd.f32 0.0, %v2892
          %v2894 = vpop.f32.mrb[0].mxu0
          %2895 = vmatprep.mubr.f32.mxu0 0.0
          %2896 = vmatmul.mubr.f32.gmra.mrb[0].mxu0 %v2550
          %v2897 = vpop.f32.mrb[0].mxu0
          %v2898 = vadd.f32 0.0, %v2897
          %v2899 = vpop.f32.mrb[0].mxu0
          %2900 = vmatprep.mubr.f32.mxu0 0.0
          %2901 = vmatmul.mubr.f32.gmra.mrb[0].mxu0 %v2553
          %v2902 = vpop.f32.mrb[0].mxu0
          %v2903 = vadd.f32 0.0, %v2902
          %v2904 = vpop.f32.mrb[0].mxu0
          %2905 = vmatprep.mubr.f32.mxu0 0.0
          %2906 = vmatmul.mubr.f32.gmra.mrb[0].mxu0 %v2556
          %v2907 = vpop.f32.mrb[0].mxu0
          %v2908 = vadd.f32 0.0, %v2907
          %v2909 = vpop.f32.mrb[0].mxu0
          %2910 = vmatprep.mubr.f32.mxu0 0.0
          %2911 = vmatmul.mubr.f32.gmra.mrb[0].mxu0 %v2559
          %v2912 = vpop.f32.mrb[0].mxu0
          %v2913 = vadd.f32 0.0, %v2912
          %v2914 = vpop.f32.mrb[0].mxu0
          %2915 = vmatprep.mubr.f32.mxu0 0.0
          %2916 = vmatmul.mubr.f32.gmra.mrb[0].mxu0 %v2562
          %v2917 = vpop.f32.mrb[0].mxu0
          %v2918 = vadd.f32 0.0, %v2917
          %v2919 = vpop.f32.mrb[0].mxu0
          %2920 = vmatprep.mubr.f32.mxu0 0.0
          %2921 = vmatmul.mubr.f32.gmra.mrb[0].mxu0 %v2565
          %v2922 = vpop.f32.mrb[0].mxu0
          %v2923 = vadd.f32 0.0, %v2922
          %v2924 = vpop.f32.mrb[0].mxu0
          %2925 = vmatprep.mubr.f32.mxu0 0.0
          %2926 = vmatmul.mubr.f32.gmra.mrb[0].mxu0 %v2568
          %v2927 = vpop.f32.mrb[0].mxu0
          %v2928 = vadd.f32 0.0, %v2927
          %v2929 = vpop.f32.mrb[0].mxu0
          %2930 = vmatprep.mubr.f32.mxu0 0.0
          %2931 = vmatmul.mubr.f32.gmra.mrb[0].mxu0 %v2571
          %v2932 = vpop.f32.mrb[0].mxu0
          %v2933 = vadd.f32 0.0, %v2932
          %v2934 = vpop.f32.mrb[0].mxu0
          %2935 = vmatprep.mubr.f32.mxu0 0.0
          %2936 = vmatmul.mubr.f32.gmra.mrb[0].mxu0 %v2574
          %v2937 = vpop.f32.mrb[0].mxu0
          %v2938 = vadd.f32 0.0, %v2937
          %v2939 = vpop.f32.mrb[0].mxu0
          %2940 = vmatprep.mubr.f32.mxu0 0.0
          %2941 = vmatmul.mubr.f32.gmra.mrb[0].mxu0 %v2577
          %v2942 = vpop.f32.mrb[0].mxu0
          %v2943 = vadd.f32 0.0, %v2942
          %v2944 = vpop.f32.mrb[0].mxu0
          %2945 = vmatprep.mubr.f32.mxu0 0.0
          %2946 = vmatmul.mubr.f32.gmra.mrb[0].mxu0 %v2580
          %v2947 = vpop.f32.mrb[0].mxu0
          %v2948 = vadd.f32 0.0, %v2947
          %v2949 = vpop.f32.mrb[0].mxu0
          %2950 = vmatprep.mubr.f32.mxu0 0.0
          %2951 = vmatmul.mubr.f32.gmra.mrb[0].mxu0 %v2583
          %v2952 = vpop.f32.mrb[0].mxu0
          %v2953 = vadd.f32 0.0, %v2952
          %v2954 = vpop.f32.mrb[0].mxu0
          %2955 = vmatprep.mubr.f32.mxu0 0.0
          %2956 = vmatmul.mubr.f32.gmra.mrb[0].mxu0 %v2586
          %v2957 = vpop.f32.mrb[0].mxu0
          %v2958 = vadd.f32 0.0, %v2957
          %v2959 = vpop.f32.mrb[0].mxu0
          %2960 = vmatprep.mubr.f32.mxu0 0.0
          %2961 = vmatmul.mubr.f32.gmra.mrb[0].mxu0 %v2589
          %v2962 = vpop.f32.mrb[0].mxu0
          %v2963 = vadd.f32 0.0, %v2962
          %v2964 = vpop.f32.mrb[0].mxu0
          %2965 = vmatprep.mubr.f32.mxu0 0.0
          %2966 = vmatmul.mubr.f32.gmra.mrb[0].mxu0 %v2592
          %v2967 = vpop.f32.mrb[0].mxu0
          %v2968 = vadd.f32 0.0, %v2967
          %v2969 = vpop.f32.mrb[0].mxu0
          %2970 = vmatprep.mubr.f32.mxu0 0.0
          %2971 = vmatmul.mubr.f32.gmra.mrb[0].mxu0 %v2595
          %v2972 = vpop.f32.mrb[0].mxu0
          %v2973 = vadd.f32 0.0, %v2972
          %v2974 = vpop.f32.mrb[0].mxu0
          %2975 = vmatprep.mubr.f32.mxu0 0.0
          %2976 = vmatmul.mubr.f32.gmra.mrb[0].mxu0 %v2598
          %v2977 = vpop.f32.mrb[0].mxu0
          %v2978 = vadd.f32 0.0, %v2977
          %v2979 = vpop.f32.mrb[0].mxu0
          %2980 = vmatprep.mubr.f32.mxu0 0.0
          %2981 = vmatmul.mubr.f32.gmra.mrb[0].mxu0 %v2601
          %v2982 = vpop.f32.mrb[0].mxu0
          %v2983 = vadd.f32 0.0, %v2982
          %v2984 = vpop.f32.mrb[0].mxu0
          %2985 = vmatprep.mubr.f32.mxu0 0.0
          %2986 = vmatmul.mubr.f32.gmra.mrb[0].mxu0 %v2604
          %v2987 = vpop.f32.mrb[0].mxu0
          %v2988 = vadd.f32 0.0, %v2987
          %v2989 = vpop.f32.mrb[0].mxu0
          %2990 = vdwg.mxu0
          %v2991 = vadd.f32 %v2030, %v2673
          %v2992 = vadd.f32 %v2035, %v2678
          %v2993 = vadd.f32 %v2040, %v2683
          %v2994 = vadd.f32 %v2045, %v2688
          %v2995 = vadd.f32 %v2050, %v2693
          %v2996 = vadd.f32 %v2055, %v2698
          %v2997 = vadd.f32 %v2060, %v2703
          %v2998 = vadd.f32 %v2065, %v2708
          %v2999 = vadd.f32 %v2070, %v2713
          %v3000 = vadd.f32 %v2075, %v2718
          %v3001 = vadd.f32 %v2080, %v2723
          %v3002 = vadd.f32 %v2085, %v2728
          %v3003 = vadd.f32 %v2090, %v2733
          %v3004 = vadd.f32 %v2095, %v2738
          %v3005 = vadd.f32 %v2100, %v2743
          %v3006 = vadd.f32 %v2105, %v2748
          %v3007 = vadd.f32 %v2110, %v2753
          %v3008 = vadd.f32 %v2115, %v2758
          %v3009 = vadd.f32 %v2120, %v2763
          %v3010 = vadd.f32 %v2125, %v2768
          %v3011 = vadd.f32 %v2130, %v2773
          %v3012 = vadd.f32 %v2135, %v2778
          %v3013 = vadd.f32 %v2140, %v2783
          %v3014 = vadd.f32 %v2145, %v2788
          %v3015 = vadd.f32 %v2150, %v2793
          %v3016 = vadd.f32 %v2155, %v2798
          %v3017 = vadd.f32 %v2160, %v2803
          %v3018 = vadd.f32 %v2165, %v2808
          %v3019 = vadd.f32 %v2170, %v2813
          %v3020 = vadd.f32 %v2175, %v2818
          %v3021 = vadd.f32 %v2180, %v2823
          %v3022 = vadd.f32 %v2185, %v2828
          %v3023 = vadd.f32 %v2190, %v2833
          %v3024 = vadd.f32 %v2195, %v2838
          %v3025 = vadd.f32 %v2200, %v2843
          %v3026 = vadd.f32 %v2205, %v2848
          %v3027 = vadd.f32 %v2210, %v2853
          %v3028 = vadd.f32 %v2215, %v2858
          %v3029 = vadd.f32 %v2220, %v2863
          %v3030 = vadd.f32 %v2225, %v2868
          %v3031 = vadd.f32 %v2230, %v2873
          %v3032 = vadd.f32 %v2235, %v2878
          %v3033 = vadd.f32 %v2240, %v2883
          %v3034 = vadd.f32 %v2245, %v2888
          %v3035 = vadd.f32 %v2250, %v2893
          %v3036 = vadd.f32 %v2255, %v2898
          %v3037 = vadd.f32 %v2260, %v2903
          %v3038 = vadd.f32 %v2265, %v2908
          %v3039 = vadd.f32 %v2270, %v2913
          %v3040 = vadd.f32 %v2275, %v2918
          %v3041 = vadd.f32 %v2280, %v2923
          %v3042 = vadd.f32 %v2285, %v2928
          %v3043 = vadd.f32 %v2290, %v2933
          %v3044 = vadd.f32 %v2295, %v2938
          %v3045 = vadd.f32 %v2300, %v2943
          %v3046 = vadd.f32 %v2305, %v2948
          %v3047 = vadd.f32 %v2310, %v2953
          %v3048 = vadd.f32 %v2315, %v2958
          %v3049 = vadd.f32 %v2320, %v2963
          %v3050 = vadd.f32 %v2325, %v2968
          %v3051 = vadd.f32 %v2330, %v2973
          %v3052 = vadd.f32 %v2335, %v2978
          %v3053 = vadd.f32 %v2340, %v2983
          %v3054 = vadd.f32 %v2345, %v2988
          %3055 = vadd.xlane.f32.xlu0 %v2991
          %v3056 = vpop.xlane.xlu0 %3055
          %3057 = vadd.xlane.f32.xlu0 %v2992
          %v3058 = vpop.xlane.xlu0 %3057
          %3059 = vadd.xlane.f32.xlu0 %v2993
          %v3060 = vpop.xlane.xlu0 %3059
          %3061 = vadd.xlane.f32.xlu0 %v2994
          %v3062 = vpop.xlane.xlu0 %3061
          %3063 = vadd.xlane.f32.xlu0 %v2995
          %v3064 = vpop.xlane.xlu0 %3063
          %3065 = vadd.xlane.f32.xlu0 %v2996
          %v3066 = vpop.xlane.xlu0 %3065
          %3067 = vadd.xlane.f32.xlu0 %v2997
          %v3068 = vpop.xlane.xlu0 %3067
          %3069 = vadd.xlane.f32.xlu0 %v2998
          %v3070 = vpop.xlane.xlu0 %3069
          %3071 = vadd.xlane.f32.xlu0 %v2999
          %v3072 = vpop.xlane.xlu0 %3071
          %3073 = vadd.xlane.f32.xlu0 %v3000
          %v3074 = vpop.xlane.xlu0 %3073
          %3075 = vadd.xlane.f32.xlu0 %v3001
          %v3076 = vpop.xlane.xlu0 %3075
          %3077 = vadd.xlane.f32.xlu0 %v3002
          %v3078 = vpop.xlane.xlu0 %3077
          %3079 = vadd.xlane.f32.xlu0 %v3003
          %v3080 = vpop.xlane.xlu0 %3079
          %3081 = vadd.xlane.f32.xlu0 %v3004
          %v3082 = vpop.xlane.xlu0 %3081
          %3083 = vadd.xlane.f32.xlu0 %v3005
          %v3084 = vpop.xlane.xlu0 %3083
          %3085 = vadd.xlane.f32.xlu0 %v3006
          %v3086 = vpop.xlane.xlu0 %3085
          %3087 = vadd.xlane.f32.xlu0 %v3007
          %v3088 = vpop.xlane.xlu0 %3087
          %3089 = vadd.xlane.f32.xlu0 %v3008
          %v3090 = vpop.xlane.xlu0 %3089
          %3091 = vadd.xlane.f32.xlu0 %v3009
          %v3092 = vpop.xlane.xlu0 %3091
          %3093 = vadd.xlane.f32.xlu0 %v3010
          %v3094 = vpop.xlane.xlu0 %3093
          %3095 = vadd.xlane.f32.xlu0 %v3011
          %v3096 = vpop.xlane.xlu0 %3095
          %3097 = vadd.xlane.f32.xlu0 %v3012
          %v3098 = vpop.xlane.xlu0 %3097
          %3099 = vadd.xlane.f32.xlu0 %v3013
          %v3100 = vpop.xlane.xlu0 %3099
          %3101 = vadd.xlane.f32.xlu0 %v3014
          %v3102 = vpop.xlane.xlu0 %3101
          %3103 = vadd.xlane.f32.xlu0 %v3015
          %v3104 = vpop.xlane.xlu0 %3103
          %3105 = vadd.xlane.f32.xlu0 %v3016
          %v3106 = vpop.xlane.xlu0 %3105
          %3107 = vadd.xlane.f32.xlu0 %v3017
          %v3108 = vpop.xlane.xlu0 %3107
          %3109 = vadd.xlane.f32.xlu0 %v3018
          %v3110 = vpop.xlane.xlu0 %3109
          %3111 = vadd.xlane.f32.xlu0 %v3019
          %v3112 = vpop.xlane.xlu0 %3111
          %3113 = vadd.xlane.f32.xlu0 %v3020
          %v3114 = vpop.xlane.xlu0 %3113
          %3115 = vadd.xlane.f32.xlu0 %v3021
          %v3116 = vpop.xlane.xlu0 %3115
          %3117 = vadd.xlane.f32.xlu0 %v3022
          %v3118 = vpop.xlane.xlu0 %3117
          %3119 = vadd.xlane.f32.xlu0 %v3023
          %v3120 = vpop.xlane.xlu0 %3119
          %3121 = vadd.xlane.f32.xlu0 %v3024
          %v3122 = vpop.xlane.xlu0 %3121
          %3123 = vadd.xlane.f32.xlu0 %v3025
          %v3124 = vpop.xlane.xlu0 %3123
          %3125 = vadd.xlane.f32.xlu0 %v3026
          %v3126 = vpop.xlane.xlu0 %3125
          %3127 = vadd.xlane.f32.xlu0 %v3027
          %v3128 = vpop.xlane.xlu0 %3127
          %3129 = vadd.xlane.f32.xlu0 %v3028
          %v3130 = vpop.xlane.xlu0 %3129
          %3131 = vadd.xlane.f32.xlu0 %v3029
          %v3132 = vpop.xlane.xlu0 %3131
          %3133 = vadd.xlane.f32.xlu0 %v3030
          %v3134 = vpop.xlane.xlu0 %3133
          %3135 = vadd.xlane.f32.xlu0 %v3031
          %v3136 = vpop.xlane.xlu0 %3135
          %3137 = vadd.xlane.f32.xlu0 %v3032
          %v3138 = vpop.xlane.xlu0 %3137
          %3139 = vadd.xlane.f32.xlu0 %v3033
          %v3140 = vpop.xlane.xlu0 %3139
          %3141 = vadd.xlane.f32.xlu0 %v3034
          %v3142 = vpop.xlane.xlu0 %3141
          %3143 = vadd.xlane.f32.xlu0 %v3035
          %v3144 = vpop.xlane.xlu0 %3143
          %3145 = vadd.xlane.f32.xlu0 %v3036
          %v3146 = vpop.xlane.xlu0 %3145
          %3147 = vadd.xlane.f32.xlu0 %v3037
          %v3148 = vpop.xlane.xlu0 %3147
          %3149 = vadd.xlane.f32.xlu0 %v3038
          %v3150 = vpop.xlane.xlu0 %3149
          %3151 = vadd.xlane.f32.xlu0 %v3039
          %v3152 = vpop.xlane.xlu0 %3151
          %3153 = vadd.xlane.f32.xlu0 %v3040
          %v3154 = vpop.xlane.xlu0 %3153
          %3155 = vadd.xlane.f32.xlu0 %v3041
          %v3156 = vpop.xlane.xlu0 %3155
          %3157 = vadd.xlane.f32.xlu0 %v3042
          %v3158 = vpop.xlane.xlu0 %3157
          %3159 = vadd.xlane.f32.xlu0 %v3043
          %v3160 = vpop.xlane.xlu0 %3159
          %3161 = vadd.xlane.f32.xlu0 %v3044
          %v3162 = vpop.xlane.xlu0 %3161
          %3163 = vadd.xlane.f32.xlu0 %v3045
          %v3164 = vpop.xlane.xlu0 %3163
          %3165 = vadd.xlane.f32.xlu0 %v3046
          %v3166 = vpop.xlane.xlu0 %3165
          %3167 = vadd.xlane.f32.xlu0 %v3047
          %v3168 = vpop.xlane.xlu0 %3167
          %3169 = vadd.xlane.f32.xlu0 %v3048
          %v3170 = vpop.xlane.xlu0 %3169
          %3171 = vadd.xlane.f32.xlu0 %v3049
          %v3172 = vpop.xlane.xlu0 %3171
          %3173 = vadd.xlane.f32.xlu0 %v3050
          %v3174 = vpop.xlane.xlu0 %3173
          %3175 = vadd.xlane.f32.xlu0 %v3051
          %v3176 = vpop.xlane.xlu0 %3175
          %3177 = vadd.xlane.f32.xlu0 %v3052
          %v3178 = vpop.xlane.xlu0 %3177
          %3179 = vadd.xlane.f32.xlu0 %v3053
          %v3180 = vpop.xlane.xlu0 %3179
          %3181 = vadd.xlane.f32.xlu0 %v3054
          %v3182 = vpop.xlane.xlu0 %3181
          %v3183 = vrcp.pop 128.0
          %v3184 = vmul.f32 %v3056, %v3183
          %v3185 = vmul.f32 %v3058, %v3183
          %v3186 = vmul.f32 %v3060, %v3183
          %v3187 = vmul.f32 %v3062, %v3183
          %v3188 = vmul.f32 %v3064, %v3183
          %v3189 = vmul.f32 %v3066, %v3183
          %v3190 = vmul.f32 %v3068, %v3183
          %v3191 = vmul.f32 %v3070, %v3183
          %v3192 = vmul.f32 %v3072, %v3183
          %v3193 = vmul.f32 %v3074, %v3183
          %v3194 = vmul.f32 %v3076, %v3183
          %v3195 = vmul.f32 %v3078, %v3183
          %v3196 = vmul.f32 %v3080, %v3183
          %v3197 = vmul.f32 %v3082, %v3183
          %v3198 = vmul.f32 %v3084, %v3183
          %v3199 = vmul.f32 %v3086, %v3183
          %v3200 = vmul.f32 %v3088, %v3183
          %v3201 = vmul.f32 %v3090, %v3183
          %v3202 = vmul.f32 %v3092, %v3183
          %v3203 = vmul.f32 %v3094, %v3183
          %v3204 = vmul.f32 %v3096, %v3183
          %v3205 = vmul.f32 %v3098, %v3183
          %v3206 = vmul.f32 %v3100, %v3183
          %v3207 = vmul.f32 %v3102, %v3183
          %v3208 = vmul.f32 %v3104, %v3183
          %v3209 = vmul.f32 %v3106, %v3183
          %v3210 = vmul.f32 %v3108, %v3183
          %v3211 = vmul.f32 %v3110, %v3183
          %v3212 = vmul.f32 %v3112, %v3183
          %v3213 = vmul.f32 %v3114, %v3183
          %v3214 = vmul.f32 %v3116, %v3183
          %v3215 = vmul.f32 %v3118, %v3183
          %v3216 = vmul.f32 %v3120, %v3183
          %v3217 = vmul.f32 %v3122, %v3183
          %v3218 = vmul.f32 %v3124, %v3183
          %v3219 = vmul.f32 %v3126, %v3183
          %v3220 = vmul.f32 %v3128, %v3183
          %v3221 = vmul.f32 %v3130, %v3183
          %v3222 = vmul.f32 %v3132, %v3183
          %v3223 = vmul.f32 %v3134, %v3183
          %v3224 = vmul.f32 %v3136, %v3183
          %v3225 = vmul.f32 %v3138, %v3183
          %v3226 = vmul.f32 %v3140, %v3183
          %v3227 = vmul.f32 %v3142, %v3183
          %v3228 = vmul.f32 %v3144, %v3183
          %v3229 = vmul.f32 %v3146, %v3183
          %v3230 = vmul.f32 %v3148, %v3183
          %v3231 = vmul.f32 %v3150, %v3183
          %v3232 = vmul.f32 %v3152, %v3183
          %v3233 = vmul.f32 %v3154, %v3183
          %v3234 = vmul.f32 %v3156, %v3183
          %v3235 = vmul.f32 %v3158, %v3183
          %v3236 = vmul.f32 %v3160, %v3183
          %v3237 = vmul.f32 %v3162, %v3183
          %v3238 = vmul.f32 %v3164, %v3183
          %v3239 = vmul.f32 %v3166, %v3183
          %v3240 = vmul.f32 %v3168, %v3183
          %v3241 = vmul.f32 %v3170, %v3183
          %v3242 = vmul.f32 %v3172, %v3183
          %v3243 = vmul.f32 %v3174, %v3183
          %v3244 = vmul.f32 %v3176, %v3183
          %v3245 = vmul.f32 %v3178, %v3183
          %v3246 = vmul.f32 %v3180, %v3183
          %v3247 = vmul.f32 %v3182, %v3183
          %v3248 = vmul.f32 %v2991, %v2991
          %v3249 = vmul.f32 %v2992, %v2992
          %v3250 = vmul.f32 %v2993, %v2993
          %v3251 = vmul.f32 %v2994, %v2994
          %v3252 = vmul.f32 %v2995, %v2995
          %v3253 = vmul.f32 %v2996, %v2996
          %v3254 = vmul.f32 %v2997, %v2997
          %v3255 = vmul.f32 %v2998, %v2998
          %v3256 = vmul.f32 %v2999, %v2999
          %v3257 = vmul.f32 %v3000, %v3000
          %v3258 = vmul.f32 %v3001, %v3001
          %v3259 = vmul.f32 %v3002, %v3002
          %v3260 = vmul.f32 %v3003, %v3003
          %v3261 = vmul.f32 %v3004, %v3004
          %v3262 = vmul.f32 %v3005, %v3005
          %v3263 = vmul.f32 %v3006, %v3006
          %v3264 = vmul.f32 %v3007, %v3007
          %v3265 = vmul.f32 %v3008, %v3008
          %v3266 = vmul.f32 %v3009, %v3009
          %v3267 = vmul.f32 %v3010, %v3010
          %v3268 = vmul.f32 %v3011, %v3011
          %v3269 = vmul.f32 %v3012, %v3012
          %v3270 = vmul.f32 %v3013, %v3013
          %v3271 = vmul.f32 %v3014, %v3014
          %v3272 = vmul.f32 %v3015, %v3015
          %v3273 = vmul.f32 %v3016, %v3016
          %v3274 = vmul.f32 %v3017, %v3017
          %v3275 = vmul.f32 %v3018, %v3018
          %v3276 = vmul.f32 %v3019, %v3019
          %v3277 = vmul.f32 %v3020, %v3020
          %v3278 = vmul.f32 %v3021, %v3021
          %v3279 = vmul.f32 %v3022, %v3022
          %v3280 = vmul.f32 %v3023, %v3023
          %v3281 = vmul.f32 %v3024, %v3024
          %v3282 = vmul.f32 %v3025, %v3025
          %v3283 = vmul.f32 %v3026, %v3026
          %v3284 = vmul.f32 %v3027, %v3027
          %v3285 = vmul.f32 %v3028, %v3028
          %v3286 = vmul.f32 %v3029, %v3029
          %v3287 = vmul.f32 %v3030, %v3030
          %v3288 = vmul.f32 %v3031, %v3031
          %v3289 = vmul.f32 %v3032, %v3032
          %v3290 = vmul.f32 %v3033, %v3033
          %v3291 = vmul.f32 %v3034, %v3034
          %v3292 = vmul.f32 %v3035, %v3035
          %v3293 = vmul.f32 %v3036, %v3036
          %v3294 = vmul.f32 %v3037, %v3037
          %v3295 = vmul.f32 %v3038, %v3038
          %v3296 = vmul.f32 %v3039, %v3039
          %v3297 = vmul.f32 %v3040, %v3040
          %v3298 = vmul.f32 %v3041, %v3041
          %v3299 = vmul.f32 %v3042, %v3042
          %v3300 = vmul.f32 %v3043, %v3043
          %v3301 = vmul.f32 %v3044, %v3044
          %v3302 = vmul.f32 %v3045, %v3045
          %v3303 = vmul.f32 %v3046, %v3046
          %v3304 = vmul.f32 %v3047, %v3047
          %v3305 = vmul.f32 %v3048, %v3048
          %v3306 = vmul.f32 %v3049, %v3049
          %v3307 = vmul.f32 %v3050, %v3050
          %v3308 = vmul.f32 %v3051, %v3051
          %v3309 = vmul.f32 %v3052, %v3052
          %v3310 = vmul.f32 %v3053, %v3053
          %v3311 = vmul.f32 %v3054, %v3054
          %3312 = vadd.xlane.f32.xlu0 %v3248
          %v3313 = vpop.xlane.xlu0 %3312
          %3314 = vadd.xlane.f32.xlu0 %v3249
          %v3315 = vpop.xlane.xlu0 %3314
          %3316 = vadd.xlane.f32.xlu0 %v3250
          %v3317 = vpop.xlane.xlu0 %3316
          %3318 = vadd.xlane.f32.xlu0 %v3251
          %v3319 = vpop.xlane.xlu0 %3318
          %3320 = vadd.xlane.f32.xlu0 %v3252
          %v3321 = vpop.xlane.xlu0 %3320
          %3322 = vadd.xlane.f32.xlu0 %v3253
          %v3323 = vpop.xlane.xlu0 %3322
          %3324 = vadd.xlane.f32.xlu0 %v3254
          %v3325 = vpop.xlane.xlu0 %3324
          %3326 = vadd.xlane.f32.xlu0 %v3255
          %v3327 = vpop.xlane.xlu0 %3326
          %3328 = vadd.xlane.f32.xlu0 %v3256
          %v3329 = vpop.xlane.xlu0 %3328
          %3330 = vadd.xlane.f32.xlu0 %v3257
          %v3331 = vpop.xlane.xlu0 %3330
          %3332 = vadd.xlane.f32.xlu0 %v3258
          %v3333 = vpop.xlane.xlu0 %3332
          %3334 = vadd.xlane.f32.xlu0 %v3259
          %v3335 = vpop.xlane.xlu0 %3334
          %3336 = vadd.xlane.f32.xlu0 %v3260
          %v3337 = vpop.xlane.xlu0 %3336
          %3338 = vadd.xlane.f32.xlu0 %v3261
          %v3339 = vpop.xlane.xlu0 %3338
          %3340 = vadd.xlane.f32.xlu0 %v3262
          %v3341 = vpop.xlane.xlu0 %3340
          %3342 = vadd.xlane.f32.xlu0 %v3263
          %v3343 = vpop.xlane.xlu0 %3342
          %3344 = vadd.xlane.f32.xlu0 %v3264
          %v3345 = vpop.xlane.xlu0 %3344
          %3346 = vadd.xlane.f32.xlu0 %v3265
          %v3347 = vpop.xlane.xlu0 %3346
          %3348 = vadd.xlane.f32.xlu0 %v3266
          %v3349 = vpop.xlane.xlu0 %3348
          %3350 = vadd.xlane.f32.xlu0 %v3267
          %v3351 = vpop.xlane.xlu0 %3350
          %3352 = vadd.xlane.f32.xlu0 %v3268
          %v3353 = vpop.xlane.xlu0 %3352
          %3354 = vadd.xlane.f32.xlu0 %v3269
          %v3355 = vpop.xlane.xlu0 %3354
          %3356 = vadd.xlane.f32.xlu0 %v3270
          %v3357 = vpop.xlane.xlu0 %3356
          %3358 = vadd.xlane.f32.xlu0 %v3271
          %v3359 = vpop.xlane.xlu0 %3358
          %3360 = vadd.xlane.f32.xlu0 %v3272
          %v3361 = vpop.xlane.xlu0 %3360
          %3362 = vadd.xlane.f32.xlu0 %v3273
          %v3363 = vpop.xlane.xlu0 %3362
          %3364 = vadd.xlane.f32.xlu0 %v3274
          %v3365 = vpop.xlane.xlu0 %3364
          %3366 = vadd.xlane.f32.xlu0 %v3275
          %v3367 = vpop.xlane.xlu0 %3366
          %3368 = vadd.xlane.f32.xlu0 %v3276
          %v3369 = vpop.xlane.xlu0 %3368
          %3370 = vadd.xlane.f32.xlu0 %v3277
          %v3371 = vpop.xlane.xlu0 %3370
          %3372 = vadd.xlane.f32.xlu0 %v3278
          %v3373 = vpop.xlane.xlu0 %3372
          %3374 = vadd.xlane.f32.xlu0 %v3279
          %v3375 = vpop.xlane.xlu0 %3374
          %3376 = vadd.xlane.f32.xlu0 %v3280
          %v3377 = vpop.xlane.xlu0 %3376
          %3378 = vadd.xlane.f32.xlu0 %v3281
          %v3379 = vpop.xlane.xlu0 %3378
          %3380 = vadd.xlane.f32.xlu0 %v3282
          %v3381 = vpop.xlane.xlu0 %3380
          %3382 = vadd.xlane.f32.xlu0 %v3283
          %v3383 = vpop.xlane.xlu0 %3382
          %3384 = vadd.xlane.f32.xlu0 %v3284
          %v3385 = vpop.xlane.xlu0 %3384
          %3386 = vadd.xlane.f32.xlu0 %v3285
          %v3387 = vpop.xlane.xlu0 %3386
          %3388 = vadd.xlane.f32.xlu0 %v3286
          %v3389 = vpop.xlane.xlu0 %3388
          %3390 = vadd.xlane.f32.xlu0 %v3287
          %v3391 = vpop.xlane.xlu0 %3390
          %3392 = vadd.xlane.f32.xlu0 %v3288
          %v3393 = vpop.xlane.xlu0 %3392
          %3394 = vadd.xlane.f32.xlu0 %v3289
          %v3395 = vpop.xlane.xlu0 %3394
          %3396 = vadd.xlane.f32.xlu0 %v3290
          %v3397 = vpop.xlane.xlu0 %3396
          %3398 = vadd.xlane.f32.xlu0 %v3291
          %v3399 = vpop.xlane.xlu0 %3398
          %3400 = vadd.xlane.f32.xlu0 %v3292
          %v3401 = vpop.xlane.xlu0 %3400
          %3402 = vadd.xlane.f32.xlu0 %v3293
          %v3403 = vpop.xlane.xlu0 %3402
          %3404 = vadd.xlane.f32.xlu0 %v3294
          %v3405 = vpop.xlane.xlu0 %3404
          %3406 = vadd.xlane.f32.xlu0 %v3295
          %v3407 = vpop.xlane.xlu0 %3406
          %3408 = vadd.xlane.f32.xlu0 %v3296
          %v3409 = vpop.xlane.xlu0 %3408
          %3410 = vadd.xlane.f32.xlu0 %v3297
          %v3411 = vpop.xlane.xlu0 %3410
          %3412 = vadd.xlane.f32.xlu0 %v3298
          %v3413 = vpop.xlane.xlu0 %3412
          %3414 = vadd.xlane.f32.xlu0 %v3299
          %v3415 = vpop.xlane.xlu0 %3414
          %3416 = vadd.xlane.f32.xlu0 %v3300
          %v3417 = vpop.xlane.xlu0 %3416
          %3418 = vadd.xlane.f32.xlu0 %v3301
          %v3419 = vpop.xlane.xlu0 %3418
          %3420 = vadd.xlane.f32.xlu0 %v3302
          %v3421 = vpop.xlane.xlu0 %3420
          %3422 = vadd.xlane.f32.xlu0 %v3303
          %v3423 = vpop.xlane.xlu0 %3422
          %3424 = vadd.xlane.f32.xlu0 %v3304
          %v3425 = vpop.xlane.xlu0 %3424
          %3426 = vadd.xlane.f32.xlu0 %v3305
          %v3427 = vpop.xlane.xlu0 %3426
          %3428 = vadd.xlane.f32.xlu0 %v3306
          %v3429 = vpop.xlane.xlu0 %3428
          %3430 = vadd.xlane.f32.xlu0 %v3307
          %v3431 = vpop.xlane.xlu0 %3430
          %3432 = vadd.xlane.f32.xlu0 %v3308
          %v3433 = vpop.xlane.xlu0 %3432
          %3434 = vadd.xlane.f32.xlu0 %v3309
          %v3435 = vpop.xlane.xlu0 %3434
          %3436 = vadd.xlane.f32.xlu0 %v3310
          %v3437 = vpop.xlane.xlu0 %3436
          %3438 = vadd.xlane.f32.xlu0 %v3311
          %v3439 = vpop.xlane.xlu0 %3438
          %v3440 = vmul.f32 %v3313, %v3183
          %v3441 = vmul.f32 %v3315, %v3183
          %v3442 = vmul.f32 %v3317, %v3183
          %v3443 = vmul.f32 %v3319, %v3183
          %v3444 = vmul.f32 %v3321, %v3183
          %v3445 = vmul.f32 %v3323, %v3183
          %v3446 = vmul.f32 %v3325, %v3183
          %v3447 = vmul.f32 %v3327, %v3183
          %v3448 = vmul.f32 %v3329, %v3183
          %v3449 = vmul.f32 %v3331, %v3183
          %v3450 = vmul.f32 %v3333, %v3183
          %v3451 = vmul.f32 %v3335, %v3183
          %v3452 = vmul.f32 %v3337, %v3183
          %v3453 = vmul.f32 %v3339, %v3183
          %v3454 = vmul.f32 %v3341, %v3183
          %v3455 = vmul.f32 %v3343, %v3183
          %v3456 = vmul.f32 %v3345, %v3183
          %v3457 = vmul.f32 %v3347, %v3183
          %v3458 = vmul.f32 %v3349, %v3183
          %v3459 = vmul.f32 %v3351, %v3183
          %v3460 = vmul.f32 %v3353, %v3183
          %v3461 = vmul.f32 %v3355, %v3183
          %v3462 = vmul.f32 %v3357, %v3183
          %v3463 = vmul.f32 %v3359, %v3183
          %v3464 = vmul.f32 %v3361, %v3183
          %v3465 = vmul.f32 %v3363, %v3183
          %v3466 = vmul.f32 %v3365, %v3183
          %v3467 = vmul.f32 %v3367, %v3183
          %v3468 = vmul.f32 %v3369, %v3183
          %v3469 = vmul.f32 %v3371, %v3183
          %v3470 = vmul.f32 %v3373, %v3183
          %v3471 = vmul.f32 %v3375, %v3183
          %v3472 = vmul.f32 %v3377, %v3183
          %v3473 = vmul.f32 %v3379, %v3183
          %v3474 = vmul.f32 %v3381, %v3183
          %v3475 = vmul.f32 %v3383, %v3183
          %v3476 = vmul.f32 %v3385, %v3183
          %v3477 = vmul.f32 %v3387, %v3183
          %v3478 = vmul.f32 %v3389, %v3183
          %v3479 = vmul.f32 %v3391, %v3183
          %v3480 = vmul.f32 %v3393, %v3183
          %v3481 = vmul.f32 %v3395, %v3183
          %v3482 = vmul.f32 %v3397, %v3183
          %v3483 = vmul.f32 %v3399, %v3183
          %v3484 = vmul.f32 %v3401, %v3183
          %v3485 = vmul.f32 %v3403, %v3183
          %v3486 = vmul.f32 %v3405, %v3183
          %v3487 = vmul.f32 %v3407, %v3183
          %v3488 = vmul.f32 %v3409, %v3183
          %v3489 = vmul.f32 %v3411, %v3183
          %v3490 = vmul.f32 %v3413, %v3183
          %v3491 = vmul.f32 %v3415, %v3183
          %v3492 = vmul.f32 %v3417, %v3183
          %v3493 = vmul.f32 %v3419, %v3183
          %v3494 = vmul.f32 %v3421, %v3183
          %v3495 = vmul.f32 %v3423, %v3183
          %v3496 = vmul.f32 %v3425, %v3183
          %v3497 = vmul.f32 %v3427, %v3183
          %v3498 = vmul.f32 %v3429, %v3183
          %v3499 = vmul.f32 %v3431, %v3183
          %v3500 = vmul.f32 %v3433, %v3183
          %v3501 = vmul.f32 %v3435, %v3183
          %v3502 = vmul.f32 %v3437, %v3183
          %v3503 = vmul.f32 %v3439, %v3183
          %v3504 = vmul.f32 %v3184, %v3184
          %v3505 = vmul.f32 %v3185, %v3185
          %v3506 = vmul.f32 %v3186, %v3186
          %v3507 = vmul.f32 %v3187, %v3187
          %v3508 = vmul.f32 %v3188, %v3188
          %v3509 = vmul.f32 %v3189, %v3189
          %v3510 = vmul.f32 %v3190, %v3190
          %v3511 = vmul.f32 %v3191, %v3191
          %v3512 = vmul.f32 %v3192, %v3192
          %v3513 = vmul.f32 %v3193, %v3193
          %v3514 = vmul.f32 %v3194, %v3194
          %v3515 = vmul.f32 %v3195, %v3195
          %v3516 = vmul.f32 %v3196, %v3196
          %v3517 = vmul.f32 %v3197, %v3197
          %v3518 = vmul.f32 %v3198, %v3198
          %v3519 = vmul.f32 %v3199, %v3199
          %v3520 = vmul.f32 %v3200, %v3200
          %v3521 = vmul.f32 %v3201, %v3201
          %v3522 = vmul.f32 %v3202, %v3202
          %v3523 = vmul.f32 %v3203, %v3203
          %v3524 = vmul.f32 %v3204, %v3204
          %v3525 = vmul.f32 %v3205, %v3205
          %v3526 = vmul.f32 %v3206, %v3206
          %v3527 = vmul.f32 %v3207, %v3207
          %v3528 = vmul.f32 %v3208, %v3208
          %v3529 = vmul.f32 %v3209, %v3209
          %v3530 = vmul.f32 %v3210, %v3210
          %v3531 = vmul.f32 %v3211, %v3211
          %v3532 = vmul.f32 %v3212, %v3212
          %v3533 = vmul.f32 %v3213, %v3213
          %v3534 = vmul.f32 %v3214, %v3214
          %v3535 = vmul.f32 %v3215, %v3215
          %v3536 = vmul.f32 %v3216, %v3216
          %v3537 = vmul.f32 %v3217, %v3217
          %v3538 = vmul.f32 %v3218, %v3218
          %v3539 = vmul.f32 %v3219, %v3219
          %v3540 = vmul.f32 %v3220, %v3220
          %v3541 = vmul.f32 %v3221, %v3221
          %v3542 = vmul.f32 %v3222, %v3222
          %v3543 = vmul.f32 %v3223, %v3223
          %v3544 = vmul.f32 %v3224, %v3224
          %v3545 = vmul.f32 %v3225, %v3225
          %v3546 = vmul.f32 %v3226, %v3226
          %v3547 = vmul.f32 %v3227, %v3227
          %v3548 = vmul.f32 %v3228, %v3228
          %v3549 = vmul.f32 %v3229, %v3229
          %v3550 = vmul.f32 %v3230, %v3230
          %v3551 = vmul.f32 %v3231, %v3231
          %v3552 = vmul.f32 %v3232, %v3232
          %v3553 = vmul.f32 %v3233, %v3233
          %v3554 = vmul.f32 %v3234, %v3234
          %v3555 = vmul.f32 %v3235, %v3235
          %v3556 = vmul.f32 %v3236, %v3236
          %v3557 = vmul.f32 %v3237, %v3237
          %v3558 = vmul.f32 %v3238, %v3238
          %v3559 = vmul.f32 %v3239, %v3239
          %v3560 = vmul.f32 %v3240, %v3240
          %v3561 = vmul.f32 %v3241, %v3241
          %v3562 = vmul.f32 %v3242, %v3242
          %v3563 = vmul.f32 %v3243, %v3243
          %v3564 = vmul.f32 %v3244, %v3244
          %v3565 = vmul.f32 %v3245, %v3245
          %v3566 = vmul.f32 %v3246, %v3246
          %v3567 = vmul.f32 %v3247, %v3247
          %v3568 = vsub.f32 %v3440, %v3504
          %v3569 = vsub.f32 %v3441, %v3505
          %v3570 = vsub.f32 %v3442, %v3506
          %v3571 = vsub.f32 %v3443, %v3507
          %v3572 = vsub.f32 %v3444, %v3508
          %v3573 = vsub.f32 %v3445, %v3509
          %v3574 = vsub.f32 %v3446, %v3510
          %v3575 = vsub.f32 %v3447, %v3511
          %v3576 = vsub.f32 %v3448, %v3512
          %v3577 = vsub.f32 %v3449, %v3513
          %v3578 = vsub.f32 %v3450, %v3514
          %v3579 = vsub.f32 %v3451, %v3515
          %v3580 = vsub.f32 %v3452, %v3516
          %v3581 = vsub.f32 %v3453, %v3517
          %v3582 = vsub.f32 %v3454, %v3518
          %v3583 = vsub.f32 %v3455, %v3519
          %v3584 = vsub.f32 %v3456, %v3520
          %v3585 = vsub.f32 %v3457, %v3521
          %v3586 = vsub.f32 %v3458, %v3522
          %v3587 = vsub.f32 %v3459, %v3523
          %v3588 = vsub.f32 %v3460, %v3524
          %v3589 = vsub.f32 %v3461, %v3525
          %v3590 = vsub.f32 %v3462, %v3526
          %v3591 = vsub.f32 %v3463, %v3527
          %v3592 = vsub.f32 %v3464, %v3528
          %v3593 = vsub.f32 %v3465, %v3529
          %v3594 = vsub.f32 %v3466, %v3530
          %v3595 = vsub.f32 %v3467, %v3531
          %v3596 = vsub.f32 %v3468, %v3532
          %v3597 = vsub.f32 %v3469, %v3533
          %v3598 = vsub.f32 %v3470, %v3534
          %v3599 = vsub.f32 %v3471, %v3535
          %v3600 = vsub.f32 %v3472, %v3536
          %v3601 = vsub.f32 %v3473, %v3537
          %v3602 = vsub.f32 %v3474, %v3538
          %v3603 = vsub.f32 %v3475, %v3539
          %v3604 = vsub.f32 %v3476, %v3540
          %v3605 = vsub.f32 %v3477, %v3541
          %v3606 = vsub.f32 %v3478, %v3542
          %v3607 = vsub.f32 %v3479, %v3543
          %v3608 = vsub.f32 %v3480, %v3544
          %v3609 = vsub.f32 %v3481, %v3545
          %v3610 = vsub.f32 %v3482, %v3546
          %v3611 = vsub.f32 %v3483, %v3547
          %v3612 = vsub.f32 %v3484, %v3548
          %v3613 = vsub.f32 %v3485, %v3549
          %v3614 = vsub.f32 %v3486, %v3550
          %v3615 = vsub.f32 %v3487, %v3551
          %v3616 = vsub.f32 %v3488, %v3552
          %v3617 = vsub.f32 %v3489, %v3553
          %v3618 = vsub.f32 %v3490, %v3554
          %v3619 = vsub.f32 %v3491, %v3555
          %v3620 = vsub.f32 %v3492, %v3556
          %v3621 = vsub.f32 %v3493, %v3557
          %v3622 = vsub.f32 %v3494, %v3558
          %v3623 = vsub.f32 %v3495, %v3559
          %v3624 = vsub.f32 %v3496, %v3560
          %v3625 = vsub.f32 %v3497, %v3561
          %v3626 = vsub.f32 %v3498, %v3562
          %v3627 = vsub.f32 %v3499, %v3563
          %v3628 = vsub.f32 %v3500, %v3564
          %v3629 = vsub.f32 %v3501, %v3565
          %v3630 = vsub.f32 %v3502, %v3566
          %v3631 = vsub.f32 %v3503, %v3567
          %v3632 = vmax.f32 %v3568, 0.0
          %v3633 = vmax.f32 %v3569, 0.0
          %v3634 = vmax.f32 %v3570, 0.0
          %v3635 = vmax.f32 %v3571, 0.0
          %v3636 = vmax.f32 %v3572, 0.0
          %v3637 = vmax.f32 %v3573, 0.0
          %v3638 = vmax.f32 %v3574, 0.0
          %v3639 = vmax.f32 %v3575, 0.0
          %v3640 = vmax.f32 %v3576, 0.0
          %v3641 = vmax.f32 %v3577, 0.0
          %v3642 = vmax.f32 %v3578, 0.0
          %v3643 = vmax.f32 %v3579, 0.0
          %v3644 = vmax.f32 %v3580, 0.0
          %v3645 = vmax.f32 %v3581, 0.0
          %v3646 = vmax.f32 %v3582, 0.0
          %v3647 = vmax.f32 %v3583, 0.0
          %v3648 = vmax.f32 %v3584, 0.0
          %v3649 = vmax.f32 %v3585, 0.0
          %v3650 = vmax.f32 %v3586, 0.0
          %v3651 = vmax.f32 %v3587, 0.0
          %v3652 = vmax.f32 %v3588, 0.0
          %v3653 = vmax.f32 %v3589, 0.0
          %v3654 = vmax.f32 %v3590, 0.0
          %v3655 = vmax.f32 %v3591, 0.0
          %v3656 = vmax.f32 %v3592, 0.0
          %v3657 = vmax.f32 %v3593, 0.0
          %v3658 = vmax.f32 %v3594, 0.0
          %v3659 = vmax.f32 %v3595, 0.0
          %v3660 = vmax.f32 %v3596, 0.0
          %v3661 = vmax.f32 %v3597, 0.0
          %v3662 = vmax.f32 %v3598, 0.0
          %v3663 = vmax.f32 %v3599, 0.0
          %v3664 = vmax.f32 %v3600, 0.0
          %v3665 = vmax.f32 %v3601, 0.0
          %v3666 = vmax.f32 %v3602, 0.0
          %v3667 = vmax.f32 %v3603, 0.0
          %v3668 = vmax.f32 %v3604, 0.0
          %v3669 = vmax.f32 %v3605, 0.0
          %v3670 = vmax.f32 %v3606, 0.0
          %v3671 = vmax.f32 %v3607, 0.0
          %v3672 = vmax.f32 %v3608, 0.0
          %v3673 = vmax.f32 %v3609, 0.0
          %v3674 = vmax.f32 %v3610, 0.0
          %v3675 = vmax.f32 %v3611, 0.0
          %v3676 = vmax.f32 %v3612, 0.0
          %v3677 = vmax.f32 %v3613, 0.0
          %v3678 = vmax.f32 %v3614, 0.0
          %v3679 = vmax.f32 %v3615, 0.0
          %v3680 = vmax.f32 %v3616, 0.0
          %v3681 = vmax.f32 %v3617, 0.0
          %v3682 = vmax.f32 %v3618, 0.0
          %v3683 = vmax.f32 %v3619, 0.0
          %v3684 = vmax.f32 %v3620, 0.0
          %v3685 = vmax.f32 %v3621, 0.0
          %v3686 = vmax.f32 %v3622, 0.0
          %v3687 = vmax.f32 %v3623, 0.0
          %v3688 = vmax.f32 %v3624, 0.0
          %v3689 = vmax.f32 %v3625, 0.0
          %v3690 = vmax.f32 %v3626, 0.0
          %v3691 = vmax.f32 %v3627, 0.0
          %v3692 = vmax.f32 %v3628, 0.0
          %v3693 = vmax.f32 %v3629, 0.0
          %v3694 = vmax.f32 %v3630, 0.0
          %v3695 = vmax.f32 %v3631, 0.0
          %v3696 = vld [vmem:[%s6 + $0x108] sm:$0xff]
          %v3697 = vsub.f32 %v2991, %v3184
          %v3698 = vsub.f32 %v2992, %v3185
          %v3699 = vsub.f32 %v2993, %v3186
          %v3700 = vsub.f32 %v2994, %v3187
          %v3701 = vsub.f32 %v2995, %v3188
          %v3702 = vsub.f32 %v2996, %v3189
          %v3703 = vsub.f32 %v2997, %v3190
          %v3704 = vsub.f32 %v2998, %v3191
          %v3705 = vsub.f32 %v2999, %v3192
          %v3706 = vsub.f32 %v3000, %v3193
          %v3707 = vsub.f32 %v3001, %v3194
          %v3708 = vsub.f32 %v3002, %v3195
          %v3709 = vsub.f32 %v3003, %v3196
          %v3710 = vsub.f32 %v3004, %v3197
          %v3711 = vsub.f32 %v3005, %v3198
          %v3712 = vsub.f32 %v3006, %v3199
          %v3713 = vsub.f32 %v3007, %v3200
          %v3714 = vsub.f32 %v3008, %v3201
          %v3715 = vsub.f32 %v3009, %v3202
          %v3716 = vsub.f32 %v3010, %v3203
          %v3717 = vsub.f32 %v3011, %v3204
          %v3718 = vsub.f32 %v3012, %v3205
          %v3719 = vsub.f32 %v3013, %v3206
          %v3720 = vsub.f32 %v3014, %v3207
          %v3721 = vsub.f32 %v3015, %v3208
          %v3722 = vsub.f32 %v3016, %v3209
          %v3723 = vsub.f32 %v3017, %v3210
          %v3724 = vsub.f32 %v3018, %v3211
          %v3725 = vsub.f32 %v3019, %v3212
          %v3726 = vsub.f32 %v3020, %v3213
          %v3727 = vsub.f32 %v3021, %v3214
          %v3728 = vsub.f32 %v3022, %v3215
          %v3729 = vsub.f32 %v3023, %v3216
          %v3730 = vsub.f32 %v3024, %v3217
          %v3731 = vsub.f32 %v3025, %v3218
          %v3732 = vsub.f32 %v3026, %v3219
          %v3733 = vsub.f32 %v3027, %v3220
          %v3734 = vsub.f32 %v3028, %v3221
          %v3735 = vsub.f32 %v3029, %v3222
          %v3736 = vsub.f32 %v3030, %v3223
          %v3737 = vsub.f32 %v3031, %v3224
          %v3738 = vsub.f32 %v3032, %v3225
          %v3739 = vsub.f32 %v3033, %v3226
          %v3740 = vsub.f32 %v3034, %v3227
          %v3741 = vsub.f32 %v3035, %v3228
          %v3742 = vsub.f32 %v3036, %v3229
          %v3743 = vsub.f32 %v3037, %v3230
          %v3744 = vsub.f32 %v3038, %v3231
          %v3745 = vsub.f32 %v3039, %v3232
          %v3746 = vsub.f32 %v3040, %v3233
          %v3747 = vsub.f32 %v3041, %v3234
          %v3748 = vsub.f32 %v3042, %v3235
          %v3749 = vsub.f32 %v3043, %v3236
          %v3750 = vsub.f32 %v3044, %v3237
          %v3751 = vsub.f32 %v3045, %v3238
          %v3752 = vsub.f32 %v3046, %v3239
          %v3753 = vsub.f32 %v3047, %v3240
          %v3754 = vsub.f32 %v3048, %v3241
          %v3755 = vsub.f32 %v3049, %v3242
          %v3756 = vsub.f32 %v3050, %v3243
          %v3757 = vsub.f32 %v3051, %v3244
          %v3758 = vsub.f32 %v3052, %v3245
          %v3759 = vsub.f32 %v3053, %v3246
          %v3760 = vsub.f32 %v3054, %v3247
          %v3761 = vadd.f32 %v3632, 1e-05
          %v3762 = vadd.f32 %v3633, 1e-05
          %v3763 = vadd.f32 %v3634, 1e-05
          %v3764 = vadd.f32 %v3635, 1e-05
          %v3765 = vadd.f32 %v3636, 1e-05
          %v3766 = vadd.f32 %v3637, 1e-05
          %v3767 = vadd.f32 %v3638, 1e-05
          %v3768 = vadd.f32 %v3639, 1e-05
          %v3769 = vadd.f32 %v3640, 1e-05
          %v3770 = vadd.f32 %v3641, 1e-05
          %v3771 = vadd.f32 %v3642, 1e-05
          %v3772 = vadd.f32 %v3643, 1e-05
          %v3773 = vadd.f32 %v3644, 1e-05
          %v3774 = vadd.f32 %v3645, 1e-05
          %v3775 = vadd.f32 %v3646, 1e-05
          %v3776 = vadd.f32 %v3647, 1e-05
          %v3777 = vadd.f32 %v3648, 1e-05
          %v3778 = vadd.f32 %v3649, 1e-05
          %v3779 = vadd.f32 %v3650, 1e-05
          %v3780 = vadd.f32 %v3651, 1e-05
          %v3781 = vadd.f32 %v3652, 1e-05
          %v3782 = vadd.f32 %v3653, 1e-05
          %v3783 = vadd.f32 %v3654, 1e-05
          %v3784 = vadd.f32 %v3655, 1e-05
          %v3785 = vadd.f32 %v3656, 1e-05
          %v3786 = vadd.f32 %v3657, 1e-05
          %v3787 = vadd.f32 %v3658, 1e-05
          %v3788 = vadd.f32 %v3659, 1e-05
          %v3789 = vadd.f32 %v3660, 1e-05
          %v3790 = vadd.f32 %v3661, 1e-05
          %v3791 = vadd.f32 %v3662, 1e-05
          %v3792 = vadd.f32 %v3663, 1e-05
          %v3793 = vadd.f32 %v3664, 1e-05
          %v3794 = vadd.f32 %v3665, 1e-05
          %v3795 = vadd.f32 %v3666, 1e-05
          %v3796 = vadd.f32 %v3667, 1e-05
          %v3797 = vadd.f32 %v3668, 1e-05
          %v3798 = vadd.f32 %v3669, 1e-05
          %v3799 = vadd.f32 %v3670, 1e-05
          %v3800 = vadd.f32 %v3671, 1e-05
          %v3801 = vadd.f32 %v3672, 1e-05
          %v3802 = vadd.f32 %v3673, 1e-05
          %v3803 = vadd.f32 %v3674, 1e-05
          %v3804 = vadd.f32 %v3675, 1e-05
          %v3805 = vadd.f32 %v3676, 1e-05
          %v3806 = vadd.f32 %v3677, 1e-05
          %v3807 = vadd.f32 %v3678, 1e-05
          %v3808 = vadd.f32 %v3679, 1e-05
          %v3809 = vadd.f32 %v3680, 1e-05
          %v3810 = vadd.f32 %v3681, 1e-05
          %v3811 = vadd.f32 %v3682, 1e-05
          %v3812 = vadd.f32 %v3683, 1e-05
          %v3813 = vadd.f32 %v3684, 1e-05
          %v3814 = vadd.f32 %v3685, 1e-05
          %v3815 = vadd.f32 %v3686, 1e-05
          %v3816 = vadd.f32 %v3687, 1e-05
          %v3817 = vadd.f32 %v3688, 1e-05
          %v3818 = vadd.f32 %v3689, 1e-05
          %v3819 = vadd.f32 %v3690, 1e-05
          %v3820 = vadd.f32 %v3691, 1e-05
          %v3821 = vadd.f32 %v3692, 1e-05
          %v3822 = vadd.f32 %v3693, 1e-05
          %v3823 = vadd.f32 %v3694, 1e-05
          %v3824 = vadd.f32 %v3695, 1e-05
          %v3825 = vrsqrt.pop %v3761
          %v3826 = vrsqrt.pop %v3762
          %v3827 = vrsqrt.pop %v3763
          %v3828 = vrsqrt.pop %v3764
          %v3829 = vrsqrt.pop %v3765
          %v3830 = vrsqrt.pop %v3766
          %v3831 = vrsqrt.pop %v3767
          %v3832 = vrsqrt.pop %v3768
          %v3833 = vrsqrt.pop %v3769
          %v3834 = vrsqrt.pop %v3770
          %v3835 = vrsqrt.pop %v3771
          %v3836 = vrsqrt.pop %v3772
          %v3837 = vrsqrt.pop %v3773
          %v3838 = vrsqrt.pop %v3774
          %v3839 = vrsqrt.pop %v3775
          %v3840 = vrsqrt.pop %v3776
          %v3841 = vrsqrt.pop %v3777
          %v3842 = vrsqrt.pop %v3778
          %v3843 = vrsqrt.pop %v3779
          %v3844 = vrsqrt.pop %v3780
          %v3845 = vrsqrt.pop %v3781
          %v3846 = vrsqrt.pop %v3782
          %v3847 = vrsqrt.pop %v3783
          %v3848 = vrsqrt.pop %v3784
          %v3849 = vrsqrt.pop %v3785
          %v3850 = vrsqrt.pop %v3786
          %v3851 = vrsqrt.pop %v3787
          %v3852 = vrsqrt.pop %v3788
          %v3853 = vrsqrt.pop %v3789
          %v3854 = vrsqrt.pop %v3790
          %v3855 = vrsqrt.pop %v3791
          %v3856 = vrsqrt.pop %v3792
          %v3857 = vrsqrt.pop %v3793
          %v3858 = vrsqrt.pop %v3794
          %v3859 = vrsqrt.pop %v3795
          %v3860 = vrsqrt.pop %v3796
          %v3861 = vrsqrt.pop %v3797
          %v3862 = vrsqrt.pop %v3798
          %v3863 = vrsqrt.pop %v3799
          %v3864 = vrsqrt.pop %v3800
          %v3865 = vrsqrt.pop %v3801
          %v3866 = vrsqrt.pop %v3802
          %v3867 = vrsqrt.pop %v3803
          %v3868 = vrsqrt.pop %v3804
          %v3869 = vrsqrt.pop %v3805
          %v3870 = vrsqrt.pop %v3806
          %v3871 = vrsqrt.pop %v3807
          %v3872 = vrsqrt.pop %v3808
          %v3873 = vrsqrt.pop %v3809
          %v3874 = vrsqrt.pop %v3810
          %v3875 = vrsqrt.pop %v3811
          %v3876 = vrsqrt.pop %v3812
          %v3877 = vrsqrt.pop %v3813
          %v3878 = vrsqrt.pop %v3814
          %v3879 = vrsqrt.pop %v3815
          %v3880 = vrsqrt.pop %v3816
          %v3881 = vrsqrt.pop %v3817
          %v3882 = vrsqrt.pop %v3818
          %v3883 = vrsqrt.pop %v3819
          %v3884 = vrsqrt.pop %v3820
          %v3885 = vrsqrt.pop %v3821
          %v3886 = vrsqrt.pop %v3822
          %v3887 = vrsqrt.pop %v3823
          %v3888 = vrsqrt.pop %v3824
          %v3889 = vmul.f32 %v3697, %v3825
          %v3890 = vmul.f32 %v3698, %v3826
          %v3891 = vmul.f32 %v3699, %v3827
          %v3892 = vmul.f32 %v3700, %v3828
          %v3893 = vmul.f32 %v3701, %v3829
          %v3894 = vmul.f32 %v3702, %v3830
          %v3895 = vmul.f32 %v3703, %v3831
          %v3896 = vmul.f32 %v3704, %v3832
          %v3897 = vmul.f32 %v3705, %v3833
          %v3898 = vmul.f32 %v3706, %v3834
          %v3899 = vmul.f32 %v3707, %v3835
          %v3900 = vmul.f32 %v3708, %v3836
          %v3901 = vmul.f32 %v3709, %v3837
          %v3902 = vmul.f32 %v3710, %v3838
          %v3903 = vmul.f32 %v3711, %v3839
          %v3904 = vmul.f32 %v3712, %v3840
          %v3905 = vmul.f32 %v3713, %v3841
          %v3906 = vmul.f32 %v3714, %v3842
          %v3907 = vmul.f32 %v3715, %v3843
          %v3908 = vmul.f32 %v3716, %v3844
          %v3909 = vmul.f32 %v3717, %v3845
          %v3910 = vmul.f32 %v3718, %v3846
          %v3911 = vmul.f32 %v3719, %v3847
          %v3912 = vmul.f32 %v3720, %v3848
          %v3913 = vmul.f32 %v3721, %v3849
          %v3914 = vmul.f32 %v3722, %v3850
          %v3915 = vmul.f32 %v3723, %v3851
          %v3916 = vmul.f32 %v3724, %v3852
          %v3917 = vmul.f32 %v3725, %v3853
          %v3918 = vmul.f32 %v3726, %v3854
          %v3919 = vmul.f32 %v3727, %v3855
          %v3920 = vmul.f32 %v3728, %v3856
          %v3921 = vmul.f32 %v3729, %v3857
          %v3922 = vmul.f32 %v3730, %v3858
          %v3923 = vmul.f32 %v3731, %v3859
          %v3924 = vmul.f32 %v3732, %v3860
          %v3925 = vmul.f32 %v3733, %v3861
          %v3926 = vmul.f32 %v3734, %v3862
          %v3927 = vmul.f32 %v3735, %v3863
          %v3928 = vmul.f32 %v3736, %v3864
          %v3929 = vmul.f32 %v3737, %v3865
          %v3930 = vmul.f32 %v3738, %v3866
          %v3931 = vmul.f32 %v3739, %v3867
          %v3932 = vmul.f32 %v3740, %v3868
          %v3933 = vmul.f32 %v3741, %v3869
          %v3934 = vmul.f32 %v3742, %v3870
          %v3935 = vmul.f32 %v3743, %v3871
          %v3936 = vmul.f32 %v3744, %v3872
          %v3937 = vmul.f32 %v3745, %v3873
          %v3938 = vmul.f32 %v3746, %v3874
          %v3939 = vmul.f32 %v3747, %v3875
          %v3940 = vmul.f32 %v3748, %v3876
          %v3941 = vmul.f32 %v3749, %v3877
          %v3942 = vmul.f32 %v3750, %v3878
          %v3943 = vmul.f32 %v3751, %v3879
          %v3944 = vmul.f32 %v3752, %v3880
          %v3945 = vmul.f32 %v3753, %v3881
          %v3946 = vmul.f32 %v3754, %v3882
          %v3947 = vmul.f32 %v3755, %v3883
          %v3948 = vmul.f32 %v3756, %v3884
          %v3949 = vmul.f32 %v3757, %v3885
          %v3950 = vmul.f32 %v3758, %v3886
          %v3951 = vmul.f32 %v3759, %v3887
          %v3952 = vmul.f32 %v3760, %v3888
          %v3953 = vlaneseq
          %v3954 = vshrl.u32 %v3953, 7
          %v3955 = vsub.s32 0, %v3954
          %v3956 = vrot.slane %v3696, %v3955
          %v3957 = vmul.f32 %v3889, %v3956
          %v3958 = vmul.f32 %v3890, %v3956
          %v3959 = vmul.f32 %v3891, %v3956
          %v3960 = vmul.f32 %v3892, %v3956
          %v3961 = vmul.f32 %v3893, %v3956
          %v3962 = vmul.f32 %v3894, %v3956
          %v3963 = vmul.f32 %v3895, %v3956
          %v3964 = vmul.f32 %v3896, %v3956
          %v3965 = vmul.f32 %v3897, %v3956
          %v3966 = vmul.f32 %v3898, %v3956
          %v3967 = vmul.f32 %v3899, %v3956
          %v3968 = vmul.f32 %v3900, %v3956
          %v3969 = vmul.f32 %v3901, %v3956
          %v3970 = vmul.f32 %v3902, %v3956
          %v3971 = vmul.f32 %v3903, %v3956
          %v3972 = vmul.f32 %v3904, %v3956
          %v3973 = vmul.f32 %v3905, %v3956
          %v3974 = vmul.f32 %v3906, %v3956
          %v3975 = vmul.f32 %v3907, %v3956
          %v3976 = vmul.f32 %v3908, %v3956
          %v3977 = vmul.f32 %v3909, %v3956
          %v3978 = vmul.f32 %v3910, %v3956
          %v3979 = vmul.f32 %v3911, %v3956
          %v3980 = vmul.f32 %v3912, %v3956
          %v3981 = vmul.f32 %v3913, %v3956
          %v3982 = vmul.f32 %v3914, %v3956
          %v3983 = vmul.f32 %v3915, %v3956
          %v3984 = vmul.f32 %v3916, %v3956
          %v3985 = vmul.f32 %v3917, %v3956
          %v3986 = vmul.f32 %v3918, %v3956
          %v3987 = vmul.f32 %v3919, %v3956
          %v3988 = vmul.f32 %v3920, %v3956
          %v3989 = vmul.f32 %v3921, %v3956
          %v3990 = vmul.f32 %v3922, %v3956
          %v3991 = vmul.f32 %v3923, %v3956
          %v3992 = vmul.f32 %v3924, %v3956
          %v3993 = vmul.f32 %v3925, %v3956
          %v3994 = vmul.f32 %v3926, %v3956
          %v3995 = vmul.f32 %v3927, %v3956
          %v3996 = vmul.f32 %v3928, %v3956
          %v3997 = vmul.f32 %v3929, %v3956
          %v3998 = vmul.f32 %v3930, %v3956
          %v3999 = vmul.f32 %v3931, %v3956
          %v4000 = vmul.f32 %v3932, %v3956
          %v4001 = vmul.f32 %v3933, %v3956
          %v4002 = vmul.f32 %v3934, %v3956
          %v4003 = vmul.f32 %v3935, %v3956
          %v4004 = vmul.f32 %v3936, %v3956
          %v4005 = vmul.f32 %v3937, %v3956
          %v4006 = vmul.f32 %v3938, %v3956
          %v4007 = vmul.f32 %v3939, %v3956
          %v4008 = vmul.f32 %v3940, %v3956
          %v4009 = vmul.f32 %v3941, %v3956
          %v4010 = vmul.f32 %v3942, %v3956
          %v4011 = vmul.f32 %v3943, %v3956
          %v4012 = vmul.f32 %v3944, %v3956
          %v4013 = vmul.f32 %v3945, %v3956
          %v4014 = vmul.f32 %v3946, %v3956
          %v4015 = vmul.f32 %v3947, %v3956
          %v4016 = vmul.f32 %v3948, %v3956
          %v4017 = vmul.f32 %v3949, %v3956
          %v4018 = vmul.f32 %v3950, %v3956
          %v4019 = vmul.f32 %v3951, %v3956
          %v4020 = vmul.f32 %v3952, %v3956
          %v4021 = vlaneseq
          %v4022 = vshrl.u32 %v4021, 7
          %v4023 = vsub.s32 1, %v4022
          %v4024 = vrot.slane %v3696, %v4023
          %v4025 = vadd.f32 %v3957, %v4024
          %v4026 = vadd.f32 %v3958, %v4024
          %v4027 = vadd.f32 %v3959, %v4024
          %v4028 = vadd.f32 %v3960, %v4024
          %v4029 = vadd.f32 %v3961, %v4024
          %v4030 = vadd.f32 %v3962, %v4024
          %v4031 = vadd.f32 %v3963, %v4024
          %v4032 = vadd.f32 %v3964, %v4024
          %v4033 = vadd.f32 %v3965, %v4024
          %v4034 = vadd.f32 %v3966, %v4024
          %v4035 = vadd.f32 %v3967, %v4024
          %v4036 = vadd.f32 %v3968, %v4024
          %v4037 = vadd.f32 %v3969, %v4024
          %v4038 = vadd.f32 %v3970, %v4024
          %v4039 = vadd.f32 %v3971, %v4024
          %v4040 = vadd.f32 %v3972, %v4024
          %v4041 = vadd.f32 %v3973, %v4024
          %v4042 = vadd.f32 %v3974, %v4024
          %v4043 = vadd.f32 %v3975, %v4024
          %v4044 = vadd.f32 %v3976, %v4024
          %v4045 = vadd.f32 %v3977, %v4024
          %v4046 = vadd.f32 %v3978, %v4024
          %v4047 = vadd.f32 %v3979, %v4024
          %v4048 = vadd.f32 %v3980, %v4024
          %v4049 = vadd.f32 %v3981, %v4024
          %v4050 = vadd.f32 %v3982, %v4024
          %v4051 = vadd.f32 %v3983, %v4024
          %v4052 = vadd.f32 %v3984, %v4024
          %v4053 = vadd.f32 %v3985, %v4024
          %v4054 = vadd.f32 %v3986, %v4024
          %v4055 = vadd.f32 %v3987, %v4024
          %v4056 = vadd.f32 %v3988, %v4024
          %v4057 = vadd.f32 %v3989, %v4024
          %v4058 = vadd.f32 %v3990, %v4024
          %v4059 = vadd.f32 %v3991, %v4024
          %v4060 = vadd.f32 %v3992, %v4024
          %v4061 = vadd.f32 %v3993, %v4024
          %v4062 = vadd.f32 %v3994, %v4024
          %v4063 = vadd.f32 %v3995, %v4024
          %v4064 = vadd.f32 %v3996, %v4024
          %v4065 = vadd.f32 %v3997, %v4024
          %v4066 = vadd.f32 %v3998, %v4024
          %v4067 = vadd.f32 %v3999, %v4024
          %v4068 = vadd.f32 %v4000, %v4024
          %v4069 = vadd.f32 %v4001, %v4024
          %v4070 = vadd.f32 %v4002, %v4024
          %v4071 = vadd.f32 %v4003, %v4024
          %v4072 = vadd.f32 %v4004, %v4024
          %v4073 = vadd.f32 %v4005, %v4024
          %v4074 = vadd.f32 %v4006, %v4024
          %v4075 = vadd.f32 %v4007, %v4024
          %v4076 = vadd.f32 %v4008, %v4024
          %v4077 = vadd.f32 %v4009, %v4024
          %v4078 = vadd.f32 %v4010, %v4024
          %v4079 = vadd.f32 %v4011, %v4024
          %v4080 = vadd.f32 %v4012, %v4024
          %v4081 = vadd.f32 %v4013, %v4024
          %v4082 = vadd.f32 %v4014, %v4024
          %v4083 = vadd.f32 %v4015, %v4024
          %v4084 = vadd.f32 %v4016, %v4024
          %v4085 = vadd.f32 %v4017, %v4024
          %v4086 = vadd.f32 %v4018, %v4024
          %v4087 = vadd.f32 %v4019, %v4024
          %v4088 = vadd.f32 %v4020, %v4024
          %v4089 = vmax.f32 %v4025, 0.0
          %v4090 = vmax.f32 %v4026, 0.0
          %v4091 = vmax.f32 %v4027, 0.0
          %v4092 = vmax.f32 %v4028, 0.0
          %v4093 = vmax.f32 %v4029, 0.0
          %v4094 = vmax.f32 %v4030, 0.0
          %v4095 = vmax.f32 %v4031, 0.0
          %v4096 = vmax.f32 %v4032, 0.0
          %v4097 = vmax.f32 %v4033, 0.0
          %v4098 = vmax.f32 %v4034, 0.0
          %v4099 = vmax.f32 %v4035, 0.0
          %v4100 = vmax.f32 %v4036, 0.0
          %v4101 = vmax.f32 %v4037, 0.0
          %v4102 = vmax.f32 %v4038, 0.0
          %v4103 = vmax.f32 %v4039, 0.0
          %v4104 = vmax.f32 %v4040, 0.0
          %v4105 = vmax.f32 %v4041, 0.0
          %v4106 = vmax.f32 %v4042, 0.0
          %v4107 = vmax.f32 %v4043, 0.0
          %v4108 = vmax.f32 %v4044, 0.0
          %v4109 = vmax.f32 %v4045, 0.0
          %v4110 = vmax.f32 %v4046, 0.0
          %v4111 = vmax.f32 %v4047, 0.0
          %v4112 = vmax.f32 %v4048, 0.0
          %v4113 = vmax.f32 %v4049, 0.0
          %v4114 = vmax.f32 %v4050, 0.0
          %v4115 = vmax.f32 %v4051, 0.0
          %v4116 = vmax.f32 %v4052, 0.0
          %v4117 = vmax.f32 %v4053, 0.0
          %v4118 = vmax.f32 %v4054, 0.0
          %v4119 = vmax.f32 %v4055, 0.0
          %v4120 = vmax.f32 %v4056, 0.0
          %v4121 = vmax.f32 %v4057, 0.0
          %v4122 = vmax.f32 %v4058, 0.0
          %v4123 = vmax.f32 %v4059, 0.0
          %v4124 = vmax.f32 %v4060, 0.0
          %v4125 = vmax.f32 %v4061, 0.0
          %v4126 = vmax.f32 %v4062, 0.0
          %v4127 = vmax.f32 %v4063, 0.0
          %v4128 = vmax.f32 %v4064, 0.0
          %v4129 = vmax.f32 %v4065, 0.0
          %v4130 = vmax.f32 %v4066, 0.0
          %v4131 = vmax.f32 %v4067, 0.0
          %v4132 = vmax.f32 %v4068, 0.0
          %v4133 = vmax.f32 %v4069, 0.0
          %v4134 = vmax.f32 %v4070, 0.0
          %v4135 = vmax.f32 %v4071, 0.0
          %v4136 = vmax.f32 %v4072, 0.0
          %v4137 = vmax.f32 %v4073, 0.0
          %v4138 = vmax.f32 %v4074, 0.0
          %v4139 = vmax.f32 %v4075, 0.0
          %v4140 = vmax.f32 %v4076, 0.0
          %v4141 = vmax.f32 %v4077, 0.0
          %v4142 = vmax.f32 %v4078, 0.0
          %v4143 = vmax.f32 %v4079, 0.0
          %v4144 = vmax.f32 %v4080, 0.0
          %v4145 = vmax.f32 %v4081, 0.0
          %v4146 = vmax.f32 %v4082, 0.0
          %v4147 = vmax.f32 %v4083, 0.0
          %v4148 = vmax.f32 %v4084, 0.0
          %v4149 = vmax.f32 %v4085, 0.0
          %v4150 = vmax.f32 %v4086, 0.0
          %v4151 = vmax.f32 %v4087, 0.0
          %v4152 = vmax.f32 %v4088, 0.0
          %v4153 = vld [vmem:[#allocation2] sm:$0xff]
          %v4154 = vld [vmem:[#allocation2 + $0x8] sm:$0xff]
          %v4155 = vld [vmem:[#allocation2 + $0x10] sm:$0xff]
          %v4156 = vld [vmem:[#allocation2 + $0x18] sm:$0xff]
          %v4157 = vld [vmem:[#allocation2 + $0x20] sm:$0xff]
          %v4158 = vld [vmem:[#allocation2 + $0x28] sm:$0xff]
          %v4159 = vld [vmem:[#allocation2 + $0x30] sm:$0xff]
          %v4160 = vld [vmem:[#allocation2 + $0x38] sm:$0xff]
          %v4161 = vld [vmem:[#allocation2 + $0x40] sm:$0xff]
          %v4162 = vld [vmem:[#allocation2 + $0x48] sm:$0xff]
          %v4163 = vld [vmem:[#allocation2 + $0x50] sm:$0xff]
          %v4164 = vld [vmem:[#allocation2 + $0x58] sm:$0xff]
          %v4165 = vld [vmem:[#allocation2 + $0x60] sm:$0xff]
          %v4166 = vld [vmem:[#allocation2 + $0x68] sm:$0xff]
          %v4167 = vld [vmem:[#allocation2 + $0x70] sm:$0xff]
          %v4168 = vld [vmem:[#allocation2 + $0x78] sm:$0xff]
          %4169 = vmatprep.subr.mxu0 0.0
          %4170 = vmatpush1.msra.mxu0 %v4089
          %4171 = vmatprep.subr.mxu0 0.0
          %4172 = vmatpush1.msra.mxu0 %v4090
          %4173 = vmatprep.subr.mxu0 0.0
          %4174 = vmatpush1.msra.mxu0 %v4091
          %4175 = vmatprep.subr.mxu0 0.0
          %4176 = vmatpush1.msra.mxu0 %v4092
          %4177 = vmatprep.subr.mxu0 0.0
          %4178 = vmatpush1.msra.mxu0 %v4093
          %4179 = vmatprep.subr.mxu0 0.0
          %4180 = vmatpush1.msra.mxu0 %v4094
          %4181 = vmatprep.subr.mxu0 0.0
          %4182 = vmatpush1.msra.mxu0 %v4095
          %4183 = vmatprep.subr.mxu0 0.0
          %4184 = vmatpush1.msra.mxu0 %v4096
          %4185 = vmatprep.subr.mxu0 0.0
          %4186 = vmatpush1.msra.mxu0 %v4097
          %4187 = vmatprep.subr.mxu0 0.0
          %4188 = vmatpush1.msra.mxu0 %v4098
          %4189 = vmatprep.subr.mxu0 0.0
          %4190 = vmatpush1.msra.mxu0 %v4099
          %4191 = vmatprep.subr.mxu0 0.0
          %4192 = vmatpush1.msra.mxu0 %v4100
          %4193 = vmatprep.subr.mxu0 0.0
          %4194 = vmatpush1.msra.mxu0 %v4101
          %4195 = vmatprep.subr.mxu0 0.0
          %4196 = vmatpush1.msra.mxu0 %v4102
          %4197 = vmatprep.subr.mxu0 0.0
          %4198 = vmatpush1.msra.mxu0 %v4103
          %4199 = vmatprep.subr.mxu0 0.0
          %4200 = vmatpush1.msra.mxu0 %v4104
          %4201 = vmatprep.subr.mxu0 0.0
          %4202 = vmatpush1.msra.mxu0 %v4105
          %4203 = vmatprep.subr.mxu0 0.0
          %4204 = vmatpush1.msra.mxu0 %v4106
          %4205 = vmatprep.subr.mxu0 0.0
          %4206 = vmatpush1.msra.mxu0 %v4107
          %4207 = vmatprep.subr.mxu0 0.0
          %4208 = vmatpush1.msra.mxu0 %v4108
          %4209 = vmatprep.subr.mxu0 0.0
          %4210 = vmatpush1.msra.mxu0 %v4109
          %4211 = vmatprep.subr.mxu0 0.0
          %4212 = vmatpush1.msra.mxu0 %v4110
          %4213 = vmatprep.subr.mxu0 0.0
          %4214 = vmatpush1.msra.mxu0 %v4111
          %4215 = vmatprep.subr.mxu0 0.0
          %4216 = vmatpush1.msra.mxu0 %v4112
          %4217 = vmatprep.subr.mxu0 0.0
          %4218 = vmatpush1.msra.mxu0 %v4113
          %4219 = vmatprep.subr.mxu0 0.0
          %4220 = vmatpush1.msra.mxu0 %v4114
          %4221 = vmatprep.subr.mxu0 0.0
          %4222 = vmatpush1.msra.mxu0 %v4115
          %4223 = vmatprep.subr.mxu0 0.0
          %4224 = vmatpush1.msra.mxu0 %v4116
          %4225 = vmatprep.subr.mxu0 0.0
          %4226 = vmatpush1.msra.mxu0 %v4117
          %4227 = vmatprep.subr.mxu0 0.0
          %4228 = vmatpush1.msra.mxu0 %v4118
          %4229 = vmatprep.subr.mxu0 0.0
          %4230 = vmatpush1.msra.mxu0 %v4119
          %4231 = vmatprep.subr.mxu0 0.0
          %4232 = vmatpush1.msra.mxu0 %v4120
          %4233 = vmatprep.mubr.f32.mxu0 %v1033
          %4234 = vmatmul.mubr.f32.gmra.mrb[0].mxu0 %v1032
          %v4235 = vpop.f32.mrb[0].mxu0
          %v4236 = vadd.f32 0.0, %v4235
          %v4237 = vpop.f32.mrb[0].mxu0
          %4238 = vmatprep.mubr.f32.mxu0 %v1037
          %4239 = vmatmul.mubr.f32.gmra.mrb[0].mxu0 %v1036
          %v4240 = vpop.f32.mrb[0].mxu0
          %v4241 = vadd.f32 0.0, %v4240
          %v4242 = vpop.f32.mrb[0].mxu0
          %4243 = vmatprep.mubr.f32.mxu0 %v1041
          %4244 = vmatmul.mubr.f32.gmra.mrb[0].mxu0 %v1040
          %v4245 = vpop.f32.mrb[0].mxu0
          %v4246 = vadd.f32 0.0, %v4245
          %v4247 = vpop.f32.mrb[0].mxu0
          %4248 = vmatprep.mubr.f32.mxu0 %v1045
          %4249 = vmatmul.mubr.f32.gmra.mrb[0].mxu0 %v1044
          %v4250 = vpop.f32.mrb[0].mxu0
          %v4251 = vadd.f32 0.0, %v4250
          %v4252 = vpop.f32.mrb[0].mxu0
          %4253 = vmatprep.mubr.f32.mxu0 %v1049
          %4254 = vmatmul.mubr.f32.gmra.mrb[0].mxu0 %v1048
          %v4255 = vpop.f32.mrb[0].mxu0
          %v4256 = vadd.f32 0.0, %v4255
          %v4257 = vpop.f32.mrb[0].mxu0
          %4258 = vmatprep.mubr.f32.mxu0 %v1053
          %4259 = vmatmul.mubr.f32.gmra.mrb[0].mxu0 %v1052
          %v4260 = vpop.f32.mrb[0].mxu0
          %v4261 = vadd.f32 0.0, %v4260
          %v4262 = vpop.f32.mrb[0].mxu0
          %4263 = vmatprep.mubr.f32.mxu0 %v1057
          %4264 = vmatmul.mubr.f32.gmra.mrb[0].mxu0 %v1056
          %v4265 = vpop.f32.mrb[0].mxu0
          %v4266 = vadd.f32 0.0, %v4265
          %v4267 = vpop.f32.mrb[0].mxu0
          %4268 = vmatprep.mubr.f32.mxu0 %v1061
          %4269 = vmatmul.mubr.f32.gmra.mrb[0].mxu0 %v1060
          %v4270 = vpop.f32.mrb[0].mxu0
          %v4271 = vadd.f32 0.0, %v4270
          %v4272 = vpop.f32.mrb[0].mxu0
          %4273 = vmatprep.mubr.f32.mxu0 %v1065
          %4274 = vmatmul.mubr.f32.gmra.mrb[0].mxu0 %v1064
          %v4275 = vpop.f32.mrb[0].mxu0
          %v4276 = vadd.f32 0.0, %v4275
          %v4277 = vpop.f32.mrb[0].mxu0
          %4278 = vmatprep.mubr.f32.mxu0 %v1069
          %4279 = vmatmul.mubr.f32.gmra.mrb[0].mxu0 %v1068
          %v4280 = vpop.f32.mrb[0].mxu0
          %v4281 = vadd.f32 0.0, %v4280
          %v4282 = vpop.f32.mrb[0].mxu0
          %4283 = vmatprep.mubr.f32.mxu0 %v1073
          %4284 = vmatmul.mubr.f32.gmra.mrb[0].mxu0 %v1072
          %v4285 = vpop.f32.mrb[0].mxu0
          %v4286 = vadd.f32 0.0, %v4285
          %v4287 = vpop.f32.mrb[0].mxu0
          %4288 = vmatprep.mubr.f32.mxu0 %v1077
          %4289 = vmatmul.mubr.f32.gmra.mrb[0].mxu0 %v1076
          %v4290 = vpop.f32.mrb[0].mxu0
          %v4291 = vadd.f32 0.0, %v4290
          %v4292 = vpop.f32.mrb[0].mxu0
          %4293 = vmatprep.mubr.f32.mxu0 %v1081
          %4294 = vmatmul.mubr.f32.gmra.mrb[0].mxu0 %v1080
          %v4295 = vpop.f32.mrb[0].mxu0
          %v4296 = vadd.f32 0.0, %v4295
          %v4297 = vpop.f32.mrb[0].mxu0
          %4298 = vmatprep.mubr.f32.mxu0 %v1085
          %4299 = vmatmul.mubr.f32.gmra.mrb[0].mxu0 %v1084
          %v4300 = vpop.f32.mrb[0].mxu0
          %v4301 = vadd.f32 0.0, %v4300
          %v4302 = vpop.f32.mrb[0].mxu0
          %4303 = vmatprep.mubr.f32.mxu0 %v1089
          %4304 = vmatmul.mubr.f32.gmra.mrb[0].mxu0 %v1088
          %v4305 = vpop.f32.mrb[0].mxu0
          %v4306 = vadd.f32 0.0, %v4305
          %v4307 = vpop.f32.mrb[0].mxu0
          %4308 = vmatprep.mubr.f32.mxu0 %v1093
          %4309 = vmatmul.mubr.f32.gmra.mrb[0].mxu0 %v1092
          %v4310 = vpop.f32.mrb[0].mxu0
          %v4311 = vadd.f32 0.0, %v4310
          %v4312 = vpop.f32.mrb[0].mxu0
          %4313 = vdwg.mxu0
          %4314 = vmatprep.subr.mxu0 0.0
          %4315 = vmatpush1.msra.mxu0 %v4121
          %4316 = vmatprep.subr.mxu0 0.0
          %4317 = vmatpush1.msra.mxu0 %v4122
          %4318 = vmatprep.subr.mxu0 0.0
          %4319 = vmatpush1.msra.mxu0 %v4123
          %4320 = vmatprep.subr.mxu0 0.0
          %4321 = vmatpush1.msra.mxu0 %v4124
          %4322 = vmatprep.subr.mxu0 0.0
          %4323 = vmatpush1.msra.mxu0 %v4125
          %4324 = vmatprep.subr.mxu0 0.0
          %4325 = vmatpush1.msra.mxu0 %v4126
          %4326 = vmatprep.subr.mxu0 0.0
          %4327 = vmatpush1.msra.mxu0 %v4127
          %4328 = vmatprep.subr.mxu0 0.0
          %4329 = vmatpush1.msra.mxu0 %v4128
          %4330 = vmatprep.subr.mxu0 0.0
          %4331 = vmatpush1.msra.mxu0 %v4129
          %4332 = vmatprep.subr.mxu0 0.0
          %4333 = vmatpush1.msra.mxu0 %v4130
          %4334 = vmatprep.subr.mxu0 0.0
          %4335 = vmatpush1.msra.mxu0 %v4131
          %4336 = vmatprep.subr.mxu0 0.0
          %4337 = vmatpush1.msra.mxu0 %v4132
          %4338 = vmatprep.subr.mxu0 0.0
          %4339 = vmatpush1.msra.mxu0 %v4133
          %4340 = vmatprep.subr.mxu0 0.0
          %4341 = vmatpush1.msra.mxu0 %v4134
          %4342 = vmatprep.subr.mxu0 0.0
          %4343 = vmatpush1.msra.mxu0 %v4135
          %4344 = vmatprep.subr.mxu0 0.0
          %4345 = vmatpush1.msra.mxu0 %v4136
          %4346 = vmatprep.subr.mxu0 0.0
          %4347 = vmatpush1.msra.mxu0 %v4137
          %4348 = vmatprep.subr.mxu0 0.0
          %4349 = vmatpush1.msra.mxu0 %v4138
          %4350 = vmatprep.subr.mxu0 0.0
          %4351 = vmatpush1.msra.mxu0 %v4139
          %4352 = vmatprep.subr.mxu0 0.0
          %4353 = vmatpush1.msra.mxu0 %v4140
          %4354 = vmatprep.subr.mxu0 0.0
          %4355 = vmatpush1.msra.mxu0 %v4141
          %4356 = vmatprep.subr.mxu0 0.0
          %4357 = vmatpush1.msra.mxu0 %v4142
          %4358 = vmatprep.subr.mxu0 0.0
          %4359 = vmatpush1.msra.mxu0 %v4143
          %4360 = vmatprep.subr.mxu0 0.0
          %4361 = vmatpush1.msra.mxu0 %v4144
          %4362 = vmatprep.subr.mxu0 0.0
          %4363 = vmatpush1.msra.mxu0 %v4145
          %4364 = vmatprep.subr.mxu0 0.0
          %4365 = vmatpush1.msra.mxu0 %v4146
          %4366 = vmatprep.subr.mxu0 0.0
          %4367 = vmatpush1.msra.mxu0 %v4147
          %4368 = vmatprep.subr.mxu0 0.0
          %4369 = vmatpush1.msra.mxu0 %v4148
          %4370 = vmatprep.subr.mxu0 0.0
          %4371 = vmatpush1.msra.mxu0 %v4149
          %4372 = vmatprep.subr.mxu0 0.0
          %4373 = vmatpush1.msra.mxu0 %v4150
          %4374 = vmatprep.subr.mxu0 0.0
          %4375 = vmatpush1.msra.mxu0 %v4151
          %4376 = vmatprep.subr.mxu0 0.0
          %4377 = vmatpush1.msra.mxu0 %v4152
          %4378 = vmatprep.mubr.f32.mxu0 %v1035
          %4379 = vmatmul.mubr.f32.gmra.mrb[0].mxu0 %v1034
          %v4380 = vpop.f32.mrb[0].mxu0
          %v4381 = vadd.f32 %v4236, %v4380
          %v4382 = vpop.f32.mrb[0].mxu0
          %4383 = vmatprep.mubr.f32.mxu0 %v1039
          %4384 = vmatmul.mubr.f32.gmra.mrb[0].mxu0 %v1038
          %v4385 = vpop.f32.mrb[0].mxu0
          %v4386 = vadd.f32 %v4241, %v4385
          %v4387 = vpop.f32.mrb[0].mxu0
          %4388 = vmatprep.mubr.f32.mxu0 %v1043
          %4389 = vmatmul.mubr.f32.gmra.mrb[0].mxu0 %v1042
          %v4390 = vpop.f32.mrb[0].mxu0
          %v4391 = vadd.f32 %v4246, %v4390
          %v4392 = vpop.f32.mrb[0].mxu0
          %4393 = vmatprep.mubr.f32.mxu0 %v1047
          %4394 = vmatmul.mubr.f32.gmra.mrb[0].mxu0 %v1046
          %v4395 = vpop.f32.mrb[0].mxu0
          %v4396 = vadd.f32 %v4251, %v4395
          %v4397 = vpop.f32.mrb[0].mxu0
          %4398 = vmatprep.mubr.f32.mxu0 %v1051
          %4399 = vmatmul.mubr.f32.gmra.mrb[0].mxu0 %v1050
          %v4400 = vpop.f32.mrb[0].mxu0
          %v4401 = vadd.f32 %v4256, %v4400
          %v4402 = vpop.f32.mrb[0].mxu0
          %4403 = vmatprep.mubr.f32.mxu0 %v1055
          %4404 = vmatmul.mubr.f32.gmra.mrb[0].mxu0 %v1054
          %v4405 = vpop.f32.mrb[0].mxu0
          %v4406 = vadd.f32 %v4261, %v4405
          %v4407 = vpop.f32.mrb[0].mxu0
          %4408 = vmatprep.mubr.f32.mxu0 %v1059
          %4409 = vmatmul.mubr.f32.gmra.mrb[0].mxu0 %v1058
          %v4410 = vpop.f32.mrb[0].mxu0
          %v4411 = vadd.f32 %v4266, %v4410
          %v4412 = vpop.f32.mrb[0].mxu0
          %4413 = vmatprep.mubr.f32.mxu0 %v1063
          %4414 = vmatmul.mubr.f32.gmra.mrb[0].mxu0 %v1062
          %v4415 = vpop.f32.mrb[0].mxu0
          %v4416 = vadd.f32 %v4271, %v4415
          %v4417 = vpop.f32.mrb[0].mxu0
          %4418 = vmatprep.mubr.f32.mxu0 %v1067
          %4419 = vmatmul.mubr.f32.gmra.mrb[0].mxu0 %v1066
          %v4420 = vpop.f32.mrb[0].mxu0
          %v4421 = vadd.f32 %v4276, %v4420
          %v4422 = vpop.f32.mrb[0].mxu0
          %4423 = vmatprep.mubr.f32.mxu0 %v1071
          %4424 = vmatmul.mubr.f32.gmra.mrb[0].mxu0 %v1070
          %v4425 = vpop.f32.mrb[0].mxu0
          %v4426 = vadd.f32 %v4281, %v4425
          %v4427 = vpop.f32.mrb[0].mxu0
          %4428 = vmatprep.mubr.f32.mxu0 %v1075
          %4429 = vmatmul.mubr.f32.gmra.mrb[0].mxu0 %v1074
          %v4430 = vpop.f32.mrb[0].mxu0
          %v4431 = vadd.f32 %v4286, %v4430
          %v4432 = vpop.f32.mrb[0].mxu0
          %4433 = vmatprep.mubr.f32.mxu0 %v1079
          %4434 = vmatmul.mubr.f32.gmra.mrb[0].mxu0 %v1078
          %v4435 = vpop.f32.mrb[0].mxu0
          %v4436 = vadd.f32 %v4291, %v4435
          %v4437 = vpop.f32.mrb[0].mxu0
          %4438 = vmatprep.mubr.f32.mxu0 %v1083
          %4439 = vmatmul.mubr.f32.gmra.mrb[0].mxu0 %v1082
          %v4440 = vpop.f32.mrb[0].mxu0
          %v4441 = vadd.f32 %v4296, %v4440
          %v4442 = vpop.f32.mrb[0].mxu0
          %4443 = vmatprep.mubr.f32.mxu0 %v1087
          %4444 = vmatmul.mubr.f32.gmra.mrb[0].mxu0 %v1086
          %v4445 = vpop.f32.mrb[0].mxu0
          %v4446 = vadd.f32 %v4301, %v4445
          %v4447 = vpop.f32.mrb[0].mxu0
          %4448 = vmatprep.mubr.f32.mxu0 %v1091
          %4449 = vmatmul.mubr.f32.gmra.mrb[0].mxu0 %v1090
          %v4450 = vpop.f32.mrb[0].mxu0
          %v4451 = vadd.f32 %v4306, %v4450
          %v4452 = vpop.f32.mrb[0].mxu0
          %4453 = vmatprep.mubr.f32.mxu0 %v1095
          %4454 = vmatmul.mubr.f32.gmra.mrb[0].mxu0 %v1094
          %v4455 = vpop.f32.mrb[0].mxu0
          %v4456 = vadd.f32 %v4311, %v4455
          %v4457 = vpop.f32.mrb[0].mxu0
          %4458 = vdwg.mxu0
          %v4459 = vadd.f32 %v4153, %v4381
          %v4460 = vadd.f32 %v4154, %v4386
          %v4461 = vadd.f32 %v4155, %v4391
          %v4462 = vadd.f32 %v4156, %v4396
          %v4463 = vadd.f32 %v4157, %v4401
          %v4464 = vadd.f32 %v4158, %v4406
          %v4465 = vadd.f32 %v4159, %v4411
          %v4466 = vadd.f32 %v4160, %v4416
          %v4467 = vadd.f32 %v4161, %v4421
          %v4468 = vadd.f32 %v4162, %v4426
          %v4469 = vadd.f32 %v4163, %v4431
          %v4470 = vadd.f32 %v4164, %v4436
          %v4471 = vadd.f32 %v4165, %v4441
          %v4472 = vadd.f32 %v4166, %v4446
          %v4473 = vadd.f32 %v4167, %v4451
          %v4474 = vadd.f32 %v4168, %v4456
          %4475 = vst [vmem:[#allocation2] sm:$0xff] %v4459
          %4476 = vst [vmem:[#allocation2 + $0x8] sm:$0xff] %v4460
          %4477 = vst [vmem:[#allocation2 + $0x10] sm:$0xff] %v4461
          %4478 = vst [vmem:[#allocation2 + $0x18] sm:$0xff] %v4462
          %4479 = vst [vmem:[#allocation2 + $0x20] sm:$0xff] %v4463
          %4480 = vst [vmem:[#allocation2 + $0x28] sm:$0xff] %v4464
          %4481 = vst [vmem:[#allocation2 + $0x30] sm:$0xff] %v4465
          %4482 = vst [vmem:[#allocation2 + $0x38] sm:$0xff] %v4466
          %4483 = vst [vmem:[#allocation2 + $0x40] sm:$0xff] %v4467
          %4484 = vst [vmem:[#allocation2 + $0x48] sm:$0xff] %v4468
          %4485 = vst [vmem:[#allocation2 + $0x50] sm:$0xff] %v4469
          %4486 = vst [vmem:[#allocation2 + $0x58] sm:$0xff] %v4470
          %4487 = vst [vmem:[#allocation2 + $0x60] sm:$0xff] %v4471
          %4488 = vst [vmem:[#allocation2 + $0x68] sm:$0xff] %v4472
          %4489 = vst [vmem:[#allocation2 + $0x70] sm:$0xff] %v4473
          %4490 = vst [vmem:[#allocation2 + $0x78] sm:$0xff] %v4474
        $region52: #{tpu_custom_call.1} parent=43 // pred_fallthru
          _
        %p4491 = scmp.eq.s32.totalorder %s32, 1
        // Predicated region
        $region53: #{tpu_custom_call.1} parent=43 // pred_check
          %p4492 = pneg %p4491
        $region54: #{tpu_custom_call.1} parent=43 // pred_check_branch
          %4494 = sbr.rel (%p4492) target = $region56
        $region55: #{tpu_custom_call.1} parent=43 // pred_region
          %v4495 = vld [vmem:[%s6 + $0x108] sm:$0xff]
          %v4496 = vld [vmem:[#allocation2] sm:$0xff]
          %v4497 = vld [vmem:[#allocation2 + $0x8] sm:$0xff]
          %v4498 = vld [vmem:[#allocation2 + $0x10] sm:$0xff]
          %v4499 = vld [vmem:[#allocation2 + $0x18] sm:$0xff]
          %v4500 = vld [vmem:[#allocation2 + $0x20] sm:$0xff]
          %v4501 = vld [vmem:[#allocation2 + $0x28] sm:$0xff]
          %v4502 = vld [vmem:[#allocation2 + $0x30] sm:$0xff]
          %v4503 = vld [vmem:[#allocation2 + $0x38] sm:$0xff]
          %v4504 = vld [vmem:[#allocation2 + $0x40] sm:$0xff]
          %v4505 = vld [vmem:[#allocation2 + $0x48] sm:$0xff]
          %v4506 = vld [vmem:[#allocation2 + $0x50] sm:$0xff]
          %v4507 = vld [vmem:[#allocation2 + $0x58] sm:$0xff]
          %v4508 = vld [vmem:[#allocation2 + $0x60] sm:$0xff]
          %v4509 = vld [vmem:[#allocation2 + $0x68] sm:$0xff]
          %v4510 = vld [vmem:[#allocation2 + $0x70] sm:$0xff]
          %v4511 = vld [vmem:[#allocation2 + $0x78] sm:$0xff]
          %v4512 = vld [vmem:[%s6 + $0x110] sm:$0xff]
          %v4513 = vld [vmem:[%s6 + $0x118] sm:$0xff]
          %v4514 = vld [vmem:[%s6 + $0x120] sm:$0xff]
          %v4515 = vld [vmem:[%s6 + $0x128] sm:$0xff]
          %v4516 = vld [vmem:[%s6 + $0x130] sm:$0xff]
          %v4517 = vld [vmem:[%s6 + $0x138] sm:$0xff]
          %v4518 = vld [vmem:[%s6 + $0x140] sm:$0xff]
          %v4519 = vld [vmem:[%s6 + $0x148] sm:$0xff]
          %v4520 = vld [vmem:[%s6 + $0x150] sm:$0xff]
          %v4521 = vld [vmem:[%s6 + $0x158] sm:$0xff]
          %v4522 = vld [vmem:[%s6 + $0x160] sm:$0xff]
          %v4523 = vld [vmem:[%s6 + $0x168] sm:$0xff]
          %v4524 = vld [vmem:[%s6 + $0x170] sm:$0xff]
          %v4525 = vld [vmem:[%s6 + $0x178] sm:$0xff]
          %v4526 = vld [vmem:[%s6 + $0x180] sm:$0xff]
          %v4527 = vld [vmem:[%s6 + $0x188] sm:$0xff]
          %v4528 = vlaneseq
          %v4529 = vshrl.u32 %v4528, 7
          %v4530 = vsub.s32 2, %v4529
          %v4531 = vrot.slane %v4495, %v4530
          %4532 = vmatprep.subr.mxu0 0.0
          %4533 = vmatpush1.msra.mxu0 %v4512
          %4534 = vmatprep.subr.mxu0 0.0
          %4535 = vmatpush1.msra.mxu0 %v4513
          %4536 = vmatprep.subr.mxu0 0.0
          %4537 = vmatpush1.msra.mxu0 %v4514
          %4538 = vmatprep.subr.mxu0 0.0
          %4539 = vmatpush1.msra.mxu0 %v4515
          %4540 = vmatprep.subr.mxu0 0.0
          %4541 = vmatpush1.msra.mxu0 %v4516
          %4542 = vmatprep.subr.mxu0 0.0
          %4543 = vmatpush1.msra.mxu0 %v4517
          %4544 = vmatprep.subr.mxu0 0.0
          %4545 = vmatpush1.msra.mxu0 %v4518
          %4546 = vmatprep.subr.mxu0 0.0
          %4547 = vmatpush1.msra.mxu0 %v4519
          %4548 = vmatprep.subr.mxu0 0.0
          %4549 = vmatpush1.msra.mxu0 %v4520
          %4550 = vmatprep.subr.mxu0 0.0
          %4551 = vmatpush1.msra.mxu0 %v4521
          %4552 = vmatprep.subr.mxu0 0.0
          %4553 = vmatpush1.msra.mxu0 %v4522
          %4554 = vmatprep.subr.mxu0 0.0
          %4555 = vmatpush1.msra.mxu0 %v4523
          %4556 = vmatprep.subr.mxu0 0.0
          %4557 = vmatpush1.msra.mxu0 %v4524
          %4558 = vmatprep.subr.mxu0 0.0
          %4559 = vmatpush1.msra.mxu0 %v4525
          %4560 = vmatprep.subr.mxu0 0.0
          %4561 = vmatpush1.msra.mxu0 %v4526
          %4562 = vmatprep.subr.mxu0 0.0
          %4563 = vmatpush1.msra.mxu0 %v4527
          %4564 = vmatprep.subr.mxu0 0.0
          %4565 = vmatpush1.msra.mxu0 0.0
          %4566 = vmatprep.subr.mxu0 0.0
          %4567 = vmatpush1.msra.mxu0 0.0
          %4568 = vmatprep.subr.mxu0 0.0
          %4569 = vmatpush1.msra.mxu0 0.0
          %4570 = vmatprep.subr.mxu0 0.0
          %4571 = vmatpush1.msra.mxu0 0.0
          %4572 = vmatprep.subr.mxu0 0.0
          %4573 = vmatpush1.msra.mxu0 0.0
          %4574 = vmatprep.subr.mxu0 0.0
          %4575 = vmatpush1.msra.mxu0 0.0
          %4576 = vmatprep.subr.mxu0 0.0
          %4577 = vmatpush1.msra.mxu0 0.0
          %4578 = vmatprep.subr.mxu0 0.0
          %4579 = vmatpush1.msra.mxu0 0.0
          %4580 = vmatprep.subr.mxu0 0.0
          %4581 = vmatpush1.msra.mxu0 0.0
          %4582 = vmatprep.subr.mxu0 0.0
          %4583 = vmatpush1.msra.mxu0 0.0
          %4584 = vmatprep.subr.mxu0 0.0
          %4585 = vmatpush1.msra.mxu0 0.0
          %4586 = vmatprep.subr.mxu0 0.0
          %4587 = vmatpush1.msra.mxu0 0.0
          %4588 = vmatprep.subr.mxu0 0.0
          %4589 = vmatpush1.msra.mxu0 0.0
          %4590 = vmatprep.subr.mxu0 0.0
          %4591 = vmatpush1.msra.mxu0 0.0
          %4592 = vmatprep.subr.mxu0 0.0
          %4593 = vmatpush1.msra.mxu0 0.0
          %4594 = vmatprep.subr.mxu0 0.0
          %4595 = vmatpush1.msra.mxu0 0.0
          %4596 = vmatprep.mubr.f32.mxu0 0.0
          %4597 = vmatmul.mubr.f32.gmra.mrb[0].mxu0 %v4496
          %v4598 = vpop.f32.mrb[0].mxu0
          %v4599 = vadd.f32 %v4531, %v4598
          %v4600 = vpop.f32.mrb[0].mxu0
          %4601 = vmatprep.mubr.f32.mxu0 0.0
          %4602 = vmatmul.mubr.f32.gmra.mrb[0].mxu0 %v4497
          %v4603 = vpop.f32.mrb[0].mxu0
          %v4604 = vadd.f32 %v4531, %v4603
          %v4605 = vpop.f32.mrb[0].mxu0
          %4606 = vmatprep.mubr.f32.mxu0 0.0
          %4607 = vmatmul.mubr.f32.gmra.mrb[0].mxu0 %v4498
          %v4608 = vpop.f32.mrb[0].mxu0
          %v4609 = vadd.f32 %v4531, %v4608
          %v4610 = vpop.f32.mrb[0].mxu0
          %4611 = vmatprep.mubr.f32.mxu0 0.0
          %4612 = vmatmul.mubr.f32.gmra.mrb[0].mxu0 %v4499
          %v4613 = vpop.f32.mrb[0].mxu0
          %v4614 = vadd.f32 %v4531, %v4613
          %v4615 = vpop.f32.mrb[0].mxu0
          %4616 = vmatprep.mubr.f32.mxu0 0.0
          %4617 = vmatmul.mubr.f32.gmra.mrb[0].mxu0 %v4500
          %v4618 = vpop.f32.mrb[0].mxu0
          %v4619 = vadd.f32 %v4531, %v4618
          %v4620 = vpop.f32.mrb[0].mxu0
          %4621 = vmatprep.mubr.f32.mxu0 0.0
          %4622 = vmatmul.mubr.f32.gmra.mrb[0].mxu0 %v4501
          %v4623 = vpop.f32.mrb[0].mxu0
          %v4624 = vadd.f32 %v4531, %v4623
          %v4625 = vpop.f32.mrb[0].mxu0
          %4626 = vmatprep.mubr.f32.mxu0 0.0
          %4627 = vmatmul.mubr.f32.gmra.mrb[0].mxu0 %v4502
          %v4628 = vpop.f32.mrb[0].mxu0
          %v4629 = vadd.f32 %v4531, %v4628
          %v4630 = vpop.f32.mrb[0].mxu0
          %4631 = vmatprep.mubr.f32.mxu0 0.0
          %4632 = vmatmul.mubr.f32.gmra.mrb[0].mxu0 %v4503
          %v4633 = vpop.f32.mrb[0].mxu0
          %v4634 = vadd.f32 %v4531, %v4633
          %v4635 = vpop.f32.mrb[0].mxu0
          %4636 = vmatprep.mubr.f32.mxu0 0.0
          %4637 = vmatmul.mubr.f32.gmra.mrb[0].mxu0 %v4504
          %v4638 = vpop.f32.mrb[0].mxu0
          %v4639 = vadd.f32 %v4531, %v4638
          %v4640 = vpop.f32.mrb[0].mxu0
          %4641 = vmatprep.mubr.f32.mxu0 0.0
          %4642 = vmatmul.mubr.f32.gmra.mrb[0].mxu0 %v4505
          %v4643 = vpop.f32.mrb[0].mxu0
          %v4644 = vadd.f32 %v4531, %v4643
          %v4645 = vpop.f32.mrb[0].mxu0
          %4646 = vmatprep.mubr.f32.mxu0 0.0
          %4647 = vmatmul.mubr.f32.gmra.mrb[0].mxu0 %v4506
          %v4648 = vpop.f32.mrb[0].mxu0
          %v4649 = vadd.f32 %v4531, %v4648
          %v4650 = vpop.f32.mrb[0].mxu0
          %4651 = vmatprep.mubr.f32.mxu0 0.0
          %4652 = vmatmul.mubr.f32.gmra.mrb[0].mxu0 %v4507
          %v4653 = vpop.f32.mrb[0].mxu0
          %v4654 = vadd.f32 %v4531, %v4653
          %v4655 = vpop.f32.mrb[0].mxu0
          %4656 = vmatprep.mubr.f32.mxu0 0.0
          %4657 = vmatmul.mubr.f32.gmra.mrb[0].mxu0 %v4508
          %v4658 = vpop.f32.mrb[0].mxu0
          %v4659 = vadd.f32 %v4531, %v4658
          %v4660 = vpop.f32.mrb[0].mxu0
          %4661 = vmatprep.mubr.f32.mxu0 0.0
          %4662 = vmatmul.mubr.f32.gmra.mrb[0].mxu0 %v4509
          %v4663 = vpop.f32.mrb[0].mxu0
          %v4664 = vadd.f32 %v4531, %v4663
          %v4665 = vpop.f32.mrb[0].mxu0
          %4666 = vmatprep.mubr.f32.mxu0 0.0
          %4667 = vmatmul.mubr.f32.gmra.mrb[0].mxu0 %v4510
          %v4668 = vpop.f32.mrb[0].mxu0
          %v4669 = vadd.f32 %v4531, %v4668
          %v4670 = vpop.f32.mrb[0].mxu0
          %4671 = vmatprep.mubr.f32.mxu0 0.0
          %4672 = vmatmul.mubr.f32.gmra.mrb[0].mxu0 %v4511
          %v4673 = vpop.f32.mrb[0].mxu0
          %v4674 = vadd.f32 %v4531, %v4673
          %v4675 = vpop.f32.mrb[0].mxu0
          %4676 = vdwg.mxu0
          %vm4677 = vcmp.ge.f32.partialorder %v4599, 0.0
          %vm4678 = vcmp.ge.f32.partialorder %v4604, 0.0
          %vm4679 = vcmp.ge.f32.partialorder %v4609, 0.0
          %vm4680 = vcmp.ge.f32.partialorder %v4614, 0.0
          %vm4681 = vcmp.ge.f32.partialorder %v4619, 0.0
          %vm4682 = vcmp.ge.f32.partialorder %v4624, 0.0
          %vm4683 = vcmp.ge.f32.partialorder %v4629, 0.0
          %vm4684 = vcmp.ge.f32.partialorder %v4634, 0.0
          %vm4685 = vcmp.ge.f32.partialorder %v4639, 0.0
          %vm4686 = vcmp.ge.f32.partialorder %v4644, 0.0
          %vm4687 = vcmp.ge.f32.partialorder %v4649, 0.0
          %vm4688 = vcmp.ge.f32.partialorder %v4654, 0.0
          %vm4689 = vcmp.ge.f32.partialorder %v4659, 0.0
          %vm4690 = vcmp.ge.f32.partialorder %v4664, 0.0
          %vm4691 = vcmp.ge.f32.partialorder %v4669, 0.0
          %vm4692 = vcmp.ge.f32.partialorder %v4674, 0.0
          %v4693 = vmul.f32 %v4599, 0.01
          %v4694 = vmul.f32 %v4604, 0.01
          %v4695 = vmul.f32 %v4609, 0.01
          %v4696 = vmul.f32 %v4614, 0.01
          %v4697 = vmul.f32 %v4619, 0.01
          %v4698 = vmul.f32 %v4624, 0.01
          %v4699 = vmul.f32 %v4629, 0.01
          %v4700 = vmul.f32 %v4634, 0.01
          %v4701 = vmul.f32 %v4639, 0.01
          %v4702 = vmul.f32 %v4644, 0.01
          %v4703 = vmul.f32 %v4649, 0.01
          %v4704 = vmul.f32 %v4654, 0.01
          %v4705 = vmul.f32 %v4659, 0.01
          %v4706 = vmul.f32 %v4664, 0.01
          %v4707 = vmul.f32 %v4669, 0.01
          %v4708 = vmul.f32 %v4674, 0.01
          %v4709 = vsel %vm4677, %v4599, %v4693
          %v4710 = vsel %vm4678, %v4604, %v4694
          %v4711 = vsel %vm4679, %v4609, %v4695
          %v4712 = vsel %vm4680, %v4614, %v4696
          %v4713 = vsel %vm4681, %v4619, %v4697
          %v4714 = vsel %vm4682, %v4624, %v4698
          %v4715 = vsel %vm4683, %v4629, %v4699
          %v4716 = vsel %vm4684, %v4634, %v4700
          %v4717 = vsel %vm4685, %v4639, %v4701
          %v4718 = vsel %vm4686, %v4644, %v4702
          %v4719 = vsel %vm4687, %v4649, %v4703
          %v4720 = vsel %vm4688, %v4654, %v4704
          %v4721 = vsel %vm4689, %v4659, %v4705
          %v4722 = vsel %vm4690, %v4664, %v4706
          %v4723 = vsel %vm4691, %v4669, %v4707
          %v4724 = vsel %vm4692, %v4674, %v4708
          %v4725 = vld [vmem:[%s6 + $0x190] sm:$0xff]
          %v4726 = vld [vmem:[%s6 + $0x198] sm:$0xff]
          %v4727 = vld [vmem:[%s6 + $0x1a0] sm:$0xff]
          %v4728 = vld [vmem:[%s6 + $0x1a8] sm:$0xff]
          %v4729 = vld [vmem:[%s6 + $0x1b0] sm:$0xff]
          %v4730 = vld [vmem:[%s6 + $0x1b8] sm:$0xff]
          %v4731 = vld [vmem:[%s6 + $0x1c0] sm:$0xff]
          %v4732 = vld [vmem:[%s6 + $0x1c8] sm:$0xff]
          %v4733 = vld [vmem:[%s6 + $0x1d0] sm:$0xff]
          %v4734 = vld [vmem:[%s6 + $0x1d8] sm:$0xff]
          %v4735 = vld [vmem:[%s6 + $0x1e0] sm:$0xff]
          %v4736 = vld [vmem:[%s6 + $0x1e8] sm:$0xff]
          %v4737 = vld [vmem:[%s6 + $0x1f0] sm:$0xff]
          %v4738 = vld [vmem:[%s6 + $0x1f8] sm:$0xff]
          %v4739 = vld [vmem:[%s6 + $0x200] sm:$0xff]
          %v4740 = vld [vmem:[%s6 + $0x208] sm:$0xff]
          %v4741 = vlaneseq
          %v4742 = vshrl.u32 %v4741, 7
          %v4743 = vsub.s32 3, %v4742
          %v4744 = vrot.slane %v4495, %v4743
          %4745 = vmatprep.subr.mxu0 0.0
          %4746 = vmatpush1.msra.mxu0 %v4725
          %4747 = vmatprep.subr.mxu0 0.0
          %4748 = vmatpush1.msra.mxu0 %v4726
          %4749 = vmatprep.subr.mxu0 0.0
          %4750 = vmatpush1.msra.mxu0 %v4727
          %4751 = vmatprep.subr.mxu0 0.0
          %4752 = vmatpush1.msra.mxu0 %v4728
          %4753 = vmatprep.subr.mxu0 0.0
          %4754 = vmatpush1.msra.mxu0 %v4729
          %4755 = vmatprep.subr.mxu0 0.0
          %4756 = vmatpush1.msra.mxu0 %v4730
          %4757 = vmatprep.subr.mxu0 0.0
          %4758 = vmatpush1.msra.mxu0 %v4731
          %4759 = vmatprep.subr.mxu0 0.0
          %4760 = vmatpush1.msra.mxu0 %v4732
          %4761 = vmatprep.subr.mxu0 0.0
          %4762 = vmatpush1.msra.mxu0 %v4733
          %4763 = vmatprep.subr.mxu0 0.0
          %4764 = vmatpush1.msra.mxu0 %v4734
          %4765 = vmatprep.subr.mxu0 0.0
          %4766 = vmatpush1.msra.mxu0 %v4735
          %4767 = vmatprep.subr.mxu0 0.0
          %4768 = vmatpush1.msra.mxu0 %v4736
          %4769 = vmatprep.subr.mxu0 0.0
          %4770 = vmatpush1.msra.mxu0 %v4737
          %4771 = vmatprep.subr.mxu0 0.0
          %4772 = vmatpush1.msra.mxu0 %v4738
          %4773 = vmatprep.subr.mxu0 0.0
          %4774 = vmatpush1.msra.mxu0 %v4739
          %4775 = vmatprep.subr.mxu0 0.0
          %4776 = vmatpush1.msra.mxu0 %v4740
          %4777 = vmatprep.subr.mxu0 0.0
          %4778 = vmatpush1.msra.mxu0 0.0
          %4779 = vmatprep.subr.mxu0 0.0
          %4780 = vmatpush1.msra.mxu0 0.0
          %4781 = vmatprep.subr.mxu0 0.0
          %4782 = vmatpush1.msra.mxu0 0.0
          %4783 = vmatprep.subr.mxu0 0.0
          %4784 = vmatpush1.msra.mxu0 0.0
          %4785 = vmatprep.subr.mxu0 0.0
          %4786 = vmatpush1.msra.mxu0 0.0
          %4787 = vmatprep.subr.mxu0 0.0
          %4788 = vmatpush1.msra.mxu0 0.0
          %4789 = vmatprep.subr.mxu0 0.0
          %4790 = vmatpush1.msra.mxu0 0.0
          %4791 = vmatprep.subr.mxu0 0.0
          %4792 = vmatpush1.msra.mxu0 0.0
          %4793 = vmatprep.subr.mxu0 0.0
          %4794 = vmatpush1.msra.mxu0 0.0
          %4795 = vmatprep.subr.mxu0 0.0
          %4796 = vmatpush1.msra.mxu0 0.0
          %4797 = vmatprep.subr.mxu0 0.0
          %4798 = vmatpush1.msra.mxu0 0.0
          %4799 = vmatprep.subr.mxu0 0.0
          %4800 = vmatpush1.msra.mxu0 0.0
          %4801 = vmatprep.subr.mxu0 0.0
          %4802 = vmatpush1.msra.mxu0 0.0
          %4803 = vmatprep.subr.mxu0 0.0
          %4804 = vmatpush1.msra.mxu0 0.0
          %4805 = vmatprep.subr.mxu0 0.0
          %4806 = vmatpush1.msra.mxu0 0.0
          %4807 = vmatprep.subr.mxu0 0.0
          %4808 = vmatpush1.msra.mxu0 0.0
          %4809 = vmatprep.mubr.f32.mxu0 0.0
          %4810 = vmatmul.mubr.f32.gmra.mrb[0].mxu0 %v4709
          %v4811 = vpop.f32.mrb[0].mxu0
          %v4812 = vadd.f32 %v4744, %v4811
          %v4813 = vpop.f32.mrb[0].mxu0
          %4814 = vmatprep.mubr.f32.mxu0 0.0
          %4815 = vmatmul.mubr.f32.gmra.mrb[0].mxu0 %v4710
          %v4816 = vpop.f32.mrb[0].mxu0
          %v4817 = vadd.f32 %v4744, %v4816
          %v4818 = vpop.f32.mrb[0].mxu0
          %4819 = vmatprep.mubr.f32.mxu0 0.0
          %4820 = vmatmul.mubr.f32.gmra.mrb[0].mxu0 %v4711
          %v4821 = vpop.f32.mrb[0].mxu0
          %v4822 = vadd.f32 %v4744, %v4821
          %v4823 = vpop.f32.mrb[0].mxu0
          %4824 = vmatprep.mubr.f32.mxu0 0.0
          %4825 = vmatmul.mubr.f32.gmra.mrb[0].mxu0 %v4712
          %v4826 = vpop.f32.mrb[0].mxu0
          %v4827 = vadd.f32 %v4744, %v4826
          %v4828 = vpop.f32.mrb[0].mxu0
          %4829 = vmatprep.mubr.f32.mxu0 0.0
          %4830 = vmatmul.mubr.f32.gmra.mrb[0].mxu0 %v4713
          %v4831 = vpop.f32.mrb[0].mxu0
          %v4832 = vadd.f32 %v4744, %v4831
          %v4833 = vpop.f32.mrb[0].mxu0
          %4834 = vmatprep.mubr.f32.mxu0 0.0
          %4835 = vmatmul.mubr.f32.gmra.mrb[0].mxu0 %v4714
          %v4836 = vpop.f32.mrb[0].mxu0
          %v4837 = vadd.f32 %v4744, %v4836
          %v4838 = vpop.f32.mrb[0].mxu0
          %4839 = vmatprep.mubr.f32.mxu0 0.0
          %4840 = vmatmul.mubr.f32.gmra.mrb[0].mxu0 %v4715
          %v4841 = vpop.f32.mrb[0].mxu0
          %v4842 = vadd.f32 %v4744, %v4841
          %v4843 = vpop.f32.mrb[0].mxu0
          %4844 = vmatprep.mubr.f32.mxu0 0.0
          %4845 = vmatmul.mubr.f32.gmra.mrb[0].mxu0 %v4716
          %v4846 = vpop.f32.mrb[0].mxu0
          %v4847 = vadd.f32 %v4744, %v4846
          %v4848 = vpop.f32.mrb[0].mxu0
          %4849 = vmatprep.mubr.f32.mxu0 0.0
          %4850 = vmatmul.mubr.f32.gmra.mrb[0].mxu0 %v4717
          %v4851 = vpop.f32.mrb[0].mxu0
          %v4852 = vadd.f32 %v4744, %v4851
          %v4853 = vpop.f32.mrb[0].mxu0
          %4854 = vmatprep.mubr.f32.mxu0 0.0
          %4855 = vmatmul.mubr.f32.gmra.mrb[0].mxu0 %v4718
          %v4856 = vpop.f32.mrb[0].mxu0
          %v4857 = vadd.f32 %v4744, %v4856
          %v4858 = vpop.f32.mrb[0].mxu0
          %4859 = vmatprep.mubr.f32.mxu0 0.0
          %4860 = vmatmul.mubr.f32.gmra.mrb[0].mxu0 %v4719
          %v4861 = vpop.f32.mrb[0].mxu0
          %v4862 = vadd.f32 %v4744, %v4861
          %v4863 = vpop.f32.mrb[0].mxu0
          %4864 = vmatprep.mubr.f32.mxu0 0.0
          %4865 = vmatmul.mubr.f32.gmra.mrb[0].mxu0 %v4720
          %v4866 = vpop.f32.mrb[0].mxu0
          %v4867 = vadd.f32 %v4744, %v4866
          %v4868 = vpop.f32.mrb[0].mxu0
          %4869 = vmatprep.mubr.f32.mxu0 0.0
          %4870 = vmatmul.mubr.f32.gmra.mrb[0].mxu0 %v4721
          %v4871 = vpop.f32.mrb[0].mxu0
          %v4872 = vadd.f32 %v4744, %v4871
          %v4873 = vpop.f32.mrb[0].mxu0
          %4874 = vmatprep.mubr.f32.mxu0 0.0
          %4875 = vmatmul.mubr.f32.gmra.mrb[0].mxu0 %v4722
          %v4876 = vpop.f32.mrb[0].mxu0
          %v4877 = vadd.f32 %v4744, %v4876
          %v4878 = vpop.f32.mrb[0].mxu0
          %4879 = vmatprep.mubr.f32.mxu0 0.0
          %4880 = vmatmul.mubr.f32.gmra.mrb[0].mxu0 %v4723
          %v4881 = vpop.f32.mrb[0].mxu0
          %v4882 = vadd.f32 %v4744, %v4881
          %v4883 = vpop.f32.mrb[0].mxu0
          %4884 = vmatprep.mubr.f32.mxu0 0.0
          %4885 = vmatmul.mubr.f32.gmra.mrb[0].mxu0 %v4724
          %v4886 = vpop.f32.mrb[0].mxu0
          %v4887 = vadd.f32 %v4744, %v4886
          %v4888 = vpop.f32.mrb[0].mxu0
          %4889 = vdwg.mxu0
          %4890 = vst [vmem:[%s486] sm:$0xff] %v4812
          %4891 = vst [vmem:[%s486 + $0x8] sm:$0xff] %v4817
          %4892 = vst [vmem:[%s486 + $0x10] sm:$0xff] %v4822
          %4893 = vst [vmem:[%s486 + $0x18] sm:$0xff] %v4827
          %4894 = vst [vmem:[%s486 + $0x20] sm:$0xff] %v4832
          %4895 = vst [vmem:[%s486 + $0x28] sm:$0xff] %v4837
          %4896 = vst [vmem:[%s486 + $0x30] sm:$0xff] %v4842
          %4897 = vst [vmem:[%s486 + $0x38] sm:$0xff] %v4847
          %4898 = vst [vmem:[%s486 + $0x40] sm:$0xff] %v4852
          %4899 = vst [vmem:[%s486 + $0x48] sm:$0xff] %v4857
          %4900 = vst [vmem:[%s486 + $0x50] sm:$0xff] %v4862
          %4901 = vst [vmem:[%s486 + $0x58] sm:$0xff] %v4867
          %4902 = vst [vmem:[%s486 + $0x60] sm:$0xff] %v4872
          %4903 = vst [vmem:[%s486 + $0x68] sm:$0xff] %v4877
          %4904 = vst [vmem:[%s486 + $0x70] sm:$0xff] %v4882
          %4905 = vst [vmem:[%s486 + $0x78] sm:$0xff] %v4887
        $region56: #{tpu_custom_call.1} parent=43 // pred_fallthru
          _
        %s4906 = sand.u32 %s262, 1
        %s4907 = scalar_lea.sflag [#allocation7], %s4906
        %s4908 = sand.u32 %s262, 1
        %s4909 = smul.addr %s4908, 128
        %s4910 = scalar_lea.vmem [#allocation6], %s4909
        // Predicated region
        $region57: #{tpu_custom_call.1} parent=43 // pred_check
          %p4911 = pneg %p272
        $region58: #{tpu_custom_call.1} parent=43 // pred_check_branch
          %4913 = sbr.rel (%p4911) target = $region60
        $region59: #{tpu_custom_call.1} parent=43 // pred_region
          %s4914 = smul.u32 16, %s31
          %s4916 = ssub.s32 2048, 2048
          %4917 = vsyncadd %s4907, %s4916
          %s4918 = smul.addr %s4914, 128
          %s4919 = scalar_lea.hbm %s7, %s4918
          %s4920 = sshll.u32 %s4910, 4
          %s4921 = int_to_ptr.vmem [resolvable:$true] %s4920
          %4926 = dma.vmem_to_hbm [thread:$0]  %s4921, 2048, %s4919, %s4907, 128, 128, 8
        $region60: #{tpu_custom_call.1} parent=43 // pred_fallthru
          _
      $region44: #{tpu_custom_call.1} parent=5 // pred_fallthru
        _
      %p4927 = scmp.le.s32.totalorder 2, %s22
      // Predicated region
      $region61: #{tpu_custom_call.1} parent=5 // pred_check
        %p4928 = pneg %p4927
      $region62: #{tpu_custom_call.1} parent=5 // pred_check_branch
        %4930 = sbr.rel (%p4928) target = $region64
      $region63: #{tpu_custom_call.1} parent=5 // pred_region
        %s4931 = ssub.s32 %s22, 2
        // Predicated region
        $region65: #{tpu_custom_call.1} parent=63 // pred_check
          %p4932 = pneg %p278
        $region66: #{tpu_custom_call.1} parent=63 // pred_check_branch
          %4934 = sbr.rel (%p4932) target = $region68
        $region67: #{tpu_custom_call.1} parent=63 // pred_region
          %s4935 = sand.u32 %s263, 1
          %s4936 = scalar_lea.sflag [#allocation7], %s4935
          %s4937 = sand.u32 %s263, 1
          %s4938 = smul.addr %s4937, 128
          %s4939 = scalar_lea.vmem [#allocation6], %s4938
          %4940 = dma.done %s4936, 2048
        $region68: #{tpu_custom_call.1} parent=63 // pred_fallthru
          _
      $region64: #{tpu_custom_call.1} parent=5 // pred_fallthru
        _
    $region6: #{tpu_custom_call.1} parent=1 // loop_footer
      %s26 = sadd.s32 1, %s22
    $region7: #{tpu_custom_call.1} parent=1 // loop_footer_branch
      %21 = sbr.rel target = $region3
    $region8: #{tpu_custom_call.1} parent=1 // loop_exit
      _
    %4941 = vsyncpa [#allocation7], 1
    %s4942 = scalar_lea.sflag [#allocation7], 1
    %4943 = vsyncpa %s4942, 1

</llo_original>
